<compile_context>
chip_gen: v7x
topology: tpu7x:2x2x1
jax: 0.10.0
libtpu: 0.0.40
codegen_flags: <defaults>
</compile_context>

<pallas_src>
import jax
import jax.numpy as jnp
from jax import lax
from jax.experimental import pallas as pl
from jax.experimental.pallas import tpu as pltpu

# ----------------------------- configuration ------------------------------
C = 8           # num_channels == variables == d_model
W = 16          # window (sequence length)
HW = 8          # highway_window
S = 4           # steps_ahead
R = 32          # hidRNN (GRU hidden)
NH = 4          # n_head
DK = 16         # d_k
DV = 16         # d_v
LN_EPS = 1e-5

B_BLK = 8           # batch rows per grid step (power of two; fills a sublane tile)
NB = W * B_BLK      # tokens per batch block = 128 (== one lane tile)

# packed "w8" slab column layout (C = 8 rows)
QW = NH * DK                        # 64
QKVO_W = 2 * QW + NH * C            # 160 : [Wq/sqrt(dk) | Wk | Wv_h @ Wo_h]
WIH_OFF = 160                       # GRU W_ih (C, 3R)
WHW_OFF = 256                       # highway row-selection (B_BLK, HW*B_BLK)
WHL_OFF = 320                       # highway_linear (C, S)
W8_COLS = 384

W32_COLS = 128                      # "w32" slab: [W_hh (R,3R) | W_lin (R,S) | 0]
BIAS_COLS = 160                     # bias slab: 8 rows x 160 cols


# ------------------------------ fused kernel -------------------------------
def fused_kernel(x_ref, w8_ref, w32_ref, b_ref, out_ref):
    f32 = jnp.float32
    x2 = x_ref[...]                                      # (NB, C), row = t*B_BLK + b

    # ---- static slices of the packed VMEM slabs (one DMA each) ------------
    w_qkvo = w8_ref[:, 0:QKVO_W]                         # (C, 160)
    w_gih = w8_ref[:, WIH_OFF:WIH_OFF + 3 * R]           # (C, 96)
    w_hwsel = w8_ref[:, WHW_OFF:WHW_OFF + HW * B_BLK]    # (8, 64)
    w_hl = w8_ref[:, WHL_OFF:WHL_OFF + S]                # (C, S)
    w32 = w32_ref[...]                                   # (R, 128): [W_hh | W_lin | 0]

    b_qkvo = b_ref[0:1, 0:QKVO_W]                        # (1, 160)
    b_fc = b_ref[1:2, 0:C]
    ln_g = b_ref[2:3, 0:C]
    ln_b = b_ref[3:4, 0:C]
    b_gi = b_ref[4:5, 0:3 * R]                           # b_ih + [b_hr, b_hz, 0]
    b_hn = b_ref[5:6, 0:R]                               # b_hn
    b_out = b_ref[6:7, 0:S]                              # b_lin + bhw*sum(whl) + bhl

    # --------------- multi-head self-attention (batch folded) ---------------
    # One projection matmul yields [Q*inv_temp | K | V_h@Wo_h] for all heads.
    proj = jnp.dot(x2, w_qkvo, preferred_element_type=f32) + b_qkvo   # (NB, 160)

    # block-diagonal "same sample" additive bias, built once for all heads
    rows = lax.broadcasted_iota(jnp.int32, (NB, NB), 0)
    cols = lax.broadcasted_iota(jnp.int32, (NB, NB), 1)
    mask_bias = jnp.where(((rows ^ cols) & (B_BLK - 1)) == 0,
                          jnp.float32(0.0), jnp.float32(-1e30))       # (NB, NB)

    attn_acc = jnp.zeros((NB, C), f32)
    for h in range(NH):                                  # static head loop
        q_h = proj[:, h * DK:(h + 1) * DK]               # (NB, DK), pre-scaled
        k_h = proj[:, QW + h * DK:QW + (h + 1) * DK]     # (NB, DK)
        vo_h = proj[:, 2 * QW + h * C:2 * QW + (h + 1) * C]   # (NB, C) = V_h @ Wo_h
        s = lax.dot_general(q_h, k_h, (((1,), (1,)), ((), ())),
                            preferred_element_type=f32) + mask_bias   # (NB, NB)
        s = s - jnp.max(s, axis=-1, keepdims=True)
        p = jnp.exp(s)
        p = p / jnp.sum(p, axis=-1, keepdims=True)       # exact softmax
        # fc(concat(heads)) == sum_h P_h @ (V_h @ Wo_h); f32 accumulate next to
        # its matmul (MRB-friendly on v7x, cheap VPU add elsewhere).
        attn_acc = attn_acc + jnp.dot(p, vo_h, preferred_element_type=f32)

    y = attn_acc + b_fc + x2                             # fc bias + residual
    mu = jnp.mean(y, axis=-1, keepdims=True)
    var = jnp.mean((y - mu) ** 2, axis=-1, keepdims=True)
    attn = (y - mu) * lax.rsqrt(var + LN_EPS) * ln_g + ln_b

    # ---------------------------------- GRU ---------------------------------
    # Input projection and b_ih + b_hh(r,z) hoisted off the serial recurrence.
    gi = jnp.dot(attn, w_gih, preferred_element_type=f32) + b_gi      # (NB, 3R)
    h_state = jnp.zeros((B_BLK, R), f32)
    for t in range(W):                                   # fully unrolled
        gi_t = gi[t * B_BLK:(t + 1) * B_BLK, :]          # aligned (8, 3R) sublane tile
        gh = jnp.dot(h_state, w32, preferred_element_type=f32)        # (8, 128)
        r = jax.nn.sigmoid(gi_t[:, 0:R] + gh[:, 0:R])
        z = jax.nn.sigmoid(gi_t[:, R:2 * R] + gh[:, R:2 * R])
        n = jnp.tanh(gi_t[:, 2 * R:3 * R] + r * (gh[:, 2 * R:3 * R] + b_hn))
        h_state = n + z * (h_state - n)                  # == (1-z)*n + z*h

    # ------------------------ output head + highway -------------------------
    lin_full = jnp.dot(h_state, w32, preferred_element_type=f32)      # (8, 128)
    out_lin = lin_full[:, 3 * R:3 * R + S]               # h_T @ W_lin       (8, S)
    xs = x2[(W - HW) * B_BLK:, :]                        # last HW steps     (64, C)
    z1 = jnp.dot(w_hwsel, xs, preferred_element_type=f32)             # (8, C)
    z2 = jnp.dot(z1, w_hl, preferred_element_type=f32)                # (8, S)
    out_ref[...] = jax.nn.sigmoid(out_lin + z2 + b_out)  # output_fun='sigmoid'


# ------------------------------ pallas wrapper ------------------------------
def fused_forward(x_blocks, p):
    nb = x_blocks.shape[0]
    bt = nb * B_BLK
    flops = nb * (
        2 * NB * C * QKVO_W                      # QKVO projection
        + NH * 2 * NB * DK * NB                  # score matmuls
        + NH * 2 * NB * NB * C                   # P @ (V Wo)
        + 2 * NB * C * 3 * R                     # GRU input projection
        + (W + 1) * 2 * B_BLK * R * W32_COLS     # recurrence + linear_out
        + 2 * B_BLK * (HW * B_BLK) * C + 2 * B_BLK * C * S)   # highway
    transc = nb * (NH * NB * NB + W * 3 * B_BLK * R + NB + B_BLK * S)
    bytes_acc = 4 * (x_blocks.size + bt * S
                     + p["w8"].size + p["w32"].size + p["bias"].size)
    return pl.pallas_call(
        fused_kernel,
        out_shape=jax.ShapeDtypeStruct((bt, S), jnp.float32),
        grid=(nb,),
        in_specs=[
            pl.BlockSpec((None, NB, C), lambda i: (i, 0, 0)),   # per-block x
            pl.BlockSpec((C, W8_COLS), lambda i: (0, 0)),       # resident weights
            pl.BlockSpec((R, W32_COLS), lambda i: (0, 0)),
            pl.BlockSpec((8, BIAS_COLS), lambda i: (0, 0)),
        ],
        out_specs=pl.BlockSpec((B_BLK, S), lambda i: (i, 0)),
        compiler_params=pltpu.CompilerParams(dimension_semantics=("parallel",)),
        cost_estimate=pl.CostEstimate(flops=flops, transcendentals=transc,
                                      bytes_accessed=bytes_acc),
    )(x_blocks, p["w8"], p["w32"], p["bias"])


def mhanet_forward(x_nchw, p):
    # x_nchw: (B, C, W, 1) -- torch input layout before squeeze/permute.
    bt = x_nchw.shape[0]
    assert bt % B_BLK == 0, "batch must be a multiple of B_BLK (=8)"
    nb = bt // B_BLK
    # Single small relayout: (B,C,W,1) -> (nb, W*B_BLK, C) with in-block row
    # order t*B_BLK + b so GRU timestep slices are aligned sublane tiles.
    xb = jnp.transpose(x_nchw.reshape(nb, B_BLK, C, W), (0, 3, 1, 2))
    xb = xb.reshape(nb, NB, C)
    return fused_forward(xb, p)


# ----------------------------- parameter init ------------------------------
def init_params(key):
    ks = jax.random.split(key, 20)

    def nrm(k, shape, scale=0.1):
        return scale * jax.random.normal(k, shape, dtype=jnp.float32)

    raw = {
        # attention projections stored pre-transposed: y = x @ W + b
        "Wq": nrm(ks[0], (C, NH * DK)), "bq": nrm(ks[1], (NH * DK,), 0.02),
        "Wk": nrm(ks[2], (C, NH * DK)), "bk": nrm(ks[3], (NH * DK,), 0.02),
        "Wv": nrm(ks[4], (C, NH * DV)), "bv": nrm(ks[5], (NH * DV,), 0.02),
        "Wo": nrm(ks[6], (NH * DV, C)), "bo": nrm(ks[7], (C,), 0.02),
        "ln_g": jnp.ones((C,), jnp.float32),
        "ln_b": jnp.zeros((C,), jnp.float32),
        # GRU (gate order r, z, n -- matches torch.nn.GRU), pre-transposed
        "wih": nrm(ks[8], (C, 3 * R)), "whh": nrm(ks[9], (R, 3 * R)),
        "bih": nrm(ks[10], (3 * R,), 0.02), "bhh": nrm(ks[11], (3 * R,), 0.02),
        "wlin": nrm(ks[12], (R, S)), "blin": nrm(ks[13], (S,), 0.02),
        "whw": nrm(ks[14], (HW,)),
        "bhw": 0.02 * jax.random.normal(ks[15], (), dtype=jnp.float32),
        "whl": nrm(ks[16], (C, S)), "bhl": nrm(ks[17], (S,), 0.02),
    }

    inv_temp = 1.0 / (DK ** 0.5)
    # fold the per-head output projection Wo_h into the V projection
    wvo = jnp.concatenate(
        [raw["Wv"][:, h * DV:(h + 1) * DV] @ raw["Wo"][h * DV:(h + 1) * DV, :]
         for h in range(NH)], axis=1)                              # (C, NH*C)
    bvo = jnp.concatenate(
        [raw["bv"][h * DV:(h + 1) * DV] @ raw["Wo"][h * DV:(h + 1) * DV, :]
         for h in range(NH)], axis=0)                              # (NH*C,)
    w_qkvo = jnp.concatenate([raw["Wq"] * inv_temp, raw["Wk"], wvo], axis=1)
    b_qkvo = jnp.concatenate([raw["bq"] * inv_temp, raw["bk"], bvo], axis=0)

    # highway Linear(HW,1) expanded to a row-selection matrix over the packed
    # x rows: whw_sel[b, w*B_BLK + b'] = whw[w] * (b == b')   (B_BLK == C == 8)
    whw_sel = jnp.kron(raw["whw"].reshape(1, HW),
                       jnp.eye(B_BLK, dtype=jnp.float32))          # (8, HW*8)

    w8 = jnp.zeros((C, W8_COLS), jnp.float32)
    w8 = w8.at[:, 0:QKVO_W].set(w_qkvo)
    w8 = w8.at[:, WIH_OFF:WIH_OFF + 3 * R].set(raw["wih"])
    w8 = w8.at[:, WHW_OFF:WHW_OFF + HW * B_BLK].set(whw_sel)
    w8 = w8.at[:, WHL_OFF:WHL_OFF + S].set(raw["whl"])

    w32 = jnp.zeros((R, W32_COLS), jnp.float32)
    w32 = w32.at[:, 0:3 * R].set(raw["whh"])
    w32 = w32.at[:, 3 * R:3 * R + S].set(raw["wlin"])

    bias = jnp.zeros((8, BIAS_COLS), jnp.float32)
    bias = bias.at[0, 0:QKVO_W].set(b_qkvo)
    bias = bias.at[1, 0:C].set(raw["bo"])
    bias = bias.at[2, 0:C].set(raw["ln_g"])
    bias = bias.at[3, 0:C].set(raw["ln_b"])
    bias = bias.at[4, 0:3 * R].set(
        raw["bih"] + jnp.concatenate([raw["bhh"][:2 * R],
                                      jnp.zeros((R,), jnp.float32)]))
    bias = bias.at[5, 0:R].set(raw["bhh"][2 * R:])
    bias = bias.at[6, 0:S].set(raw["blin"]
                               + raw["bhw"] * raw["whl"].sum(axis=0)
                               + raw["bhl"])

    packed = {"w8": w8, "w32": w32, "bias": bias}
    return packed, raw


# --------------------------- pure-JAX reference -----------------------------
def ref_forward(x_nchw, raw):
    """Mirrors the PyTorch module (dropout == identity / eval mode)."""
    x = jnp.squeeze(x_nchw, axis=3)
    x = jnp.transpose(x, (0, 2, 1))                      # (B, W, C)
    bt = x.shape[0]
    q = x @ raw["Wq"] + raw["bq"]
    k = x @ raw["Wk"] + raw["bk"]
    v = x @ raw["Wv"] + raw["bv"]
    qh = q.reshape(bt, W, NH, DK).transpose(0, 2, 1, 3)
    kh = k.reshape(bt, W, NH, DK).transpose(0, 2, 1, 3)
    vh = v.reshape(bt, W, NH, DV).transpose(0, 2, 1, 3)
    s = jnp.einsum("bhqd,bhkd->bhqk", qh, kh) / (DK ** 0.5)
    p = jax.nn.softmax(s, axis=-1)
    heads = jnp.einsum("bhqk,bhkd->bhqd", p, vh)
    concat = heads.transpose(0, 2, 1, 3).reshape(bt, W, NH * DV)
    y = concat @ raw["Wo"] + raw["bo"] + x               # fc + residual
    mu = y.mean(-1, keepdims=True)
    var = ((y - mu) ** 2).mean(-1, keepdims=True)
    attn = (y - mu) / jnp.sqrt(var + LN_EPS) * raw["ln_g"] + raw["ln_b"]

    def step(h, xt):
        gi = xt @ raw["wih"] + raw["bih"]
        gh = h @ raw["whh"] + raw["bhh"]
        r = jax.nn.sigmoid(gi[:, :R] + gh[:, :R])
        z = jax.nn.sigmoid(gi[:, R:2 * R] + gh[:, R:2 * R])
        n = jnp.tanh(gi[:, 2 * R:] + r * gh[:, 2 * R:])
        return (1.0 - z) * n + z * h, None

    h_fin, _ = lax.scan(step, jnp.zeros((bt, R), jnp.float32),
                        jnp.transpose(attn, (1, 0, 2)))
    out = h_fin @ raw["wlin"] + raw["blin"]
    zx = x[:, -HW:, :]
    zx = jnp.transpose(zx, (0, 2, 1)).reshape(-1, HW)    # (B*C, HW)
    z1 = (zx @ raw["whw"] + raw["bhw"]).reshape(bt, C)
    z2 = z1 @ raw["whl"] + raw["bhl"]
    return jax.nn.sigmoid(out + z2)


if __name__ == "__main__":
    key = jax.random.PRNGKey(0)
    pkey, xkey = jax.random.split(key)
    packed, raw = init_params(pkey)

    BT = 16                         # 2 batch blocks -> grid=(2,), parallel axis
    x = jax.random.normal(xkey, (BT, C, W, 1), dtype=jnp.float32)

    out = jax.jit(mhanet_forward)(x, packed)
    out = jax.block_until_ready(out)
    assert out.shape == (BT, S), out.shape
    assert bool(jnp.all(jnp.isfinite(out)))

    with jax.default_matmul_precision("float32"):
        ref = ref_forward(x, raw)
    err = float(jnp.max(jnp.abs(out - ref)))
    assert err < 1e-2, f"mismatch vs pure-JAX reference: {err}"
    print("KERNEL_OK")
</pallas_src>

<mosaic_0001>
module attributes {stable_mosaic.version = 11 : i64} {
  func.func @fused_kernel(%arg0: i32, %arg1: memref<1x128x8xf32, #tpu.memory_space<vmem>>, %arg2: memref<8x384xf32, #tpu.memory_space<vmem>>, %arg3: memref<32x128xf32, #tpu.memory_space<vmem>>, %arg4: memref<8x160xf32, #tpu.memory_space<vmem>>, %arg5: memref<8x4xf32, #tpu.memory_space<vmem>>) attributes {dimension_semantics = [#tpu.dimension_semantics<parallel>], iteration_bounds = array<i64: 2>, scalar_prefetch = 0 : i64, scratch_operands = 0 : i64, tpu.core_type = #tpu.core_type<tc>, window_params = [{transform_indices = @transform_0, window_bounds = array<i64: 1, 128, 8>}, {pipeline_mode = #tpu.pipeline_mode<synchronous>, transform_indices = @transform_1, window_bounds = array<i64: 8, 384>}, {pipeline_mode = #tpu.pipeline_mode<synchronous>, transform_indices = @transform_2, window_bounds = array<i64: 32, 128>}, {pipeline_mode = #tpu.pipeline_mode<synchronous>, transform_indices = @transform_3, window_bounds = array<i64: 8, 160>}, {transform_indices = @transform_4, window_bounds = array<i64: 8, 4>}]} {
    %c0 = arith.constant 0 : index
    %c0_0 = arith.constant 0 : index
    %c0_1 = arith.constant 0 : index
    %0 = vector.load %arg1[%c0, %c0_0, %c0_1] : memref<1x128x8xf32, #tpu.memory_space<vmem>>, vector<1x128x8xf32>
    %1 = vector.shape_cast %0 : vector<1x128x8xf32> to vector<128x8xf32>
    %c0_2 = arith.constant 0 : index
    %c0_3 = arith.constant 0 : index
    %2 = vector.load %arg2[%c0_2, %c0_3] : memref<8x384xf32, #tpu.memory_space<vmem>>, vector<8x160xf32>
    %c0_4 = arith.constant 0 : index
    %c160 = arith.constant 160 : index
    %3 = vector.load %arg2[%c0_4, %c160] : memref<8x384xf32, #tpu.memory_space<vmem>>, vector<8x96xf32>
    %c0_5 = arith.constant 0 : index
    %c256 = arith.constant 256 : index
    %4 = vector.load %arg2[%c0_5, %c256] : memref<8x384xf32, #tpu.memory_space<vmem>>, vector<8x64xf32>
    %c0_6 = arith.constant 0 : index
    %c320 = arith.constant 320 : index
    %5 = vector.load %arg2[%c0_6, %c320] : memref<8x384xf32, #tpu.memory_space<vmem>>, vector<8x4xf32>
    %c0_7 = arith.constant 0 : index
    %c0_8 = arith.constant 0 : index
    %6 = vector.load %arg3[%c0_7, %c0_8] : memref<32x128xf32, #tpu.memory_space<vmem>>, vector<32x128xf32>
    %c0_9 = arith.constant 0 : index
    %c0_10 = arith.constant 0 : index
    %7 = vector.load %arg4[%c0_9, %c0_10] : memref<8x160xf32, #tpu.memory_space<vmem>>, vector<1x160xf32>
    %c1 = arith.constant 1 : index
    %c0_11 = arith.constant 0 : index
    %8 = vector.load %arg4[%c1, %c0_11] : memref<8x160xf32, #tpu.memory_space<vmem>>, vector<1x8xf32>
    %c2 = arith.constant 2 : index
    %c0_12 = arith.constant 0 : index
    %9 = vector.load %arg4[%c2, %c0_12] : memref<8x160xf32, #tpu.memory_space<vmem>>, vector<1x8xf32>
    %c3 = arith.constant 3 : index
    %c0_13 = arith.constant 0 : index
    %10 = vector.load %arg4[%c3, %c0_13] : memref<8x160xf32, #tpu.memory_space<vmem>>, vector<1x8xf32>
    %c4 = arith.constant 4 : index
    %c0_14 = arith.constant 0 : index
    %11 = vector.load %arg4[%c4, %c0_14] : memref<8x160xf32, #tpu.memory_space<vmem>>, vector<1x96xf32>
    %c5 = arith.constant 5 : index
    %c0_15 = arith.constant 0 : index
    %12 = vector.load %arg4[%c5, %c0_15] : memref<8x160xf32, #tpu.memory_space<vmem>>, vector<1x32xf32>
    %c6 = arith.constant 6 : index
    %c0_16 = arith.constant 0 : index
    %13 = vector.load %arg4[%c6, %c0_16] : memref<8x160xf32, #tpu.memory_space<vmem>>, vector<1x4xf32>
    %cst = arith.constant dense<0.000000e+00> : vector<128x160xf32>
    %14 = tpu.matmul %1, %2, %cst {dimension_numbers = #tpu.dot_dimension_numbers<[1], [0], [0], [1], [0, 0, 1, 1], [], []>} : vector<128x8xf32>, vector<8x160xf32>, vector<128x160xf32> -> vector<128x160xf32>
    %15 = vector.broadcast %7 : vector<1x160xf32> to vector<128x160xf32>
    %16 = arith.addf %14, %15 : vector<128x160xf32>
    %17 = tpu.iota {dimensions = array<i32: 0>} : vector<128x128xi32>
    %18 = tpu.iota {dimensions = array<i32: 1>} : vector<128x128xi32>
    %19 = arith.xori %17, %18 : vector<128x128xi32>
    %c7_i32 = arith.constant 7 : i32
    %20 = vector.broadcast %c7_i32 : i32 to vector<128x128xi32>
    %21 = arith.andi %19, %20 : vector<128x128xi32>
    %c0_i32 = arith.constant 0 : i32
    %22 = vector.broadcast %c0_i32 : i32 to vector<128x128xi32>
    %23 = arith.cmpi eq, %21, %22 : vector<128x128xi32>
    %cst_17 = arith.constant 0.000000e+00 : f32
    %cst_18 = arith.constant -1.000000e+30 : f32
    %24 = vector.broadcast %cst_17 : f32 to vector<128x128xf32>
    %25 = vector.broadcast %cst_18 : f32 to vector<128x128xf32>
    %26 = arith.select %23, %24, %25 : vector<128x128xi1>, vector<128x128xf32>
    %cst_19 = arith.constant 0.000000e+00 : f32
    %27 = vector.broadcast %cst_19 : f32 to vector<128x8xf32>
    %28 = vector.extract_strided_slice %16 {offsets = [0, 0], sizes = [128, 16], strides = [1, 1]} : vector<128x160xf32> to vector<128x16xf32>
    %29 = vector.extract_strided_slice %16 {offsets = [0, 64], sizes = [128, 16], strides = [1, 1]} : vector<128x160xf32> to vector<128x16xf32>
    %30 = vector.extract_strided_slice %16 {offsets = [0, 128], sizes = [128, 8], strides = [1, 1]} : vector<128x160xf32> to vector<128x8xf32>
    %cst_20 = arith.constant dense<0.000000e+00> : vector<128x128xf32>
    %31 = tpu.matmul %28, %29, %cst_20 {dimension_numbers = #tpu.dot_dimension_numbers<[1], [1], [0], [0], [0, 0, 1, 0], [], []>} : vector<128x16xf32>, vector<128x16xf32>, vector<128x128xf32> -> vector<128x128xf32>
    %32 = arith.addf %31, %26 : vector<128x128xf32>
    %cst_21 = arith.constant dense<0xFF800000> : vector<128xf32>
    %33 = vector.multi_reduction <maximumf>, %32, %cst_21 [1] : vector<128x128xf32> to vector<128xf32>
    %34 = vector.shape_cast %33 : vector<128xf32> to vector<128x1xf32>
    %35 = vector.broadcast %34 : vector<128x1xf32> to vector<128x128xf32>
    %36 = arith.subf %32, %35 : vector<128x128xf32>
    %37 = math.exp %36 : vector<128x128xf32>
    %cst_22 = arith.constant dense<0.000000e+00> : vector<128xf32>
    %38 = vector.multi_reduction <add>, %37, %cst_22 [1] : vector<128x128xf32> to vector<128xf32>
    %39 = vector.shape_cast %38 : vector<128xf32> to vector<128x1xf32>
    %40 = vector.broadcast %39 : vector<128x1xf32> to vector<128x128xf32>
    %41 = arith.divf %37, %40 : vector<128x128xf32>
    %cst_23 = arith.constant dense<0.000000e+00> : vector<128x8xf32>
    %42 = tpu.matmul %41, %30, %cst_23 {dimension_numbers = #tpu.dot_dimension_numbers<[1], [0], [0], [1], [0, 0, 1, 1], [], []>} : vector<128x128xf32>, vector<128x8xf32>, vector<128x8xf32> -> vector<128x8xf32>
    %43 = arith.addf %27, %42 : vector<128x8xf32>
    %44 = vector.extract_strided_slice %16 {offsets = [0, 16], sizes = [128, 16], strides = [1, 1]} : vector<128x160xf32> to vector<128x16xf32>
    %45 = vector.extract_strided_slice %16 {offsets = [0, 80], sizes = [128, 16], strides = [1, 1]} : vector<128x160xf32> to vector<128x16xf32>
    %46 = vector.extract_strided_slice %16 {offsets = [0, 136], sizes = [128, 8], strides = [1, 1]} : vector<128x160xf32> to vector<128x8xf32>
    %cst_24 = arith.constant dense<0.000000e+00> : vector<128x128xf32>
    %47 = tpu.matmul %44, %45, %cst_24 {dimension_numbers = #tpu.dot_dimension_numbers<[1], [1], [0], [0], [0, 0, 1, 0], [], []>} : vector<128x16xf32>, vector<128x16xf32>, vector<128x128xf32> -> vector<128x128xf32>
    %48 = arith.addf %47, %26 : vector<128x128xf32>
    %cst_25 = arith.constant dense<0xFF800000> : vector<128xf32>
    %49 = vector.multi_reduction <maximumf>, %48, %cst_25 [1] : vector<128x128xf32> to vector<128xf32>
    %50 = vector.shape_cast %49 : vector<128xf32> to vector<128x1xf32>
    %51 = vector.broadcast %50 : vector<128x1xf32> to vector<128x128xf32>
    %52 = arith.subf %48, %51 : vector<128x128xf32>
    %53 = math.exp %52 : vector<128x128xf32>
    %cst_26 = arith.constant dense<0.000000e+00> : vector<128xf32>
    %54 = vector.multi_reduction <add>, %53, %cst_26 [1] : vector<128x128xf32> to vector<128xf32>
    %55 = vector.shape_cast %54 : vector<128xf32> to vector<128x1xf32>
    %56 = vector.broadcast %55 : vector<128x1xf32> to vector<128x128xf32>
    %57 = arith.divf %53, %56 : vector<128x128xf32>
    %cst_27 = arith.constant dense<0.000000e+00> : vector<128x8xf32>
    %58 = tpu.matmul %57, %46, %cst_27 {dimension_numbers = #tpu.dot_dimension_numbers<[1], [0], [0], [1], [0, 0, 1, 1], [], []>} : vector<128x128xf32>, vector<128x8xf32>, vector<128x8xf32> -> vector<128x8xf32>
    %59 = arith.addf %43, %58 : vector<128x8xf32>
    %60 = vector.extract_strided_slice %16 {offsets = [0, 32], sizes = [128, 16], strides = [1, 1]} : vector<128x160xf32> to vector<128x16xf32>
    %61 = vector.extract_strided_slice %16 {offsets = [0, 96], sizes = [128, 16], strides = [1, 1]} : vector<128x160xf32> to vector<128x16xf32>
    %62 = vector.extract_strided_slice %16 {offsets = [0, 144], sizes = [128, 8], strides = [1, 1]} : vector<128x160xf32> to vector<128x8xf32>
    %cst_28 = arith.constant dense<0.000000e+00> : vector<128x128xf32>
    %63 = tpu.matmul %60, %61, %cst_28 {dimension_numbers = #tpu.dot_dimension_numbers<[1], [1], [0], [0], [0, 0, 1, 0], [], []>} : vector<128x16xf32>, vector<128x16xf32>, vector<128x128xf32> -> vector<128x128xf32>
    %64 = arith.addf %63, %26 : vector<128x128xf32>
    %cst_29 = arith.constant dense<0xFF800000> : vector<128xf32>
    %65 = vector.multi_reduction <maximumf>, %64, %cst_29 [1] : vector<128x128xf32> to vector<128xf32>
    %66 = vector.shape_cast %65 : vector<128xf32> to vector<128x1xf32>
    %67 = vector.broadcast %66 : vector<128x1xf32> to vector<128x128xf32>
    %68 = arith.subf %64, %67 : vector<128x128xf32>
    %69 = math.exp %68 : vector<128x128xf32>
    %cst_30 = arith.constant dense<0.000000e+00> : vector<128xf32>
    %70 = vector.multi_reduction <add>, %69, %cst_30 [1] : vector<128x128xf32> to vector<128xf32>
    %71 = vector.shape_cast %70 : vector<128xf32> to vector<128x1xf32>
    %72 = vector.broadcast %71 : vector<128x1xf32> to vector<128x128xf32>
    %73 = arith.divf %69, %72 : vector<128x128xf32>
    %cst_31 = arith.constant dense<0.000000e+00> : vector<128x8xf32>
    %74 = tpu.matmul %73, %62, %cst_31 {dimension_numbers = #tpu.dot_dimension_numbers<[1], [0], [0], [1], [0, 0, 1, 1], [], []>} : vector<128x128xf32>, vector<128x8xf32>, vector<128x8xf32> -> vector<128x8xf32>
    %75 = arith.addf %59, %74 : vector<128x8xf32>
    %76 = vector.extract_strided_slice %16 {offsets = [0, 48], sizes = [128, 16], strides = [1, 1]} : vector<128x160xf32> to vector<128x16xf32>
    %77 = vector.extract_strided_slice %16 {offsets = [0, 112], sizes = [128, 16], strides = [1, 1]} : vector<128x160xf32> to vector<128x16xf32>
    %78 = vector.extract_strided_slice %16 {offsets = [0, 152], sizes = [128, 8], strides = [1, 1]} : vector<128x160xf32> to vector<128x8xf32>
    %cst_32 = arith.constant dense<0.000000e+00> : vector<128x128xf32>
    %79 = tpu.matmul %76, %77, %cst_32 {dimension_numbers = #tpu.dot_dimension_numbers<[1], [1], [0], [0], [0, 0, 1, 0], [], []>} : vector<128x16xf32>, vector<128x16xf32>, vector<128x128xf32> -> vector<128x128xf32>
    %80 = arith.addf %79, %26 : vector<128x128xf32>
    %cst_33 = arith.constant dense<0xFF800000> : vector<128xf32>
    %81 = vector.multi_reduction <maximumf>, %80, %cst_33 [1] : vector<128x128xf32> to vector<128xf32>
    %82 = vector.shape_cast %81 : vector<128xf32> to vector<128x1xf32>
    %83 = vector.broadcast %82 : vector<128x1xf32> to vector<128x128xf32>
    %84 = arith.subf %80, %83 : vector<128x128xf32>
    %85 = math.exp %84 : vector<128x128xf32>
    %cst_34 = arith.constant dense<0.000000e+00> : vector<128xf32>
    %86 = vector.multi_reduction <add>, %85, %cst_34 [1] : vector<128x128xf32> to vector<128xf32>
    %87 = vector.shape_cast %86 : vector<128xf32> to vector<128x1xf32>
    %88 = vector.broadcast %87 : vector<128x1xf32> to vector<128x128xf32>
    %89 = arith.divf %85, %88 : vector<128x128xf32>
    %cst_35 = arith.constant dense<0.000000e+00> : vector<128x8xf32>
    %90 = tpu.matmul %89, %78, %cst_35 {dimension_numbers = #tpu.dot_dimension_numbers<[1], [0], [0], [1], [0, 0, 1, 1], [], []>} : vector<128x128xf32>, vector<128x8xf32>, vector<128x8xf32> -> vector<128x8xf32>
    %91 = arith.addf %75, %90 : vector<128x8xf32>
    %92 = vector.broadcast %8 : vector<1x8xf32> to vector<128x8xf32>
    %93 = arith.addf %91, %92 : vector<128x8xf32>
    %94 = arith.addf %93, %1 : vector<128x8xf32>
    %cst_36 = arith.constant dense<0.000000e+00> : vector<128xf32>
    %95 = vector.multi_reduction <add>, %94, %cst_36 [1] : vector<128x8xf32> to vector<128xf32>
    %96 = vector.shape_cast %95 : vector<128xf32> to vector<128x1xf32>
    %cst_37 = arith.constant 8.000000e+00 : f32
    %97 = vector.broadcast %cst_37 : f32 to vector<128x1xf32>
    %98 = arith.divf %96, %97 : vector<128x1xf32>
    %99 = vector.broadcast %98 : vector<128x1xf32> to vector<128x8xf32>
    %100 = arith.subf %94, %99 : vector<128x8xf32>
    %101 = arith.mulf %100, %100 : vector<128x8xf32>
    %cst_38 = arith.constant dense<0.000000e+00> : vector<128xf32>
    %102 = vector.multi_reduction <add>, %101, %cst_38 [1] : vector<128x8xf32> to vector<128xf32>
    %103 = vector.shape_cast %102 : vector<128xf32> to vector<128x1xf32>
    %cst_39 = arith.constant 8.000000e+00 : f32
    %104 = vector.broadcast %cst_39 : f32 to vector<128x1xf32>
    %105 = arith.divf %103, %104 : vector<128x1xf32>
    %106 = vector.broadcast %98 : vector<128x1xf32> to vector<128x8xf32>
    %107 = arith.subf %94, %106 : vector<128x8xf32>
    %cst_40 = arith.constant 9.99999974E-6 : f32
    %108 = vector.broadcast %cst_40 : f32 to vector<128x1xf32>
    %109 = arith.addf %105, %108 : vector<128x1xf32>
    %110 = math.rsqrt %109 : vector<128x1xf32>
    %111 = vector.broadcast %110 : vector<128x1xf32> to vector<128x8xf32>
    %112 = arith.mulf %107, %111 : vector<128x8xf32>
    %113 = vector.broadcast %9 : vector<1x8xf32> to vector<128x8xf32>
    %114 = arith.mulf %112, %113 : vector<128x8xf32>
    %115 = vector.broadcast %10 : vector<1x8xf32> to vector<128x8xf32>
    %116 = arith.addf %114, %115 : vector<128x8xf32>
    %cst_41 = arith.constant dense<0.000000e+00> : vector<128x96xf32>
    %117 = tpu.matmul %116, %3, %cst_41 {dimension_numbers = #tpu.dot_dimension_numbers<[1], [0], [0], [1], [0, 0, 1, 1], [], []>} : vector<128x8xf32>, vector<8x96xf32>, vector<128x96xf32> -> vector<128x96xf32>
    %118 = vector.broadcast %11 : vector<1x96xf32> to vector<128x96xf32>
    %119 = arith.addf %117, %118 : vector<128x96xf32>
    %cst_42 = arith.constant 0.000000e+00 : f32
    %120 = vector.broadcast %cst_42 : f32 to vector<8x32xf32>
    %121 = vector.extract_strided_slice %119 {offsets = [0, 0], sizes = [8, 96], strides = [1, 1]} : vector<128x96xf32> to vector<8x96xf32>
    %cst_43 = arith.constant dense<0.000000e+00> : vector<8x128xf32>
    %122 = tpu.matmul %120, %6, %cst_43 {dimension_numbers = #tpu.dot_dimension_numbers<[1], [0], [0], [1], [0, 0, 1, 1], [], []>} : vector<8x32xf32>, vector<32x128xf32>, vector<8x128xf32> -> vector<8x128xf32>
    %123 = vector.extract_strided_slice %121 {offsets = [0, 0], sizes = [8, 32], strides = [1, 1]} : vector<8x96xf32> to vector<8x32xf32>
    %124 = vector.extract_strided_slice %122 {offsets = [0, 0], sizes = [8, 32], strides = [1, 1]} : vector<8x128xf32> to vector<8x32xf32>
    %125 = arith.addf %123, %124 : vector<8x32xf32>
    %126 = arith.negf %125 : vector<8x32xf32>
    %127 = math.exp %126 : vector<8x32xf32>
    %cst_44 = arith.constant 1.000000e+00 : f32
    %128 = vector.broadcast %cst_44 : f32 to vector<8x32xf32>
    %129 = arith.addf %128, %127 : vector<8x32xf32>
    %130 = arith.divf %128, %129 : vector<8x32xf32>
    %131 = vector.extract_strided_slice %121 {offsets = [0, 32], sizes = [8, 32], strides = [1, 1]} : vector<8x96xf32> to vector<8x32xf32>
    %132 = vector.extract_strided_slice %122 {offsets = [0, 32], sizes = [8, 32], strides = [1, 1]} : vector<8x128xf32> to vector<8x32xf32>
    %133 = arith.addf %131, %132 : vector<8x32xf32>
    %134 = arith.negf %133 : vector<8x32xf32>
    %135 = math.exp %134 : vector<8x32xf32>
    %cst_45 = arith.constant 1.000000e+00 : f32
    %136 = vector.broadcast %cst_45 : f32 to vector<8x32xf32>
    %137 = arith.addf %136, %135 : vector<8x32xf32>
    %138 = arith.divf %136, %137 : vector<8x32xf32>
    %139 = vector.extract_strided_slice %121 {offsets = [0, 64], sizes = [8, 32], strides = [1, 1]} : vector<8x96xf32> to vector<8x32xf32>
    %140 = vector.extract_strided_slice %122 {offsets = [0, 64], sizes = [8, 32], strides = [1, 1]} : vector<8x128xf32> to vector<8x32xf32>
    %141 = vector.broadcast %12 : vector<1x32xf32> to vector<8x32xf32>
    %142 = arith.addf %140, %141 : vector<8x32xf32>
    %143 = arith.mulf %130, %142 : vector<8x32xf32>
    %144 = arith.addf %139, %143 : vector<8x32xf32>
    %145 = math.tanh %144 : vector<8x32xf32>
    %146 = arith.subf %120, %145 : vector<8x32xf32>
    %147 = arith.mulf %138, %146 : vector<8x32xf32>
    %148 = arith.addf %145, %147 : vector<8x32xf32>
    %149 = vector.extract_strided_slice %119 {offsets = [8, 0], sizes = [8, 96], strides = [1, 1]} : vector<128x96xf32> to vector<8x96xf32>
    %cst_46 = arith.constant dense<0.000000e+00> : vector<8x128xf32>
    %150 = tpu.matmul %148, %6, %cst_46 {dimension_numbers = #tpu.dot_dimension_numbers<[1], [0], [0], [1], [0, 0, 1, 1], [], []>} : vector<8x32xf32>, vector<32x128xf32>, vector<8x128xf32> -> vector<8x128xf32>
    %151 = vector.extract_strided_slice %149 {offsets = [0, 0], sizes = [8, 32], strides = [1, 1]} : vector<8x96xf32> to vector<8x32xf32>
    %152 = vector.extract_strided_slice %150 {offsets = [0, 0], sizes = [8, 32], strides = [1, 1]} : vector<8x128xf32> to vector<8x32xf32>
    %153 = arith.addf %151, %152 : vector<8x32xf32>
    %154 = arith.negf %153 : vector<8x32xf32>
    %155 = math.exp %154 : vector<8x32xf32>
    %cst_47 = arith.constant 1.000000e+00 : f32
    %156 = vector.broadcast %cst_47 : f32 to vector<8x32xf32>
    %157 = arith.addf %156, %155 : vector<8x32xf32>
    %158 = arith.divf %156, %157 : vector<8x32xf32>
    %159 = vector.extract_strided_slice %149 {offsets = [0, 32], sizes = [8, 32], strides = [1, 1]} : vector<8x96xf32> to vector<8x32xf32>
    %160 = vector.extract_strided_slice %150 {offsets = [0, 32], sizes = [8, 32], strides = [1, 1]} : vector<8x128xf32> to vector<8x32xf32>
    %161 = arith.addf %159, %160 : vector<8x32xf32>
    %162 = arith.negf %161 : vector<8x32xf32>
    %163 = math.exp %162 : vector<8x32xf32>
    %cst_48 = arith.constant 1.000000e+00 : f32
    %164 = vector.broadcast %cst_48 : f32 to vector<8x32xf32>
    %165 = arith.addf %164, %163 : vector<8x32xf32>
    %166 = arith.divf %164, %165 : vector<8x32xf32>
    %167 = vector.extract_strided_slice %149 {offsets = [0, 64], sizes = [8, 32], strides = [1, 1]} : vector<8x96xf32> to vector<8x32xf32>
    %168 = vector.extract_strided_slice %150 {offsets = [0, 64], sizes = [8, 32], strides = [1, 1]} : vector<8x128xf32> to vector<8x32xf32>
    %169 = vector.broadcast %12 : vector<1x32xf32> to vector<8x32xf32>
    %170 = arith.addf %168, %169 : vector<8x32xf32>
    %171 = arith.mulf %158, %170 : vector<8x32xf32>
    %172 = arith.addf %167, %171 : vector<8x32xf32>
    %173 = math.tanh %172 : vector<8x32xf32>
    %174 = arith.subf %148, %173 : vector<8x32xf32>
    %175 = arith.mulf %166, %174 : vector<8x32xf32>
    %176 = arith.addf %173, %175 : vector<8x32xf32>
    %177 = vector.extract_strided_slice %119 {offsets = [16, 0], sizes = [8, 96], strides = [1, 1]} : vector<128x96xf32> to vector<8x96xf32>
    %cst_49 = arith.constant dense<0.000000e+00> : vector<8x128xf32>
    %178 = tpu.matmul %176, %6, %cst_49 {dimension_numbers = #tpu.dot_dimension_numbers<[1], [0], [0], [1], [0, 0, 1, 1], [], []>} : vector<8x32xf32>, vector<32x128xf32>, vector<8x128xf32> -> vector<8x128xf32>
    %179 = vector.extract_strided_slice %177 {offsets = [0, 0], sizes = [8, 32], strides = [1, 1]} : vector<8x96xf32> to vector<8x32xf32>
    %180 = vector.extract_strided_slice %178 {offsets = [0, 0], sizes = [8, 32], strides = [1, 1]} : vector<8x128xf32> to vector<8x32xf32>
    %181 = arith.addf %179, %180 : vector<8x32xf32>
    %182 = arith.negf %181 : vector<8x32xf32>
    %183 = math.exp %182 : vector<8x32xf32>
    %cst_50 = arith.constant 1.000000e+00 : f32
    %184 = vector.broadcast %cst_50 : f32 to vector<8x32xf32>
    %185 = arith.addf %184, %183 : vector<8x32xf32>
    %186 = arith.divf %184, %185 : vector<8x32xf32>
    %187 = vector.extract_strided_slice %177 {offsets = [0, 32], sizes = [8, 32], strides = [1, 1]} : vector<8x96xf32> to vector<8x32xf32>
    %188 = vector.extract_strided_slice %178 {offsets = [0, 32], sizes = [8, 32], strides = [1, 1]} : vector<8x128xf32> to vector<8x32xf32>
    %189 = arith.addf %187, %188 : vector<8x32xf32>
    %190 = arith.negf %189 : vector<8x32xf32>
    %191 = math.exp %190 : vector<8x32xf32>
    %cst_51 = arith.constant 1.000000e+00 : f32
    %192 = vector.broadcast %cst_51 : f32 to vector<8x32xf32>
    %193 = arith.addf %192, %191 : vector<8x32xf32>
    %194 = arith.divf %192, %193 : vector<8x32xf32>
    %195 = vector.extract_strided_slice %177 {offsets = [0, 64], sizes = [8, 32], strides = [1, 1]} : vector<8x96xf32> to vector<8x32xf32>
    %196 = vector.extract_strided_slice %178 {offsets = [0, 64], sizes = [8, 32], strides = [1, 1]} : vector<8x128xf32> to vector<8x32xf32>
    %197 = vector.broadcast %12 : vector<1x32xf32> to vector<8x32xf32>
    %198 = arith.addf %196, %197 : vector<8x32xf32>
    %199 = arith.mulf %186, %198 : vector<8x32xf32>
    %200 = arith.addf %195, %199 : vector<8x32xf32>
    %201 = math.tanh %200 : vector<8x32xf32>
    %202 = arith.subf %176, %201 : vector<8x32xf32>
    %203 = arith.mulf %194, %202 : vector<8x32xf32>
    %204 = arith.addf %201, %203 : vector<8x32xf32>
    %205 = vector.extract_strided_slice %119 {offsets = [24, 0], sizes = [8, 96], strides = [1, 1]} : vector<128x96xf32> to vector<8x96xf32>
    %cst_52 = arith.constant dense<0.000000e+00> : vector<8x128xf32>
    %206 = tpu.matmul %204, %6, %cst_52 {dimension_numbers = #tpu.dot_dimension_numbers<[1], [0], [0], [1], [0, 0, 1, 1], [], []>} : vector<8x32xf32>, vector<32x128xf32>, vector<8x128xf32> -> vector<8x128xf32>
    %207 = vector.extract_strided_slice %205 {offsets = [0, 0], sizes = [8, 32], strides = [1, 1]} : vector<8x96xf32> to vector<8x32xf32>
    %208 = vector.extract_strided_slice %206 {offsets = [0, 0], sizes = [8, 32], strides = [1, 1]} : vector<8x128xf32> to vector<8x32xf32>
    %209 = arith.addf %207, %208 : vector<8x32xf32>
    %210 = arith.negf %209 : vector<8x32xf32>
    %211 = math.exp %210 : vector<8x32xf32>
    %cst_53 = arith.constant 1.000000e+00 : f32
    %212 = vector.broadcast %cst_53 : f32 to vector<8x32xf32>
    %213 = arith.addf %212, %211 : vector<8x32xf32>
    %214 = arith.divf %212, %213 : vector<8x32xf32>
    %215 = vector.extract_strided_slice %205 {offsets = [0, 32], sizes = [8, 32], strides = [1, 1]} : vector<8x96xf32> to vector<8x32xf32>
    %216 = vector.extract_strided_slice %206 {offsets = [0, 32], sizes = [8, 32], strides = [1, 1]} : vector<8x128xf32> to vector<8x32xf32>
    %217 = arith.addf %215, %216 : vector<8x32xf32>
    %218 = arith.negf %217 : vector<8x32xf32>
    %219 = math.exp %218 : vector<8x32xf32>
    %cst_54 = arith.constant 1.000000e+00 : f32
    %220 = vector.broadcast %cst_54 : f32 to vector<8x32xf32>
    %221 = arith.addf %220, %219 : vector<8x32xf32>
    %222 = arith.divf %220, %221 : vector<8x32xf32>
    %223 = vector.extract_strided_slice %205 {offsets = [0, 64], sizes = [8, 32], strides = [1, 1]} : vector<8x96xf32> to vector<8x32xf32>
    %224 = vector.extract_strided_slice %206 {offsets = [0, 64], sizes = [8, 32], strides = [1, 1]} : vector<8x128xf32> to vector<8x32xf32>
    %225 = vector.broadcast %12 : vector<1x32xf32> to vector<8x32xf32>
    %226 = arith.addf %224, %225 : vector<8x32xf32>
    %227 = arith.mulf %214, %226 : vector<8x32xf32>
    %228 = arith.addf %223, %227 : vector<8x32xf32>
    %229 = math.tanh %228 : vector<8x32xf32>
    %230 = arith.subf %204, %229 : vector<8x32xf32>
    %231 = arith.mulf %222, %230 : vector<8x32xf32>
    %232 = arith.addf %229, %231 : vector<8x32xf32>
    %233 = vector.extract_strided_slice %119 {offsets = [32, 0], sizes = [8, 96], strides = [1, 1]} : vector<128x96xf32> to vector<8x96xf32>
    %cst_55 = arith.constant dense<0.000000e+00> : vector<8x128xf32>
    %234 = tpu.matmul %232, %6, %cst_55 {dimension_numbers = #tpu.dot_dimension_numbers<[1], [0], [0], [1], [0, 0, 1, 1], [], []>} : vector<8x32xf32>, vector<32x128xf32>, vector<8x128xf32> -> vector<8x128xf32>
    %235 = vector.extract_strided_slice %233 {offsets = [0, 0], sizes = [8, 32], strides = [1, 1]} : vector<8x96xf32> to vector<8x32xf32>
    %236 = vector.extract_strided_slice %234 {offsets = [0, 0], sizes = [8, 32], strides = [1, 1]} : vector<8x128xf32> to vector<8x32xf32>
    %237 = arith.addf %235, %236 : vector<8x32xf32>
    %238 = arith.negf %237 : vector<8x32xf32>
    %239 = math.exp %238 : vector<8x32xf32>
    %cst_56 = arith.constant 1.000000e+00 : f32
    %240 = vector.broadcast %cst_56 : f32 to vector<8x32xf32>
    %241 = arith.addf %240, %239 : vector<8x32xf32>
    %242 = arith.divf %240, %241 : vector<8x32xf32>
    %243 = vector.extract_strided_slice %233 {offsets = [0, 32], sizes = [8, 32], strides = [1, 1]} : vector<8x96xf32> to vector<8x32xf32>
    %244 = vector.extract_strided_slice %234 {offsets = [0, 32], sizes = [8, 32], strides = [1, 1]} : vector<8x128xf32> to vector<8x32xf32>
    %245 = arith.addf %243, %244 : vector<8x32xf32>
    %246 = arith.negf %245 : vector<8x32xf32>
    %247 = math.exp %246 : vector<8x32xf32>
    %cst_57 = arith.constant 1.000000e+00 : f32
    %248 = vector.broadcast %cst_57 : f32 to vector<8x32xf32>
    %249 = arith.addf %248, %247 : vector<8x32xf32>
    %250 = arith.divf %248, %249 : vector<8x32xf32>
    %251 = vector.extract_strided_slice %233 {offsets = [0, 64], sizes = [8, 32], strides = [1, 1]} : vector<8x96xf32> to vector<8x32xf32>
    %252 = vector.extract_strided_slice %234 {offsets = [0, 64], sizes = [8, 32], strides = [1, 1]} : vector<8x128xf32> to vector<8x32xf32>
    %253 = vector.broadcast %12 : vector<1x32xf32> to vector<8x32xf32>
    %254 = arith.addf %252, %253 : vector<8x32xf32>
    %255 = arith.mulf %242, %254 : vector<8x32xf32>
    %256 = arith.addf %251, %255 : vector<8x32xf32>
    %257 = math.tanh %256 : vector<8x32xf32>
    %258 = arith.subf %232, %257 : vector<8x32xf32>
    %259 = arith.mulf %250, %258 : vector<8x32xf32>
    %260 = arith.addf %257, %259 : vector<8x32xf32>
    %261 = vector.extract_strided_slice %119 {offsets = [40, 0], sizes = [8, 96], strides = [1, 1]} : vector<128x96xf32> to vector<8x96xf32>
    %cst_58 = arith.constant dense<0.000000e+00> : vector<8x128xf32>
    %262 = tpu.matmul %260, %6, %cst_58 {dimension_numbers = #tpu.dot_dimension_numbers<[1], [0], [0], [1], [0, 0, 1, 1], [], []>} : vector<8x32xf32>, vector<32x128xf32>, vector<8x128xf32> -> vector<8x128xf32>
    %263 = vector.extract_strided_slice %261 {offsets = [0, 0], sizes = [8, 32], strides = [1, 1]} : vector<8x96xf32> to vector<8x32xf32>
    %264 = vector.extract_strided_slice %262 {offsets = [0, 0], sizes = [8, 32], strides = [1, 1]} : vector<8x128xf32> to vector<8x32xf32>
    %265 = arith.addf %263, %264 : vector<8x32xf32>
    %266 = arith.negf %265 : vector<8x32xf32>
    %267 = math.exp %266 : vector<8x32xf32>
    %cst_59 = arith.constant 1.000000e+00 : f32
    %268 = vector.broadcast %cst_59 : f32 to vector<8x32xf32>
    %269 = arith.addf %268, %267 : vector<8x32xf32>
    %270 = arith.divf %268, %269 : vector<8x32xf32>
    %271 = vector.extract_strided_slice %261 {offsets = [0, 32], sizes = [8, 32], strides = [1, 1]} : vector<8x96xf32> to vector<8x32xf32>
    %272 = vector.extract_strided_slice %262 {offsets = [0, 32], sizes = [8, 32], strides = [1, 1]} : vector<8x128xf32> to vector<8x32xf32>
    %273 = arith.addf %271, %272 : vector<8x32xf32>
    %274 = arith.negf %273 : vector<8x32xf32>
    %275 = math.exp %274 : vector<8x32xf32>
    %cst_60 = arith.constant 1.000000e+00 : f32
    %276 = vector.broadcast %cst_60 : f32 to vector<8x32xf32>
    %277 = arith.addf %276, %275 : vector<8x32xf32>
    %278 = arith.divf %276, %277 : vector<8x32xf32>
    %279 = vector.extract_strided_slice %261 {offsets = [0, 64], sizes = [8, 32], strides = [1, 1]} : vector<8x96xf32> to vector<8x32xf32>
    %280 = vector.extract_strided_slice %262 {offsets = [0, 64], sizes = [8, 32], strides = [1, 1]} : vector<8x128xf32> to vector<8x32xf32>
    %281 = vector.broadcast %12 : vector<1x32xf32> to vector<8x32xf32>
    %282 = arith.addf %280, %281 : vector<8x32xf32>
    %283 = arith.mulf %270, %282 : vector<8x32xf32>
    %284 = arith.addf %279, %283 : vector<8x32xf32>
    %285 = math.tanh %284 : vector<8x32xf32>
    %286 = arith.subf %260, %285 : vector<8x32xf32>
    %287 = arith.mulf %278, %286 : vector<8x32xf32>
    %288 = arith.addf %285, %287 : vector<8x32xf32>
    %289 = vector.extract_strided_slice %119 {offsets = [48, 0], sizes = [8, 96], strides = [1, 1]} : vector<128x96xf32> to vector<8x96xf32>
    %cst_61 = arith.constant dense<0.000000e+00> : vector<8x128xf32>
    %290 = tpu.matmul %288, %6, %cst_61 {dimension_numbers = #tpu.dot_dimension_numbers<[1], [0], [0], [1], [0, 0, 1, 1], [], []>} : vector<8x32xf32>, vector<32x128xf32>, vector<8x128xf32> -> vector<8x128xf32>
    %291 = vector.extract_strided_slice %289 {offsets = [0, 0], sizes = [8, 32], strides = [1, 1]} : vector<8x96xf32> to vector<8x32xf32>
    %292 = vector.extract_strided_slice %290 {offsets = [0, 0], sizes = [8, 32], strides = [1, 1]} : vector<8x128xf32> to vector<8x32xf32>
    %293 = arith.addf %291, %292 : vector<8x32xf32>
    %294 = arith.negf %293 : vector<8x32xf32>
    %295 = math.exp %294 : vector<8x32xf32>
    %cst_62 = arith.constant 1.000000e+00 : f32
    %296 = vector.broadcast %cst_62 : f32 to vector<8x32xf32>
    %297 = arith.addf %296, %295 : vector<8x32xf32>
    %298 = arith.divf %296, %297 : vector<8x32xf32>
    %299 = vector.extract_strided_slice %289 {offsets = [0, 32], sizes = [8, 32], strides = [1, 1]} : vector<8x96xf32> to vector<8x32xf32>
    %300 = vector.extract_strided_slice %290 {offsets = [0, 32], sizes = [8, 32], strides = [1, 1]} : vector<8x128xf32> to vector<8x32xf32>
    %301 = arith.addf %299, %300 : vector<8x32xf32>
    %302 = arith.negf %301 : vector<8x32xf32>
    %303 = math.exp %302 : vector<8x32xf32>
    %cst_63 = arith.constant 1.000000e+00 : f32
    %304 = vector.broadcast %cst_63 : f32 to vector<8x32xf32>
    %305 = arith.addf %304, %303 : vector<8x32xf32>
    %306 = arith.divf %304, %305 : vector<8x32xf32>
    %307 = vector.extract_strided_slice %289 {offsets = [0, 64], sizes = [8, 32], strides = [1, 1]} : vector<8x96xf32> to vector<8x32xf32>
    %308 = vector.extract_strided_slice %290 {offsets = [0, 64], sizes = [8, 32], strides = [1, 1]} : vector<8x128xf32> to vector<8x32xf32>
    %309 = vector.broadcast %12 : vector<1x32xf32> to vector<8x32xf32>
    %310 = arith.addf %308, %309 : vector<8x32xf32>
    %311 = arith.mulf %298, %310 : vector<8x32xf32>
    %312 = arith.addf %307, %311 : vector<8x32xf32>
    %313 = math.tanh %312 : vector<8x32xf32>
    %314 = arith.subf %288, %313 : vector<8x32xf32>
    %315 = arith.mulf %306, %314 : vector<8x32xf32>
    %316 = arith.addf %313, %315 : vector<8x32xf32>
    %317 = vector.extract_strided_slice %119 {offsets = [56, 0], sizes = [8, 96], strides = [1, 1]} : vector<128x96xf32> to vector<8x96xf32>
    %cst_64 = arith.constant dense<0.000000e+00> : vector<8x128xf32>
    %318 = tpu.matmul %316, %6, %cst_64 {dimension_numbers = #tpu.dot_dimension_numbers<[1], [0], [0], [1], [0, 0, 1, 1], [], []>} : vector<8x32xf32>, vector<32x128xf32>, vector<8x128xf32> -> vector<8x128xf32>
    %319 = vector.extract_strided_slice %317 {offsets = [0, 0], sizes = [8, 32], strides = [1, 1]} : vector<8x96xf32> to vector<8x32xf32>
    %320 = vector.extract_strided_slice %318 {offsets = [0, 0], sizes = [8, 32], strides = [1, 1]} : vector<8x128xf32> to vector<8x32xf32>
    %321 = arith.addf %319, %320 : vector<8x32xf32>
    %322 = arith.negf %321 : vector<8x32xf32>
    %323 = math.exp %322 : vector<8x32xf32>
    %cst_65 = arith.constant 1.000000e+00 : f32
    %324 = vector.broadcast %cst_65 : f32 to vector<8x32xf32>
    %325 = arith.addf %324, %323 : vector<8x32xf32>
    %326 = arith.divf %324, %325 : vector<8x32xf32>
    %327 = vector.extract_strided_slice %317 {offsets = [0, 32], sizes = [8, 32], strides = [1, 1]} : vector<8x96xf32> to vector<8x32xf32>
    %328 = vector.extract_strided_slice %318 {offsets = [0, 32], sizes = [8, 32], strides = [1, 1]} : vector<8x128xf32> to vector<8x32xf32>
    %329 = arith.addf %327, %328 : vector<8x32xf32>
    %330 = arith.negf %329 : vector<8x32xf32>
    %331 = math.exp %330 : vector<8x32xf32>
    %cst_66 = arith.constant 1.000000e+00 : f32
    %332 = vector.broadcast %cst_66 : f32 to vector<8x32xf32>
    %333 = arith.addf %332, %331 : vector<8x32xf32>
    %334 = arith.divf %332, %333 : vector<8x32xf32>
    %335 = vector.extract_strided_slice %317 {offsets = [0, 64], sizes = [8, 32], strides = [1, 1]} : vector<8x96xf32> to vector<8x32xf32>
    %336 = vector.extract_strided_slice %318 {offsets = [0, 64], sizes = [8, 32], strides = [1, 1]} : vector<8x128xf32> to vector<8x32xf32>
    %337 = vector.broadcast %12 : vector<1x32xf32> to vector<8x32xf32>
    %338 = arith.addf %336, %337 : vector<8x32xf32>
    %339 = arith.mulf %326, %338 : vector<8x32xf32>
    %340 = arith.addf %335, %339 : vector<8x32xf32>
    %341 = math.tanh %340 : vector<8x32xf32>
    %342 = arith.subf %316, %341 : vector<8x32xf32>
    %343 = arith.mulf %334, %342 : vector<8x32xf32>
    %344 = arith.addf %341, %343 : vector<8x32xf32>
    %345 = vector.extract_strided_slice %119 {offsets = [64, 0], sizes = [8, 96], strides = [1, 1]} : vector<128x96xf32> to vector<8x96xf32>
    %cst_67 = arith.constant dense<0.000000e+00> : vector<8x128xf32>
    %346 = tpu.matmul %344, %6, %cst_67 {dimension_numbers = #tpu.dot_dimension_numbers<[1], [0], [0], [1], [0, 0, 1, 1], [], []>} : vector<8x32xf32>, vector<32x128xf32>, vector<8x128xf32> -> vector<8x128xf32>
    %347 = vector.extract_strided_slice %345 {offsets = [0, 0], sizes = [8, 32], strides = [1, 1]} : vector<8x96xf32> to vector<8x32xf32>
    %348 = vector.extract_strided_slice %346 {offsets = [0, 0], sizes = [8, 32], strides = [1, 1]} : vector<8x128xf32> to vector<8x32xf32>
    %349 = arith.addf %347, %348 : vector<8x32xf32>
    %350 = arith.negf %349 : vector<8x32xf32>
    %351 = math.exp %350 : vector<8x32xf32>
    %cst_68 = arith.constant 1.000000e+00 : f32
    %352 = vector.broadcast %cst_68 : f32 to vector<8x32xf32>
    %353 = arith.addf %352, %351 : vector<8x32xf32>
    %354 = arith.divf %352, %353 : vector<8x32xf32>
    %355 = vector.extract_strided_slice %345 {offsets = [0, 32], sizes = [8, 32], strides = [1, 1]} : vector<8x96xf32> to vector<8x32xf32>
    %356 = vector.extract_strided_slice %346 {offsets = [0, 32], sizes = [8, 32], strides = [1, 1]} : vector<8x128xf32> to vector<8x32xf32>
    %357 = arith.addf %355, %356 : vector<8x32xf32>
    %358 = arith.negf %357 : vector<8x32xf32>
    %359 = math.exp %358 : vector<8x32xf32>
    %cst_69 = arith.constant 1.000000e+00 : f32
    %360 = vector.broadcast %cst_69 : f32 to vector<8x32xf32>
    %361 = arith.addf %360, %359 : vector<8x32xf32>
    %362 = arith.divf %360, %361 : vector<8x32xf32>
    %363 = vector.extract_strided_slice %345 {offsets = [0, 64], sizes = [8, 32], strides = [1, 1]} : vector<8x96xf32> to vector<8x32xf32>
    %364 = vector.extract_strided_slice %346 {offsets = [0, 64], sizes = [8, 32], strides = [1, 1]} : vector<8x128xf32> to vector<8x32xf32>
    %365 = vector.broadcast %12 : vector<1x32xf32> to vector<8x32xf32>
    %366 = arith.addf %364, %365 : vector<8x32xf32>
    %367 = arith.mulf %354, %366 : vector<8x32xf32>
    %368 = arith.addf %363, %367 : vector<8x32xf32>
    %369 = math.tanh %368 : vector<8x32xf32>
    %370 = arith.subf %344, %369 : vector<8x32xf32>
    %371 = arith.mulf %362, %370 : vector<8x32xf32>
    %372 = arith.addf %369, %371 : vector<8x32xf32>
    %373 = vector.extract_strided_slice %119 {offsets = [72, 0], sizes = [8, 96], strides = [1, 1]} : vector<128x96xf32> to vector<8x96xf32>
    %cst_70 = arith.constant dense<0.000000e+00> : vector<8x128xf32>
    %374 = tpu.matmul %372, %6, %cst_70 {dimension_numbers = #tpu.dot_dimension_numbers<[1], [0], [0], [1], [0, 0, 1, 1], [], []>} : vector<8x32xf32>, vector<32x128xf32>, vector<8x128xf32> -> vector<8x128xf32>
    %375 = vector.extract_strided_slice %373 {offsets = [0, 0], sizes = [8, 32], strides = [1, 1]} : vector<8x96xf32> to vector<8x32xf32>
    %376 = vector.extract_strided_slice %374 {offsets = [0, 0], sizes = [8, 32], strides = [1, 1]} : vector<8x128xf32> to vector<8x32xf32>
    %377 = arith.addf %375, %376 : vector<8x32xf32>
    %378 = arith.negf %377 : vector<8x32xf32>
    %379 = math.exp %378 : vector<8x32xf32>
    %cst_71 = arith.constant 1.000000e+00 : f32
    %380 = vector.broadcast %cst_71 : f32 to vector<8x32xf32>
    %381 = arith.addf %380, %379 : vector<8x32xf32>
    %382 = arith.divf %380, %381 : vector<8x32xf32>
    %383 = vector.extract_strided_slice %373 {offsets = [0, 32], sizes = [8, 32], strides = [1, 1]} : vector<8x96xf32> to vector<8x32xf32>
    %384 = vector.extract_strided_slice %374 {offsets = [0, 32], sizes = [8, 32], strides = [1, 1]} : vector<8x128xf32> to vector<8x32xf32>
    %385 = arith.addf %383, %384 : vector<8x32xf32>
    %386 = arith.negf %385 : vector<8x32xf32>
    %387 = math.exp %386 : vector<8x32xf32>
    %cst_72 = arith.constant 1.000000e+00 : f32
    %388 = vector.broadcast %cst_72 : f32 to vector<8x32xf32>
    %389 = arith.addf %388, %387 : vector<8x32xf32>
    %390 = arith.divf %388, %389 : vector<8x32xf32>
    %391 = vector.extract_strided_slice %373 {offsets = [0, 64], sizes = [8, 32], strides = [1, 1]} : vector<8x96xf32> to vector<8x32xf32>
    %392 = vector.extract_strided_slice %374 {offsets = [0, 64], sizes = [8, 32], strides = [1, 1]} : vector<8x128xf32> to vector<8x32xf32>
    %393 = vector.broadcast %12 : vector<1x32xf32> to vector<8x32xf32>
    %394 = arith.addf %392, %393 : vector<8x32xf32>
    %395 = arith.mulf %382, %394 : vector<8x32xf32>
    %396 = arith.addf %391, %395 : vector<8x32xf32>
    %397 = math.tanh %396 : vector<8x32xf32>
    %398 = arith.subf %372, %397 : vector<8x32xf32>
    %399 = arith.mulf %390, %398 : vector<8x32xf32>
    %400 = arith.addf %397, %399 : vector<8x32xf32>
    %401 = vector.extract_strided_slice %119 {offsets = [80, 0], sizes = [8, 96], strides = [1, 1]} : vector<128x96xf32> to vector<8x96xf32>
    %cst_73 = arith.constant dense<0.000000e+00> : vector<8x128xf32>
    %402 = tpu.matmul %400, %6, %cst_73 {dimension_numbers = #tpu.dot_dimension_numbers<[1], [0], [0], [1], [0, 0, 1, 1], [], []>} : vector<8x32xf32>, vector<32x128xf32>, vector<8x128xf32> -> vector<8x128xf32>
    %403 = vector.extract_strided_slice %401 {offsets = [0, 0], sizes = [8, 32], strides = [1, 1]} : vector<8x96xf32> to vector<8x32xf32>
    %404 = vector.extract_strided_slice %402 {offsets = [0, 0], sizes = [8, 32], strides = [1, 1]} : vector<8x128xf32> to vector<8x32xf32>
    %405 = arith.addf %403, %404 : vector<8x32xf32>
    %406 = arith.negf %405 : vector<8x32xf32>
    %407 = math.exp %406 : vector<8x32xf32>
    %cst_74 = arith.constant 1.000000e+00 : f32
    %408 = vector.broadcast %cst_74 : f32 to vector<8x32xf32>
    %409 = arith.addf %408, %407 : vector<8x32xf32>
    %410 = arith.divf %408, %409 : vector<8x32xf32>
    %411 = vector.extract_strided_slice %401 {offsets = [0, 32], sizes = [8, 32], strides = [1, 1]} : vector<8x96xf32> to vector<8x32xf32>
    %412 = vector.extract_strided_slice %402 {offsets = [0, 32], sizes = [8, 32], strides = [1, 1]} : vector<8x128xf32> to vector<8x32xf32>
    %413 = arith.addf %411, %412 : vector<8x32xf32>
    %414 = arith.negf %413 : vector<8x32xf32>
    %415 = math.exp %414 : vector<8x32xf32>
    %cst_75 = arith.constant 1.000000e+00 : f32
    %416 = vector.broadcast %cst_75 : f32 to vector<8x32xf32>
    %417 = arith.addf %416, %415 : vector<8x32xf32>
    %418 = arith.divf %416, %417 : vector<8x32xf32>
    %419 = vector.extract_strided_slice %401 {offsets = [0, 64], sizes = [8, 32], strides = [1, 1]} : vector<8x96xf32> to vector<8x32xf32>
    %420 = vector.extract_strided_slice %402 {offsets = [0, 64], sizes = [8, 32], strides = [1, 1]} : vector<8x128xf32> to vector<8x32xf32>
    %421 = vector.broadcast %12 : vector<1x32xf32> to vector<8x32xf32>
    %422 = arith.addf %420, %421 : vector<8x32xf32>
    %423 = arith.mulf %410, %422 : vector<8x32xf32>
    %424 = arith.addf %419, %423 : vector<8x32xf32>
    %425 = math.tanh %424 : vector<8x32xf32>
    %426 = arith.subf %400, %425 : vector<8x32xf32>
    %427 = arith.mulf %418, %426 : vector<8x32xf32>
    %428 = arith.addf %425, %427 : vector<8x32xf32>
    %429 = vector.extract_strided_slice %119 {offsets = [88, 0], sizes = [8, 96], strides = [1, 1]} : vector<128x96xf32> to vector<8x96xf32>
    %cst_76 = arith.constant dense<0.000000e+00> : vector<8x128xf32>
    %430 = tpu.matmul %428, %6, %cst_76 {dimension_numbers = #tpu.dot_dimension_numbers<[1], [0], [0], [1], [0, 0, 1, 1], [], []>} : vector<8x32xf32>, vector<32x128xf32>, vector<8x128xf32> -> vector<8x128xf32>
    %431 = vector.extract_strided_slice %429 {offsets = [0, 0], sizes = [8, 32], strides = [1, 1]} : vector<8x96xf32> to vector<8x32xf32>
    %432 = vector.extract_strided_slice %430 {offsets = [0, 0], sizes = [8, 32], strides = [1, 1]} : vector<8x128xf32> to vector<8x32xf32>
    %433 = arith.addf %431, %432 : vector<8x32xf32>
    %434 = arith.negf %433 : vector<8x32xf32>
    %435 = math.exp %434 : vector<8x32xf32>
    %cst_77 = arith.constant 1.000000e+00 : f32
    %436 = vector.broadcast %cst_77 : f32 to vector<8x32xf32>
    %437 = arith.addf %436, %435 : vector<8x32xf32>
    %438 = arith.divf %436, %437 : vector<8x32xf32>
    %439 = vector.extract_strided_slice %429 {offsets = [0, 32], sizes = [8, 32], strides = [1, 1]} : vector<8x96xf32> to vector<8x32xf32>
    %440 = vector.extract_strided_slice %430 {offsets = [0, 32], sizes = [8, 32], strides = [1, 1]} : vector<8x128xf32> to vector<8x32xf32>
    %441 = arith.addf %439, %440 : vector<8x32xf32>
    %442 = arith.negf %441 : vector<8x32xf32>
    %443 = math.exp %442 : vector<8x32xf32>
    %cst_78 = arith.constant 1.000000e+00 : f32
    %444 = vector.broadcast %cst_78 : f32 to vector<8x32xf32>
    %445 = arith.addf %444, %443 : vector<8x32xf32>
    %446 = arith.divf %444, %445 : vector<8x32xf32>
    %447 = vector.extract_strided_slice %429 {offsets = [0, 64], sizes = [8, 32], strides = [1, 1]} : vector<8x96xf32> to vector<8x32xf32>
    %448 = vector.extract_strided_slice %430 {offsets = [0, 64], sizes = [8, 32], strides = [1, 1]} : vector<8x128xf32> to vector<8x32xf32>
    %449 = vector.broadcast %12 : vector<1x32xf32> to vector<8x32xf32>
    %450 = arith.addf %448, %449 : vector<8x32xf32>
    %451 = arith.mulf %438, %450 : vector<8x32xf32>
    %452 = arith.addf %447, %451 : vector<8x32xf32>
    %453 = math.tanh %452 : vector<8x32xf32>
    %454 = arith.subf %428, %453 : vector<8x32xf32>
    %455 = arith.mulf %446, %454 : vector<8x32xf32>
    %456 = arith.addf %453, %455 : vector<8x32xf32>
    %457 = vector.extract_strided_slice %119 {offsets = [96, 0], sizes = [8, 96], strides = [1, 1]} : vector<128x96xf32> to vector<8x96xf32>
    %cst_79 = arith.constant dense<0.000000e+00> : vector<8x128xf32>
    %458 = tpu.matmul %456, %6, %cst_79 {dimension_numbers = #tpu.dot_dimension_numbers<[1], [0], [0], [1], [0, 0, 1, 1], [], []>} : vector<8x32xf32>, vector<32x128xf32>, vector<8x128xf32> -> vector<8x128xf32>
    %459 = vector.extract_strided_slice %457 {offsets = [0, 0], sizes = [8, 32], strides = [1, 1]} : vector<8x96xf32> to vector<8x32xf32>
    %460 = vector.extract_strided_slice %458 {offsets = [0, 0], sizes = [8, 32], strides = [1, 1]} : vector<8x128xf32> to vector<8x32xf32>
    %461 = arith.addf %459, %460 : vector<8x32xf32>
    %462 = arith.negf %461 : vector<8x32xf32>
    %463 = math.exp %462 : vector<8x32xf32>
    %cst_80 = arith.constant 1.000000e+00 : f32
    %464 = vector.broadcast %cst_80 : f32 to vector<8x32xf32>
    %465 = arith.addf %464, %463 : vector<8x32xf32>
    %466 = arith.divf %464, %465 : vector<8x32xf32>
    %467 = vector.extract_strided_slice %457 {offsets = [0, 32], sizes = [8, 32], strides = [1, 1]} : vector<8x96xf32> to vector<8x32xf32>
    %468 = vector.extract_strided_slice %458 {offsets = [0, 32], sizes = [8, 32], strides = [1, 1]} : vector<8x128xf32> to vector<8x32xf32>
    %469 = arith.addf %467, %468 : vector<8x32xf32>
    %470 = arith.negf %469 : vector<8x32xf32>
    %471 = math.exp %470 : vector<8x32xf32>
    %cst_81 = arith.constant 1.000000e+00 : f32
    %472 = vector.broadcast %cst_81 : f32 to vector<8x32xf32>
    %473 = arith.addf %472, %471 : vector<8x32xf32>
    %474 = arith.divf %472, %473 : vector<8x32xf32>
    %475 = vector.extract_strided_slice %457 {offsets = [0, 64], sizes = [8, 32], strides = [1, 1]} : vector<8x96xf32> to vector<8x32xf32>
    %476 = vector.extract_strided_slice %458 {offsets = [0, 64], sizes = [8, 32], strides = [1, 1]} : vector<8x128xf32> to vector<8x32xf32>
    %477 = vector.broadcast %12 : vector<1x32xf32> to vector<8x32xf32>
    %478 = arith.addf %476, %477 : vector<8x32xf32>
    %479 = arith.mulf %466, %478 : vector<8x32xf32>
    %480 = arith.addf %475, %479 : vector<8x32xf32>
    %481 = math.tanh %480 : vector<8x32xf32>
    %482 = arith.subf %456, %481 : vector<8x32xf32>
    %483 = arith.mulf %474, %482 : vector<8x32xf32>
    %484 = arith.addf %481, %483 : vector<8x32xf32>
    %485 = vector.extract_strided_slice %119 {offsets = [104, 0], sizes = [8, 96], strides = [1, 1]} : vector<128x96xf32> to vector<8x96xf32>
    %cst_82 = arith.constant dense<0.000000e+00> : vector<8x128xf32>
    %486 = tpu.matmul %484, %6, %cst_82 {dimension_numbers = #tpu.dot_dimension_numbers<[1], [0], [0], [1], [0, 0, 1, 1], [], []>} : vector<8x32xf32>, vector<32x128xf32>, vector<8x128xf32> -> vector<8x128xf32>
    %487 = vector.extract_strided_slice %485 {offsets = [0, 0], sizes = [8, 32], strides = [1, 1]} : vector<8x96xf32> to vector<8x32xf32>
    %488 = vector.extract_strided_slice %486 {offsets = [0, 0], sizes = [8, 32], strides = [1, 1]} : vector<8x128xf32> to vector<8x32xf32>
    %489 = arith.addf %487, %488 : vector<8x32xf32>
    %490 = arith.negf %489 : vector<8x32xf32>
    %491 = math.exp %490 : vector<8x32xf32>
    %cst_83 = arith.constant 1.000000e+00 : f32
    %492 = vector.broadcast %cst_83 : f32 to vector<8x32xf32>
    %493 = arith.addf %492, %491 : vector<8x32xf32>
    %494 = arith.divf %492, %493 : vector<8x32xf32>
    %495 = vector.extract_strided_slice %485 {offsets = [0, 32], sizes = [8, 32], strides = [1, 1]} : vector<8x96xf32> to vector<8x32xf32>
    %496 = vector.extract_strided_slice %486 {offsets = [0, 32], sizes = [8, 32], strides = [1, 1]} : vector<8x128xf32> to vector<8x32xf32>
    %497 = arith.addf %495, %496 : vector<8x32xf32>
    %498 = arith.negf %497 : vector<8x32xf32>
    %499 = math.exp %498 : vector<8x32xf32>
    %cst_84 = arith.constant 1.000000e+00 : f32
    %500 = vector.broadcast %cst_84 : f32 to vector<8x32xf32>
    %501 = arith.addf %500, %499 : vector<8x32xf32>
    %502 = arith.divf %500, %501 : vector<8x32xf32>
    %503 = vector.extract_strided_slice %485 {offsets = [0, 64], sizes = [8, 32], strides = [1, 1]} : vector<8x96xf32> to vector<8x32xf32>
    %504 = vector.extract_strided_slice %486 {offsets = [0, 64], sizes = [8, 32], strides = [1, 1]} : vector<8x128xf32> to vector<8x32xf32>
    %505 = vector.broadcast %12 : vector<1x32xf32> to vector<8x32xf32>
    %506 = arith.addf %504, %505 : vector<8x32xf32>
    %507 = arith.mulf %494, %506 : vector<8x32xf32>
    %508 = arith.addf %503, %507 : vector<8x32xf32>
    %509 = math.tanh %508 : vector<8x32xf32>
    %510 = arith.subf %484, %509 : vector<8x32xf32>
    %511 = arith.mulf %502, %510 : vector<8x32xf32>
    %512 = arith.addf %509, %511 : vector<8x32xf32>
    %513 = vector.extract_strided_slice %119 {offsets = [112, 0], sizes = [8, 96], strides = [1, 1]} : vector<128x96xf32> to vector<8x96xf32>
    %cst_85 = arith.constant dense<0.000000e+00> : vector<8x128xf32>
    %514 = tpu.matmul %512, %6, %cst_85 {dimension_numbers = #tpu.dot_dimension_numbers<[1], [0], [0], [1], [0, 0, 1, 1], [], []>} : vector<8x32xf32>, vector<32x128xf32>, vector<8x128xf32> -> vector<8x128xf32>
    %515 = vector.extract_strided_slice %513 {offsets = [0, 0], sizes = [8, 32], strides = [1, 1]} : vector<8x96xf32> to vector<8x32xf32>
    %516 = vector.extract_strided_slice %514 {offsets = [0, 0], sizes = [8, 32], strides = [1, 1]} : vector<8x128xf32> to vector<8x32xf32>
    %517 = arith.addf %515, %516 : vector<8x32xf32>
    %518 = arith.negf %517 : vector<8x32xf32>
    %519 = math.exp %518 : vector<8x32xf32>
    %cst_86 = arith.constant 1.000000e+00 : f32
    %520 = vector.broadcast %cst_86 : f32 to vector<8x32xf32>
    %521 = arith.addf %520, %519 : vector<8x32xf32>
    %522 = arith.divf %520, %521 : vector<8x32xf32>
    %523 = vector.extract_strided_slice %513 {offsets = [0, 32], sizes = [8, 32], strides = [1, 1]} : vector<8x96xf32> to vector<8x32xf32>
    %524 = vector.extract_strided_slice %514 {offsets = [0, 32], sizes = [8, 32], strides = [1, 1]} : vector<8x128xf32> to vector<8x32xf32>
    %525 = arith.addf %523, %524 : vector<8x32xf32>
    %526 = arith.negf %525 : vector<8x32xf32>
    %527 = math.exp %526 : vector<8x32xf32>
    %cst_87 = arith.constant 1.000000e+00 : f32
    %528 = vector.broadcast %cst_87 : f32 to vector<8x32xf32>
    %529 = arith.addf %528, %527 : vector<8x32xf32>
    %530 = arith.divf %528, %529 : vector<8x32xf32>
    %531 = vector.extract_strided_slice %513 {offsets = [0, 64], sizes = [8, 32], strides = [1, 1]} : vector<8x96xf32> to vector<8x32xf32>
    %532 = vector.extract_strided_slice %514 {offsets = [0, 64], sizes = [8, 32], strides = [1, 1]} : vector<8x128xf32> to vector<8x32xf32>
    %533 = vector.broadcast %12 : vector<1x32xf32> to vector<8x32xf32>
    %534 = arith.addf %532, %533 : vector<8x32xf32>
    %535 = arith.mulf %522, %534 : vector<8x32xf32>
    %536 = arith.addf %531, %535 : vector<8x32xf32>
    %537 = math.tanh %536 : vector<8x32xf32>
    %538 = arith.subf %512, %537 : vector<8x32xf32>
    %539 = arith.mulf %530, %538 : vector<8x32xf32>
    %540 = arith.addf %537, %539 : vector<8x32xf32>
    %541 = vector.extract_strided_slice %119 {offsets = [120, 0], sizes = [8, 96], strides = [1, 1]} : vector<128x96xf32> to vector<8x96xf32>
    %cst_88 = arith.constant dense<0.000000e+00> : vector<8x128xf32>
    %542 = tpu.matmul %540, %6, %cst_88 {dimension_numbers = #tpu.dot_dimension_numbers<[1], [0], [0], [1], [0, 0, 1, 1], [], []>} : vector<8x32xf32>, vector<32x128xf32>, vector<8x128xf32> -> vector<8x128xf32>
    %543 = vector.extract_strided_slice %541 {offsets = [0, 0], sizes = [8, 32], strides = [1, 1]} : vector<8x96xf32> to vector<8x32xf32>
    %544 = vector.extract_strided_slice %542 {offsets = [0, 0], sizes = [8, 32], strides = [1, 1]} : vector<8x128xf32> to vector<8x32xf32>
    %545 = arith.addf %543, %544 : vector<8x32xf32>
    %546 = arith.negf %545 : vector<8x32xf32>
    %547 = math.exp %546 : vector<8x32xf32>
    %cst_89 = arith.constant 1.000000e+00 : f32
    %548 = vector.broadcast %cst_89 : f32 to vector<8x32xf32>
    %549 = arith.addf %548, %547 : vector<8x32xf32>
    %550 = arith.divf %548, %549 : vector<8x32xf32>
    %551 = vector.extract_strided_slice %541 {offsets = [0, 32], sizes = [8, 32], strides = [1, 1]} : vector<8x96xf32> to vector<8x32xf32>
    %552 = vector.extract_strided_slice %542 {offsets = [0, 32], sizes = [8, 32], strides = [1, 1]} : vector<8x128xf32> to vector<8x32xf32>
    %553 = arith.addf %551, %552 : vector<8x32xf32>
    %554 = arith.negf %553 : vector<8x32xf32>
    %555 = math.exp %554 : vector<8x32xf32>
    %cst_90 = arith.constant 1.000000e+00 : f32
    %556 = vector.broadcast %cst_90 : f32 to vector<8x32xf32>
    %557 = arith.addf %556, %555 : vector<8x32xf32>
    %558 = arith.divf %556, %557 : vector<8x32xf32>
    %559 = vector.extract_strided_slice %541 {offsets = [0, 64], sizes = [8, 32], strides = [1, 1]} : vector<8x96xf32> to vector<8x32xf32>
    %560 = vector.extract_strided_slice %542 {offsets = [0, 64], sizes = [8, 32], strides = [1, 1]} : vector<8x128xf32> to vector<8x32xf32>
    %561 = vector.broadcast %12 : vector<1x32xf32> to vector<8x32xf32>
    %562 = arith.addf %560, %561 : vector<8x32xf32>
    %563 = arith.mulf %550, %562 : vector<8x32xf32>
    %564 = arith.addf %559, %563 : vector<8x32xf32>
    %565 = math.tanh %564 : vector<8x32xf32>
    %566 = arith.subf %540, %565 : vector<8x32xf32>
    %567 = arith.mulf %558, %566 : vector<8x32xf32>
    %568 = arith.addf %565, %567 : vector<8x32xf32>
    %cst_91 = arith.constant dense<0.000000e+00> : vector<8x128xf32>
    %569 = tpu.matmul %568, %6, %cst_91 {dimension_numbers = #tpu.dot_dimension_numbers<[1], [0], [0], [1], [0, 0, 1, 1], [], []>} : vector<8x32xf32>, vector<32x128xf32>, vector<8x128xf32> -> vector<8x128xf32>
    %570 = vector.extract_strided_slice %569 {offsets = [0, 96], sizes = [8, 4], strides = [1, 1]} : vector<8x128xf32> to vector<8x4xf32>
    %571 = vector.extract_strided_slice %1 {offsets = [64, 0], sizes = [64, 8], strides = [1, 1]} : vector<128x8xf32> to vector<64x8xf32>
    %cst_92 = arith.constant dense<0.000000e+00> : vector<8x8xf32>
    %572 = tpu.matmul %4, %571, %cst_92 {dimension_numbers = #tpu.dot_dimension_numbers<[1], [0], [0], [1], [0, 0, 1, 1], [], []>} : vector<8x64xf32>, vector<64x8xf32>, vector<8x8xf32> -> vector<8x8xf32>
    %cst_93 = arith.constant dense<0.000000e+00> : vector<8x4xf32>
    %573 = tpu.matmul %572, %5, %cst_93 {dimension_numbers = #tpu.dot_dimension_numbers<[1], [0], [0], [1], [0, 0, 1, 1], [], []>} : vector<8x8xf32>, vector<8x4xf32>, vector<8x4xf32> -> vector<8x4xf32>
    %574 = arith.addf %570, %573 : vector<8x4xf32>
    %575 = vector.broadcast %13 : vector<1x4xf32> to vector<8x4xf32>
    %576 = arith.addf %574, %575 : vector<8x4xf32>
    %577 = arith.negf %576 : vector<8x4xf32>
    %578 = math.exp %577 : vector<8x4xf32>
    %cst_94 = arith.constant 1.000000e+00 : f32
    %579 = vector.broadcast %cst_94 : f32 to vector<8x4xf32>
    %580 = arith.addf %579, %578 : vector<8x4xf32>
    %581 = arith.divf %579, %580 : vector<8x4xf32>
    %c0_95 = arith.constant 0 : index
    %c0_96 = arith.constant 0 : index
    %582 = vector.load %arg5[%c0_95, %c0_96] : memref<8x4xf32, #tpu.memory_space<vmem>>, vector<8x4xf32>
    tpu.vector_store %arg5[%c0_95, %c0_96], %581 {strides = array<i32>} : memref<8x4xf32, #tpu.memory_space<vmem>>, vector<8x4xf32>,
    return
  }
  func.func @transform_0(%arg0: i32) -> (i32, i32, i32) {
    %c0_i32 = arith.constant 0 : i32
    %c0_i32_0 = arith.constant 0 : i32
    %c0_i32_1 = arith.constant 0 : i32
    return %arg0, %c0_i32, %c0_i32_0 : i32, i32, i32
  }
  func.func @transform_1(%arg0: i32) -> (i32, i32) {
    %c0_i32 = arith.constant 0 : i32
    %c0_i32_0 = arith.constant 0 : i32
    %c0_i32_1 = arith.constant 0 : i32
    return %c0_i32, %c0_i32_0 : i32, i32
  }
  func.func @transform_2(%arg0: i32) -> (i32, i32) {
    %c0_i32 = arith.constant 0 : i32
    %c0_i32_0 = arith.constant 0 : i32
    %c0_i32_1 = arith.constant 0 : i32
    return %c0_i32, %c0_i32_0 : i32, i32
  }
  func.func @transform_3(%arg0: i32) -> (i32, i32) {
    %c0_i32 = arith.constant 0 : i32
    %c0_i32_0 = arith.constant 0 : i32
    %c0_i32_1 = arith.constant 0 : i32
    return %c0_i32, %c0_i32_0 : i32, i32
  }
  func.func @transform_4(%arg0: i32) -> (i32, i32) {
    %c0_i32 = arith.constant 0 : i32
    %c0_i32_0 = arith.constant 0 : i32
    return %arg0, %c0_i32 : i32, i32
  }
}

</mosaic_0001>

<llo_original>
// kernel: mhanet_forward.1
$region0: #{mhanet_forward.1}
  #allocation0 [shape = 'u32[]', space=smem, size = 0x4, offset = 0x4, fixed_abs, tag = 'smem constant byte address 0x4 - core index']
  #allocation1 [shape = 'u32[144,128]{1,0:T(1,128)}', space=vmem, size = 0x12000, scoped, tag = 'internal scratch']
  %s0 = inlined_call_operand.vmem [shape: f32[2,128,8], index: 0, kind: input, shape index: {}]
  %s1 = inlined_call_operand.vmem [shape: f32[8,384], index: 1, kind: input, shape index: {}]
  %s2 = inlined_call_operand.vmem [shape: f32[32,128], index: 2, kind: input, shape index: {}]
  %s3 = inlined_call_operand.vmem [shape: f32[8,160], index: 3, kind: input, shape index: {}]
  %s4 = inlined_call_operand.vmem [shape: f32[16,4], index: 4, kind: output, shape index: {}]
  %s5 = sld [smem:[#allocation0]]
  $region49: #{mhanet_forward.1} parent=0
    _
  %s7 = ssub.s32 1, %s5
  %s8 = scalar_select 0, %s7, %s5
  loop: start=0, step=1, limit=4
  $region2: #{mhanet_forward.1} parent=0 // loop_pre_header
    _
  $region3: #{mhanet_forward.1} parent=0 // loop_header
    %s10 = sphi 0, %s14
    %p11 = scmp.ge.s32.totalorder %s10, 4
    %s20 = sphi 0, %s22
    %s23 = sphi 0, %s20
    %s24 = sphi 0, %s23
    %s40 = sphi 0, %s24
    %s44 = sphi 0, %s44
    %s46 = sphi 0, %s44
    %s47 = sphi 0, %s46
    %s61 = sphi 0, %s47
    %s65 = sphi 0, %s65
    %s67 = sphi 0, %s65
    %s68 = sphi 0, %s67
    %s82 = sphi 0, %s68
    %s86 = sphi 0, %s86
    %s88 = sphi 0, %s86
    %s89 = sphi 0, %s88
    %s103 = sphi 0, %s89
    %s109 = sphi 0, %s111
    %s112 = sphi 0, %s109
    %s113 = sphi 0, %s112
    %s129 = sphi 0, %s113
  $region4: #{mhanet_forward.1} parent=0 // loop_header_branch
    %13 = sbr.rel (%p11) target = $region8
  $region5: #{mhanet_forward.1} parent=0 // loop_body
    %s15 = ssub.s32 %s10, 1
    %s16 = ssub.s32 %s10, 2
    %s17 = sadd.s32 %s10, 1
    %s18 = ssub.s32 %s10, %s17
    %p19 = scmp.eq.s32.totalorder %s18, 0
    %s21 = sadd.s32 %s20, 1
    %s22 = scalar_select %p19, %s20, %s21
    %p25 = pneg %p19
    %p26 = scmp.eq.s32.totalorder %s10, 1
    %p27 = por %p25, %p26
    %p28 = scmp.ne.s32.totalorder %s20, %s23
    %p29 = scmp.eq.s32.totalorder %s10, 0
    %p30 = por %p28, %p29
    %p31 = scmp.ne.s32.totalorder %s20, %s23
    %p32 = scmp.eq.s32.totalorder %s15, 1
    %p33 = por %p31, %p32
    %p34 = scmp.ne.s32.totalorder %s23, %s24
    %p35 = scmp.eq.s32.totalorder %s15, 0
    %p36 = por %p34, %p35
    %p37 = scmp.ne.s32.totalorder %s23, %s24
    %p38 = scmp.eq.s32.totalorder %s16, 1
    %p39 = por %p37, %p38
    %p41 = scmp.ne.s32.totalorder %s24, %s40
    %p42 = scmp.eq.s32.totalorder %s16, 0
    %p43 = por %p41, %p42
    %s45 = sadd.s32 %s44, 1
    %p48 = scmp.eq.s32.totalorder %s10, 1
    %p49 = scmp.ne.s32.totalorder %s44, %s46
    %p50 = scmp.eq.s32.totalorder %s10, 0
    %p51 = por %p49, %p50
    %p52 = scmp.ne.s32.totalorder %s44, %s46
    %p53 = scmp.eq.s32.totalorder %s15, 1
    %p54 = por %p52, %p53
    %p55 = scmp.ne.s32.totalorder %s46, %s47
    %p56 = scmp.eq.s32.totalorder %s15, 0
    %p57 = por %p55, %p56
    %p58 = scmp.ne.s32.totalorder %s46, %s47
    %p59 = scmp.eq.s32.totalorder %s16, 1
    %p60 = por %p58, %p59
    %p62 = scmp.ne.s32.totalorder %s47, %s61
    %p63 = scmp.eq.s32.totalorder %s16, 0
    %p64 = por %p62, %p63
    %s66 = sadd.s32 %s65, 1
    %p69 = scmp.eq.s32.totalorder %s10, 1
    %p70 = scmp.ne.s32.totalorder %s65, %s67
    %p71 = scmp.eq.s32.totalorder %s10, 0
    %p72 = por %p70, %p71
    %p73 = scmp.ne.s32.totalorder %s65, %s67
    %p74 = scmp.eq.s32.totalorder %s15, 1
    %p75 = por %p73, %p74
    %p76 = scmp.ne.s32.totalorder %s67, %s68
    %p77 = scmp.eq.s32.totalorder %s15, 0
    %p78 = por %p76, %p77
    %p79 = scmp.ne.s32.totalorder %s67, %s68
    %p80 = scmp.eq.s32.totalorder %s16, 1
    %p81 = por %p79, %p80
    %p83 = scmp.ne.s32.totalorder %s68, %s82
    %p84 = scmp.eq.s32.totalorder %s16, 0
    %p85 = por %p83, %p84
    %s87 = sadd.s32 %s86, 1
    %p90 = scmp.eq.s32.totalorder %s10, 1
    %p91 = scmp.ne.s32.totalorder %s86, %s88
    %p92 = scmp.eq.s32.totalorder %s10, 0
    %p93 = por %p91, %p92
    %p94 = scmp.ne.s32.totalorder %s86, %s88
    %p95 = scmp.eq.s32.totalorder %s15, 1
    %p96 = por %p94, %p95
    %p97 = scmp.ne.s32.totalorder %s88, %s89
    %p98 = scmp.eq.s32.totalorder %s15, 0
    %p99 = por %p97, %p98
    %p100 = scmp.ne.s32.totalorder %s88, %s89
    %p101 = scmp.eq.s32.totalorder %s16, 1
    %p102 = por %p100, %p101
    %p104 = scmp.ne.s32.totalorder %s89, %s103
    %p105 = scmp.eq.s32.totalorder %s16, 0
    %p106 = por %p104, %p105
    %s107 = ssub.s32 %s10, %s17
    %p108 = scmp.eq.s32.totalorder %s107, 0
    %s110 = sadd.s32 %s109, 1
    %s111 = scalar_select %p108, %s109, %s110
    %p114 = pneg %p108
    %p115 = scmp.eq.s32.totalorder %s10, 1
    %p116 = por %p114, %p115
    %p117 = scmp.ne.s32.totalorder %s109, %s112
    %p118 = scmp.eq.s32.totalorder %s10, 0
    %p119 = por %p117, %p118
    %p120 = scmp.ne.s32.totalorder %s109, %s112
    %p121 = scmp.eq.s32.totalorder %s15, 1
    %p122 = por %p120, %p121
    %p123 = scmp.ne.s32.totalorder %s112, %s113
    %p124 = scmp.eq.s32.totalorder %s15, 0
    %p125 = por %p123, %p124
    %p126 = scmp.ne.s32.totalorder %s112, %s113
    %p127 = scmp.eq.s32.totalorder %s16, 1
    %p128 = por %p126, %p127
    %p130 = scmp.ne.s32.totalorder %s113, %s129
    %p131 = scmp.eq.s32.totalorder %s16, 0
    %p132 = por %p130, %p131
    %p133 = scmp.le.s32.totalorder 1, %s10
    %p134 = scmp.lt.s32.totalorder %s10, 3
    %p135 = pnand %p133, %p134
    %p136 = pneg %p135
    // Predicated region
    $region9: #{mhanet_forward.1} parent=5 // pred_check
      _
    $region10: #{mhanet_forward.1} parent=5 // pred_check_branch
      %138 = sbr.rel (%p135) target = $region12
    $region11: #{mhanet_forward.1} parent=5 // pred_region
      %s139 = ssub.s32 %s10, 1
      // Predicated region
      $region13: #{mhanet_forward.1} parent=11 // pred_check
        %p140 = pneg %p57
      $region14: #{mhanet_forward.1} parent=11 // pred_check_branch
        %142 = sbr.rel (%p140) target = $region16
      $region15: #{mhanet_forward.1} parent=11 // pred_region
        _
      $region16: #{mhanet_forward.1} parent=11 // pred_fallthru
        _
      // Predicated region
      $region17: #{mhanet_forward.1} parent=11 // pred_check
        %p143 = pneg %p78
      $region18: #{mhanet_forward.1} parent=11 // pred_check_branch
        %145 = sbr.rel (%p143) target = $region20
      $region19: #{mhanet_forward.1} parent=11 // pred_region
        _
      $region20: #{mhanet_forward.1} parent=11 // pred_fallthru
        _
      // Predicated region
      $region21: #{mhanet_forward.1} parent=11 // pred_check
        %p146 = pneg %p99
      $region22: #{mhanet_forward.1} parent=11 // pred_check_branch
        %148 = sbr.rel (%p146) target = $region24
      $region23: #{mhanet_forward.1} parent=11 // pred_region
        _
      $region24: #{mhanet_forward.1} parent=11 // pred_fallthru
        _
    $region12: #{mhanet_forward.1} parent=5 // pred_fallthru
      _
    %p149 = scmp.lt.s32.totalorder %s10, 2
    // Predicated region
    $region25: #{mhanet_forward.1} parent=5 // pred_check
      %p150 = pneg %p149
    $region26: #{mhanet_forward.1} parent=5 // pred_check_branch
      %152 = sbr.rel (%p150) target = $region28
    $region27: #{mhanet_forward.1} parent=5 // pred_region
      // Predicated region
      $region29: #{mhanet_forward.1} parent=27 // pred_check
        %p153 = pneg %p30
      $region30: #{mhanet_forward.1} parent=27 // pred_check_branch
        %155 = sbr.rel (%p153) target = $region32
      $region31: #{mhanet_forward.1} parent=27 // pred_region
        %p156 = scmp.lt.s32.totalorder %s10, 1
        %s157 = scalar_select %p156, %s10, 1
        %s158 = smul.addr %s157, 16
        %s159 = smul.addr %s158, 8
        %s160 = scalar_lea.vmem %s0, %s159
      $region32: #{mhanet_forward.1} parent=27 // pred_fallthru
        _
    $region28: #{mhanet_forward.1} parent=5 // pred_fallthru
      _
    %p161 = scmp.le.s32.totalorder 1, %s10
    %p162 = scmp.lt.s32.totalorder %s10, 3
    %p163 = pnand %p161, %p162
    %p164 = pneg %p163
    // Predicated region
    $region33: #{mhanet_forward.1} parent=5 // pred_check
      _
    $region34: #{mhanet_forward.1} parent=5 // pred_check_branch
      %166 = sbr.rel (%p163) target = $region36
    $region35: #{mhanet_forward.1} parent=5 // pred_region
      %s167 = ssub.s32 %s10, 1
      %p168 = scmp.lt.s32.totalorder %s15, 1
      %s169 = scalar_select %p168, %s15, 1
      %s170 = smul.addr %s169, 16
      %s171 = smul.addr %s170, 8
      %s172 = scalar_lea.vmem %s0, %s171
      %p173 = pneg %p36
      %p174 = pneg %p33
      %p175 = pneg %p57
      %p176 = pneg %p54
      %p177 = pneg %p78
      %p178 = pneg %p75
      %p179 = pneg %p99
      %p180 = pneg %p96
      %p181 = pneg %p125
      %p182 = pneg %p122
      %p183 = scmp.lt.s32.totalorder %s15, 1
      %s184 = scalar_select %p183, %s15, 1
      %s185 = smul.addr %s184, 8
      %s186 = scalar_lea.vmem %s4, %s185
      %p187 = scmp.lt.s32.totalorder %s15, 1
      %s188 = scalar_select %p187, %s15, 1
      %s189 = smul.addr %s188, 16
      %s190 = smul.addr %s189, 8
      %s191 = scalar_lea.vmem %s0, %s190
      %p192 = scmp.lt.s32.totalorder %s15, 1
      %s193 = scalar_select %p192, %s15, 1
      %s194 = smul.addr %s193, 8
      %s195 = scalar_lea.vmem %s4, %s194
      %v196 = vld [vmem:[%s191] sm:$0xff]
      %v197 = vld [vmem:[%s191 + $0x8] sm:$0xff]
      %v198 = vld [vmem:[%s191 + $0x10] sm:$0xff]
      %v199 = vld [vmem:[%s191 + $0x18] sm:$0xff]
      %v200 = vld [vmem:[%s191 + $0x20] sm:$0xff]
      %v201 = vld [vmem:[%s191 + $0x28] sm:$0xff]
      %v202 = vld [vmem:[%s191 + $0x30] sm:$0xff]
      %v203 = vld [vmem:[%s191 + $0x38] sm:$0xff]
      %v204 = vld [vmem:[%s191 + $0x40] sm:$0xff]
      %v205 = vld [vmem:[%s191 + $0x48] sm:$0xff]
      %v206 = vld [vmem:[%s191 + $0x50] sm:$0xff]
      %v207 = vld [vmem:[%s191 + $0x58] sm:$0xff]
      %v208 = vld [vmem:[%s191 + $0x60] sm:$0xff]
      %v209 = vld [vmem:[%s191 + $0x68] sm:$0xff]
      %v210 = vld [vmem:[%s191 + $0x70] sm:$0xff]
      %v211 = vld [vmem:[%s191 + $0x78] sm:$0xff]
      %v212 = vld [vmem:[%s1] sm:$0xff]
      %v213 = vld [vmem:[%s1 + $0x8] sm:$0xff]
      %v214 = vld [vmem:[%s1 + $0x10] sm:$0xff]
      %v215 = vld [vmem:[%s2] sm:$0xff]
      %v216 = vld [vmem:[%s2 + $0x8] sm:$0xff]
      %v217 = vld [vmem:[%s2 + $0x10] sm:$0xff]
      %v218 = vld [vmem:[%s2 + $0x18] sm:$0xff]
      %v219 = vld [vmem:[%s3] ss:$8 sm:$0x3]
      %v220 = vld [vmem:[%s3 + $0x1] ss:$0 sm:$0xff]
      %v221 = vld [vmem:[%s3 + $0x2] ss:$0 sm:$0xff]
      %v222 = vld [vmem:[%s3 + $0x3] ss:$0 sm:$0xff]
      %v223 = vld [vmem:[%s3 + $0x4] ss:$0 sm:$0xff]
      %v224 = vld [vmem:[%s3 + $0x5] ss:$0 sm:$0xff]
      %v225 = vld [vmem:[%s3 + $0x6] ss:$0 sm:$0xff]
      %v227 = vlaneseq
      %v228 = vshrl.u32 %v227, 7
      %v229 = vsub.s32 0, %v228
      %v230 = vrot.slane %v219, %v229
      %v231 = vlaneseq
      %v232 = vshrl.u32 %v231, 7
      %v233 = vsub.s32 1, %v232
      %v234 = vrot.slane %v219, %v233
      %vm237 = vcmask 64512
      %v239 = vsel %vm237, %v196, 0
      %v242 = vsel %vm237, %v197, 0
      %v245 = vsel %vm237, %v198, 0
      %v248 = vsel %vm237, %v199, 0
      %v251 = vsel %vm237, %v200, 0
      %v254 = vsel %vm237, %v201, 0
      %v257 = vsel %vm237, %v202, 0
      %v260 = vsel %vm237, %v203, 0
      %v263 = vsel %vm237, %v204, 0
      %v266 = vsel %vm237, %v205, 0
      %v269 = vsel %vm237, %v206, 0
      %v272 = vsel %vm237, %v207, 0
      %v275 = vsel %vm237, %v208, 0
      %v278 = vsel %vm237, %v209, 0
      %v281 = vsel %vm237, %v210, 0
      %v284 = vsel %vm237, %v211, 0
      %286 = vmatprep.subr.mxu0 %v213
      %287 = vmatpush1.msra.mxu0 %v212
      %288 = vmatprep.subr.mxu0 0.0
      %289 = vmatpush1.msra.mxu0 0.0
      %290 = vmatprep.subr.mxu0 0.0
      %291 = vmatpush1.msra.mxu0 0.0
      %292 = vmatprep.subr.mxu0 0.0
      %293 = vmatpush1.msra.mxu0 0.0
      %294 = vmatprep.subr.mxu0 0.0
      %295 = vmatpush1.msra.mxu0 0.0
      %296 = vmatprep.subr.mxu0 0.0
      %297 = vmatpush1.msra.mxu0 0.0
      %298 = vmatprep.subr.mxu0 0.0
      %299 = vmatpush1.msra.mxu0 0.0
      %300 = vmatprep.subr.mxu0 0.0
      %301 = vmatpush1.msra.mxu0 0.0
      %302 = vmatprep.subr.mxu0 0.0
      %303 = vmatpush1.msra.mxu0 0.0
      %304 = vmatprep.subr.mxu0 0.0
      %305 = vmatpush1.msra.mxu0 0.0
      %306 = vmatprep.subr.mxu0 0.0
      %307 = vmatpush1.msra.mxu0 0.0
      %308 = vmatprep.subr.mxu0 0.0
      %309 = vmatpush1.msra.mxu0 0.0
      %310 = vmatprep.subr.mxu0 0.0
      %311 = vmatpush1.msra.mxu0 0.0
      %312 = vmatprep.subr.mxu0 0.0
      %313 = vmatpush1.msra.mxu0 0.0
      %314 = vmatprep.subr.mxu0 0.0
      %315 = vmatpush1.msra.mxu0 0.0
      %316 = vmatprep.subr.mxu0 0.0
      %317 = vmatpush1.msra.mxu0 0.0
      %318 = vmatprep.subr.mxu0 0.0
      %319 = vmatpush1.msra.mxu0 0.0
      %320 = vmatprep.subr.mxu0 0.0
      %321 = vmatpush1.msra.mxu0 0.0
      %322 = vmatprep.subr.mxu0 0.0
      %323 = vmatpush1.msra.mxu0 0.0
      %324 = vmatprep.subr.mxu0 0.0
      %325 = vmatpush1.msra.mxu0 0.0
      %326 = vmatprep.subr.mxu0 0.0
      %327 = vmatpush1.msra.mxu0 0.0
      %328 = vmatprep.subr.mxu0 0.0
      %329 = vmatpush1.msra.mxu0 0.0
      %330 = vmatprep.subr.mxu0 0.0
      %331 = vmatpush1.msra.mxu0 0.0
      %332 = vmatprep.subr.mxu0 0.0
      %333 = vmatpush1.msra.mxu0 0.0
      %334 = vmatprep.subr.mxu0 0.0
      %335 = vmatpush1.msra.mxu0 0.0
      %336 = vmatprep.subr.mxu0 0.0
      %337 = vmatpush1.msra.mxu0 0.0
      %338 = vmatprep.subr.mxu0 0.0
      %339 = vmatpush1.msra.mxu0 0.0
      %340 = vmatprep.subr.mxu0 0.0
      %341 = vmatpush1.msra.mxu0 0.0
      %342 = vmatprep.subr.mxu0 0.0
      %343 = vmatpush1.msra.mxu0 0.0
      %344 = vmatprep.subr.mxu0 0.0
      %345 = vmatpush1.msra.mxu0 0.0
      %346 = vmatprep.subr.mxu0 0.0
      %347 = vmatpush1.msra.mxu0 0.0
      %348 = vmatprep.subr.mxu0 0.0
      %349 = vmatpush1.msra.mxu0 0.0
      %350 = vmatprep.mubr.f32.mxu0 0.0
      %351 = vmatmul.mubr.f32.gmra.mrb[0].mxu0 %v239
      %v352 = vpop.f32.mrb[0].mxu0
      %v353 = vadd.f32 %v230, %v352
      %v354 = vpop.f32.mrb[0].mxu0
      %v355 = vadd.f32 %v234, %v354
      %356 = vmatprep.mubr.f32.mxu0 0.0
      %357 = vmatmul.mubr.f32.gmra.mrb[0].mxu0 %v242
      %v358 = vpop.f32.mrb[0].mxu0
      %v359 = vadd.f32 %v230, %v358
      %v360 = vpop.f32.mrb[0].mxu0
      %v361 = vadd.f32 %v234, %v360
      %362 = vmatprep.mubr.f32.mxu0 0.0
      %363 = vmatmul.mubr.f32.gmra.mrb[0].mxu0 %v245
      %v364 = vpop.f32.mrb[0].mxu0
      %v365 = vadd.f32 %v230, %v364
      %v366 = vpop.f32.mrb[0].mxu0
      %v367 = vadd.f32 %v234, %v366
      %368 = vmatprep.mubr.f32.mxu0 0.0
      %369 = vmatmul.mubr.f32.gmra.mrb[0].mxu0 %v248
      %v370 = vpop.f32.mrb[0].mxu0
      %v371 = vadd.f32 %v230, %v370
      %v372 = vpop.f32.mrb[0].mxu0
      %v373 = vadd.f32 %v234, %v372
      %374 = vmatprep.mubr.f32.mxu0 0.0
      %375 = vmatmul.mubr.f32.gmra.mrb[0].mxu0 %v251
      %v376 = vpop.f32.mrb[0].mxu0
      %v377 = vadd.f32 %v230, %v376
      %v378 = vpop.f32.mrb[0].mxu0
      %v379 = vadd.f32 %v234, %v378
      %380 = vmatprep.mubr.f32.mxu0 0.0
      %381 = vmatmul.mubr.f32.gmra.mrb[0].mxu0 %v254
      %v382 = vpop.f32.mrb[0].mxu0
      %v383 = vadd.f32 %v230, %v382
      %v384 = vpop.f32.mrb[0].mxu0
      %v385 = vadd.f32 %v234, %v384
      %386 = vmatprep.mubr.f32.mxu0 0.0
      %387 = vmatmul.mubr.f32.gmra.mrb[0].mxu0 %v257
      %v388 = vpop.f32.mrb[0].mxu0
      %v389 = vadd.f32 %v230, %v388
      %v390 = vpop.f32.mrb[0].mxu0
      %v391 = vadd.f32 %v234, %v390
      %392 = vmatprep.mubr.f32.mxu0 0.0
      %393 = vmatmul.mubr.f32.gmra.mrb[0].mxu0 %v260
      %v394 = vpop.f32.mrb[0].mxu0
      %v395 = vadd.f32 %v230, %v394
      %v396 = vpop.f32.mrb[0].mxu0
      %v397 = vadd.f32 %v234, %v396
      %398 = vmatprep.mubr.f32.mxu0 0.0
      %399 = vmatmul.mubr.f32.gmra.mrb[0].mxu0 %v263
      %v400 = vpop.f32.mrb[0].mxu0
      %v401 = vadd.f32 %v230, %v400
      %v402 = vpop.f32.mrb[0].mxu0
      %v403 = vadd.f32 %v234, %v402
      %404 = vmatprep.mubr.f32.mxu0 0.0
      %405 = vmatmul.mubr.f32.gmra.mrb[0].mxu0 %v266
      %v406 = vpop.f32.mrb[0].mxu0
      %v407 = vadd.f32 %v230, %v406
      %v408 = vpop.f32.mrb[0].mxu0
      %v409 = vadd.f32 %v234, %v408
      %410 = vmatprep.mubr.f32.mxu0 0.0
      %411 = vmatmul.mubr.f32.gmra.mrb[0].mxu0 %v269
      %v412 = vpop.f32.mrb[0].mxu0
      %v413 = vadd.f32 %v230, %v412
      %v414 = vpop.f32.mrb[0].mxu0
      %v415 = vadd.f32 %v234, %v414
      %416 = vmatprep.mubr.f32.mxu0 0.0
      %417 = vmatmul.mubr.f32.gmra.mrb[0].mxu0 %v272
      %v418 = vpop.f32.mrb[0].mxu0
      %v419 = vadd.f32 %v230, %v418
      %v420 = vpop.f32.mrb[0].mxu0
      %v421 = vadd.f32 %v234, %v420
      %422 = vmatprep.mubr.f32.mxu0 0.0
      %423 = vmatmul.mubr.f32.gmra.mrb[0].mxu0 %v275
      %v424 = vpop.f32.mrb[0].mxu0
      %v425 = vadd.f32 %v230, %v424
      %v426 = vpop.f32.mrb[0].mxu0
      %v427 = vadd.f32 %v234, %v426
      %428 = vmatprep.mubr.f32.mxu0 0.0
      %429 = vmatmul.mubr.f32.gmra.mrb[0].mxu0 %v278
      %v430 = vpop.f32.mrb[0].mxu0
      %v431 = vadd.f32 %v230, %v430
      %v432 = vpop.f32.mrb[0].mxu0
      %v433 = vadd.f32 %v234, %v432
      %434 = vmatprep.mubr.f32.mxu0 0.0
      %435 = vmatmul.mubr.f32.gmra.mrb[0].mxu0 %v281
      %v436 = vpop.f32.mrb[0].mxu0
      %v437 = vadd.f32 %v230, %v436
      %v438 = vpop.f32.mrb[0].mxu0
      %v439 = vadd.f32 %v234, %v438
      %440 = vmatprep.mubr.f32.mxu0 0.0
      %441 = vmatmul.mubr.f32.gmra.mrb[0].mxu0 %v284
      %v442 = vpop.f32.mrb[0].mxu0
      %v443 = vadd.f32 %v230, %v442
      %v444 = vpop.f32.mrb[0].mxu0
      %v445 = vadd.f32 %v234, %v444
      %446 = vdwg.mxu0
      %v447 = vlaneseq
      %v448 = vshrl.u32 %v447, 7
      %v449 = vadd.s32 %v448, 8
      %v450 = vadd.s32 %v448, 16
      %v451 = vadd.s32 %v448, 24
      %v452 = vadd.s32 %v448, 32
      %v453 = vadd.s32 %v448, 40
      %v454 = vadd.s32 %v448, 48
      %v455 = vadd.s32 %v448, 56
      %v456 = vadd.s32 %v448, 64
      %v457 = vadd.s32 %v448, 72
      %v458 = vadd.s32 %v448, 80
      %v459 = vadd.s32 %v448, 88
      %v460 = vadd.s32 %v448, 96
      %v461 = vadd.s32 %v448, 104
      %v462 = vadd.s32 %v448, 112
      %v463 = vadd.s32 %v448, 120
      %v464 = vlaneseq
      %v465 = vand.u32 %v464, 127
      %v466 = vxor.u32 %v448, %v465
      %v467 = vxor.u32 %v449, %v465
      %v468 = vxor.u32 %v450, %v465
      %v469 = vxor.u32 %v451, %v465
      %v470 = vxor.u32 %v452, %v465
      %v471 = vxor.u32 %v453, %v465
      %v472 = vxor.u32 %v454, %v465
      %v473 = vxor.u32 %v455, %v465
      %v474 = vxor.u32 %v456, %v465
      %v475 = vxor.u32 %v457, %v465
      %v476 = vxor.u32 %v458, %v465
      %v477 = vxor.u32 %v459, %v465
      %v478 = vxor.u32 %v460, %v465
      %v479 = vxor.u32 %v461, %v465
      %v480 = vxor.u32 %v462, %v465
      %v481 = vxor.u32 %v463, %v465
      %v482 = vand.u32 %v466, 7
      %v483 = vand.u32 %v467, 7
      %v484 = vand.u32 %v468, 7
      %v485 = vand.u32 %v469, 7
      %v486 = vand.u32 %v470, 7
      %v487 = vand.u32 %v471, 7
      %v488 = vand.u32 %v472, 7
      %v489 = vand.u32 %v473, 7
      %v490 = vand.u32 %v474, 7
      %v491 = vand.u32 %v475, 7
      %v492 = vand.u32 %v476, 7
      %v493 = vand.u32 %v477, 7
      %v494 = vand.u32 %v478, 7
      %v495 = vand.u32 %v479, 7
      %v496 = vand.u32 %v480, 7
      %v497 = vand.u32 %v481, 7
      %vm498 = vcmp.eq.s32.totalorder %v482, 0
      %vm499 = vcmp.eq.s32.totalorder %v483, 0
      %vm500 = vcmp.eq.s32.totalorder %v484, 0
      %vm501 = vcmp.eq.s32.totalorder %v485, 0
      %vm502 = vcmp.eq.s32.totalorder %v486, 0
      %vm503 = vcmp.eq.s32.totalorder %v487, 0
      %vm504 = vcmp.eq.s32.totalorder %v488, 0
      %vm505 = vcmp.eq.s32.totalorder %v489, 0
      %vm506 = vcmp.eq.s32.totalorder %v490, 0
      %vm507 = vcmp.eq.s32.totalorder %v491, 0
      %vm508 = vcmp.eq.s32.totalorder %v492, 0
      %vm509 = vcmp.eq.s32.totalorder %v493, 0
      %vm510 = vcmp.eq.s32.totalorder %v494, 0
      %vm511 = vcmp.eq.s32.totalorder %v495, 0
      %vm512 = vcmp.eq.s32.totalorder %v496, 0
      %vm513 = vcmp.eq.s32.totalorder %v497, 0
      %v514 = vsel %vm498, 0.0, -1e+30
      %v515 = vsel %vm499, 0.0, -1e+30
      %v516 = vsel %vm500, 0.0, -1e+30
      %v517 = vsel %vm501, 0.0, -1e+30
      %v518 = vsel %vm502, 0.0, -1e+30
      %v519 = vsel %vm503, 0.0, -1e+30
      %v520 = vsel %vm504, 0.0, -1e+30
      %v521 = vsel %vm505, 0.0, -1e+30
      %v522 = vsel %vm506, 0.0, -1e+30
      %v523 = vsel %vm507, 0.0, -1e+30
      %v524 = vsel %vm508, 0.0, -1e+30
      %v525 = vsel %vm509, 0.0, -1e+30
      %v526 = vsel %vm510, 0.0, -1e+30
      %v527 = vsel %vm511, 0.0, -1e+30
      %v528 = vsel %vm512, 0.0, -1e+30
      %v529 = vsel %vm513, 0.0, -1e+30
      %546 = vrot.lane.b32.xlu0 %v353, 64
      %v547 = vpop.permute.xlu0 %546
      %548 = vrot.lane.b32.xlu0 %v359, 64
      %v549 = vpop.permute.xlu0 %548
      %550 = vrot.lane.b32.xlu0 %v365, 64
      %v551 = vpop.permute.xlu0 %550
      %552 = vrot.lane.b32.xlu0 %v371, 64
      %v553 = vpop.permute.xlu0 %552
      %554 = vrot.lane.b32.xlu0 %v377, 64
      %v555 = vpop.permute.xlu0 %554
      %556 = vrot.lane.b32.xlu0 %v383, 64
      %v557 = vpop.permute.xlu0 %556
      %558 = vrot.lane.b32.xlu0 %v389, 64
      %v559 = vpop.permute.xlu0 %558
      %560 = vrot.lane.b32.xlu0 %v395, 64
      %v561 = vpop.permute.xlu0 %560
      %562 = vrot.lane.b32.xlu0 %v401, 64
      %v563 = vpop.permute.xlu0 %562
      %564 = vrot.lane.b32.xlu0 %v407, 64
      %v565 = vpop.permute.xlu0 %564
      %566 = vrot.lane.b32.xlu0 %v413, 64
      %v567 = vpop.permute.xlu0 %566
      %568 = vrot.lane.b32.xlu0 %v419, 64
      %v569 = vpop.permute.xlu0 %568
      %570 = vrot.lane.b32.xlu0 %v425, 64
      %v571 = vpop.permute.xlu0 %570
      %572 = vrot.lane.b32.xlu0 %v431, 64
      %v573 = vpop.permute.xlu0 %572
      %574 = vrot.lane.b32.xlu0 %v437, 64
      %v575 = vpop.permute.xlu0 %574
      %576 = vrot.lane.b32.xlu0 %v443, 64
      %v577 = vpop.permute.xlu0 %576
      %vm578 = vcmask 130048
      %v579 = vsel %vm578, %v353, 0
      %v581 = vsel %vm578, %v359, 0
      %v583 = vsel %vm578, %v365, 0
      %v585 = vsel %vm578, %v371, 0
      %v587 = vsel %vm578, %v377, 0
      %v589 = vsel %vm578, %v383, 0
      %v591 = vsel %vm578, %v389, 0
      %v593 = vsel %vm578, %v395, 0
      %v595 = vsel %vm578, %v401, 0
      %v597 = vsel %vm578, %v407, 0
      %v599 = vsel %vm578, %v413, 0
      %v601 = vsel %vm578, %v419, 0
      %v603 = vsel %vm578, %v425, 0
      %v605 = vsel %vm578, %v431, 0
      %v607 = vsel %vm578, %v437, 0
      %v609 = vsel %vm578, %v443, 0
      %v611 = vsel %vm578, %v547, 0
      %v613 = vsel %vm578, %v549, 0
      %v615 = vsel %vm578, %v551, 0
      %v617 = vsel %vm578, %v553, 0
      %v619 = vsel %vm578, %v555, 0
      %v621 = vsel %vm578, %v557, 0
      %v623 = vsel %vm578, %v559, 0
      %v625 = vsel %vm578, %v561, 0
      %v627 = vsel %vm578, %v563, 0
      %v629 = vsel %vm578, %v565, 0
      %v631 = vsel %vm578, %v567, 0
      %v633 = vsel %vm578, %v569, 0
      %v635 = vsel %vm578, %v571, 0
      %v637 = vsel %vm578, %v573, 0
      %v639 = vsel %vm578, %v575, 0
      %v641 = vsel %vm578, %v577, 0
      %643 = vmatprep.subr.mxu0 0.0
      %644 = vmatpush1.xpose.msra.mxu0 %v611
      %645 = vmatprep.subr.mxu0 0.0
      %646 = vmatpush1.xpose.msra.mxu0 %v613
      %647 = vmatprep.subr.mxu0 0.0
      %648 = vmatpush1.xpose.msra.mxu0 %v615
      %649 = vmatprep.subr.mxu0 0.0
      %650 = vmatpush1.xpose.msra.mxu0 %v617
      %651 = vmatprep.subr.mxu0 0.0
      %652 = vmatpush1.xpose.msra.mxu0 %v619
      %653 = vmatprep.subr.mxu0 0.0
      %654 = vmatpush1.xpose.msra.mxu0 %v621
      %655 = vmatprep.subr.mxu0 0.0
      %656 = vmatpush1.xpose.msra.mxu0 %v623
      %657 = vmatprep.subr.mxu0 0.0
      %658 = vmatpush1.xpose.msra.mxu0 %v625
      %659 = vmatprep.subr.mxu0 0.0
      %660 = vmatpush1.xpose.msra.mxu0 %v627
      %661 = vmatprep.subr.mxu0 0.0
      %662 = vmatpush1.xpose.msra.mxu0 %v629
      %663 = vmatprep.subr.mxu0 0.0
      %664 = vmatpush1.xpose.msra.mxu0 %v631
      %665 = vmatprep.subr.mxu0 0.0
      %666 = vmatpush1.xpose.msra.mxu0 %v633
      %667 = vmatprep.subr.mxu0 0.0
      %668 = vmatpush1.xpose.msra.mxu0 %v635
      %669 = vmatprep.subr.mxu0 0.0
      %670 = vmatpush1.xpose.msra.mxu0 %v637
      %671 = vmatprep.subr.mxu0 0.0
      %672 = vmatpush1.xpose.msra.mxu0 %v639
      %673 = vmatprep.subr.mxu0 0.0
      %674 = vmatpush1.xpose.msra.mxu0 %v641
      %675 = vmatprep.subr.mxu0 0.0
      %676 = vmatpush1.xpose.msra.mxu0 0.0
      %677 = vmatprep.subr.mxu0 0.0
      %678 = vmatpush1.xpose.msra.mxu0 0.0
      %679 = vmatprep.subr.mxu0 0.0
      %680 = vmatpush1.xpose.msra.mxu0 0.0
      %681 = vmatprep.subr.mxu0 0.0
      %682 = vmatpush1.xpose.msra.mxu0 0.0
      %683 = vmatprep.subr.mxu0 0.0
      %684 = vmatpush1.xpose.msra.mxu0 0.0
      %685 = vmatprep.subr.mxu0 0.0
      %686 = vmatpush1.xpose.msra.mxu0 0.0
      %687 = vmatprep.subr.mxu0 0.0
      %688 = vmatpush1.xpose.msra.mxu0 0.0
      %689 = vmatprep.subr.mxu0 0.0
      %690 = vmatpush1.xpose.msra.mxu0 0.0
      %691 = vmatprep.subr.mxu0 0.0
      %692 = vmatpush1.xpose.msra.mxu0 0.0
      %693 = vmatprep.subr.mxu0 0.0
      %694 = vmatpush1.xpose.msra.mxu0 0.0
      %695 = vmatprep.subr.mxu0 0.0
      %696 = vmatpush1.xpose.msra.mxu0 0.0
      %697 = vmatprep.subr.mxu0 0.0
      %698 = vmatpush1.xpose.msra.mxu0 0.0
      %699 = vmatprep.subr.mxu0 0.0
      %700 = vmatpush1.xpose.msra.mxu0 0.0
      %701 = vmatprep.subr.mxu0 0.0
      %702 = vmatpush1.xpose.msra.mxu0 0.0
      %703 = vmatprep.subr.mxu0 0.0
      %704 = vmatpush1.xpose.msra.mxu0 0.0
      %705 = vmatprep.subr.mxu0 0.0
      %706 = vmatpush1.xpose.msra.mxu0 0.0
      %707 = vmatprep.mubr.f32.mxu0 0.0
      %708 = vmatmul.mubr.f32.gmra.mrb[0].mxu0 %v579
      %v709 = vpop.f32.mrb[0].mxu0
      %v710 = vadd.f32 %v514, %v709
      %v711 = vpop.f32.mrb[0].mxu0
      %712 = vmatprep.mubr.f32.mxu0 0.0
      %713 = vmatmul.mubr.f32.gmra.mrb[0].mxu0 %v581
      %v714 = vpop.f32.mrb[0].mxu0
      %v715 = vadd.f32 %v515, %v714
      %v716 = vpop.f32.mrb[0].mxu0
      %717 = vmatprep.mubr.f32.mxu0 0.0
      %718 = vmatmul.mubr.f32.gmra.mrb[0].mxu0 %v583
      %v719 = vpop.f32.mrb[0].mxu0
      %v720 = vadd.f32 %v516, %v719
      %v721 = vpop.f32.mrb[0].mxu0
      %722 = vmatprep.mubr.f32.mxu0 0.0
      %723 = vmatmul.mubr.f32.gmra.mrb[0].mxu0 %v585
      %v724 = vpop.f32.mrb[0].mxu0
      %v725 = vadd.f32 %v517, %v724
      %v726 = vpop.f32.mrb[0].mxu0
      %727 = vmatprep.mubr.f32.mxu0 0.0
      %728 = vmatmul.mubr.f32.gmra.mrb[0].mxu0 %v587
      %v729 = vpop.f32.mrb[0].mxu0
      %v730 = vadd.f32 %v518, %v729
      %v731 = vpop.f32.mrb[0].mxu0
      %732 = vmatprep.mubr.f32.mxu0 0.0
      %733 = vmatmul.mubr.f32.gmra.mrb[0].mxu0 %v589
      %v734 = vpop.f32.mrb[0].mxu0
      %v735 = vadd.f32 %v519, %v734
      %v736 = vpop.f32.mrb[0].mxu0
      %737 = vmatprep.mubr.f32.mxu0 0.0
      %738 = vmatmul.mubr.f32.gmra.mrb[0].mxu0 %v591
      %v739 = vpop.f32.mrb[0].mxu0
      %v740 = vadd.f32 %v520, %v739
      %v741 = vpop.f32.mrb[0].mxu0
      %742 = vmatprep.mubr.f32.mxu0 0.0
      %743 = vmatmul.mubr.f32.gmra.mrb[0].mxu0 %v593
      %v744 = vpop.f32.mrb[0].mxu0
      %v745 = vadd.f32 %v521, %v744
      %v746 = vpop.f32.mrb[0].mxu0
      %747 = vmatprep.mubr.f32.mxu0 0.0
      %748 = vmatmul.mubr.f32.gmra.mrb[0].mxu0 %v595
      %v749 = vpop.f32.mrb[0].mxu0
      %v750 = vadd.f32 %v522, %v749
      %v751 = vpop.f32.mrb[0].mxu0
      %752 = vmatprep.mubr.f32.mxu0 0.0
      %753 = vmatmul.mubr.f32.gmra.mrb[0].mxu0 %v597
      %v754 = vpop.f32.mrb[0].mxu0
      %v755 = vadd.f32 %v523, %v754
      %v756 = vpop.f32.mrb[0].mxu0
      %757 = vmatprep.mubr.f32.mxu0 0.0
      %758 = vmatmul.mubr.f32.gmra.mrb[0].mxu0 %v599
      %v759 = vpop.f32.mrb[0].mxu0
      %v760 = vadd.f32 %v524, %v759
      %v761 = vpop.f32.mrb[0].mxu0
      %762 = vmatprep.mubr.f32.mxu0 0.0
      %763 = vmatmul.mubr.f32.gmra.mrb[0].mxu0 %v601
      %v764 = vpop.f32.mrb[0].mxu0
      %v765 = vadd.f32 %v525, %v764
      %v766 = vpop.f32.mrb[0].mxu0
      %767 = vmatprep.mubr.f32.mxu0 0.0
      %768 = vmatmul.mubr.f32.gmra.mrb[0].mxu0 %v603
      %v769 = vpop.f32.mrb[0].mxu0
      %v770 = vadd.f32 %v526, %v769
      %v771 = vpop.f32.mrb[0].mxu0
      %772 = vmatprep.mubr.f32.mxu0 0.0
      %773 = vmatmul.mubr.f32.gmra.mrb[0].mxu0 %v605
      %v774 = vpop.f32.mrb[0].mxu0
      %v775 = vadd.f32 %v527, %v774
      %v776 = vpop.f32.mrb[0].mxu0
      %777 = vmatprep.mubr.f32.mxu0 0.0
      %778 = vmatmul.mubr.f32.gmra.mrb[0].mxu0 %v607
      %v779 = vpop.f32.mrb[0].mxu0
      %v780 = vadd.f32 %v528, %v779
      %v781 = vpop.f32.mrb[0].mxu0
      %782 = vmatprep.mubr.f32.mxu0 0.0
      %783 = vmatmul.mubr.f32.gmra.mrb[0].mxu0 %v609
      %v784 = vpop.f32.mrb[0].mxu0
      %v785 = vadd.f32 %v529, %v784
      %v786 = vpop.f32.mrb[0].mxu0
      %787 = vdwg.mxu0
      %788 = vmax.xlane.f32.xlu0 %v710
      %v789 = vpop.xlane.xlu0 %788
      %790 = vmax.xlane.f32.xlu0 %v715
      %v791 = vpop.xlane.xlu0 %790
      %792 = vmax.xlane.f32.xlu0 %v720
      %v793 = vpop.xlane.xlu0 %792
      %794 = vmax.xlane.f32.xlu0 %v725
      %v795 = vpop.xlane.xlu0 %794
      %796 = vmax.xlane.f32.xlu0 %v730
      %v797 = vpop.xlane.xlu0 %796
      %798 = vmax.xlane.f32.xlu0 %v735
      %v799 = vpop.xlane.xlu0 %798
      %800 = vmax.xlane.f32.xlu0 %v740
      %v801 = vpop.xlane.xlu0 %800
      %802 = vmax.xlane.f32.xlu0 %v745
      %v803 = vpop.xlane.xlu0 %802
      %804 = vmax.xlane.f32.xlu0 %v750
      %v805 = vpop.xlane.xlu0 %804
      %806 = vmax.xlane.f32.xlu0 %v755
      %v807 = vpop.xlane.xlu0 %806
      %808 = vmax.xlane.f32.xlu0 %v760
      %v809 = vpop.xlane.xlu0 %808
      %810 = vmax.xlane.f32.xlu0 %v765
      %v811 = vpop.xlane.xlu0 %810
      %812 = vmax.xlane.f32.xlu0 %v770
      %v813 = vpop.xlane.xlu0 %812
      %814 = vmax.xlane.f32.xlu0 %v775
      %v815 = vpop.xlane.xlu0 %814
      %816 = vmax.xlane.f32.xlu0 %v780
      %v817 = vpop.xlane.xlu0 %816
      %818 = vmax.xlane.f32.xlu0 %v785
      %v819 = vpop.xlane.xlu0 %818
      %v820 = vsub.f32 %v710, %v789
      %v821 = vsub.f32 %v715, %v791
      %v822 = vsub.f32 %v720, %v793
      %v823 = vsub.f32 %v725, %v795
      %v824 = vsub.f32 %v730, %v797
      %v825 = vsub.f32 %v735, %v799
      %v826 = vsub.f32 %v740, %v801
      %v827 = vsub.f32 %v745, %v803
      %v828 = vsub.f32 %v750, %v805
      %v829 = vsub.f32 %v755, %v807
      %v830 = vsub.f32 %v760, %v809
      %v831 = vsub.f32 %v765, %v811
      %v832 = vsub.f32 %v770, %v813
      %v833 = vsub.f32 %v775, %v815
      %v834 = vsub.f32 %v780, %v817
      %v835 = vsub.f32 %v785, %v819
      %v836 = vmul.f32 %v820, 1.442695
      %v837 = vpow.pop %v836
      %v838 = vmul.f32 %v821, 1.442695
      %v839 = vpow.pop %v838
      %v840 = vmul.f32 %v822, 1.442695
      %v841 = vpow.pop %v840
      %v842 = vmul.f32 %v823, 1.442695
      %v843 = vpow.pop %v842
      %v844 = vmul.f32 %v824, 1.442695
      %v845 = vpow.pop %v844
      %v846 = vmul.f32 %v825, 1.442695
      %v847 = vpow.pop %v846
      %v848 = vmul.f32 %v826, 1.442695
      %v849 = vpow.pop %v848
      %v850 = vmul.f32 %v827, 1.442695
      %v851 = vpow.pop %v850
      %v852 = vmul.f32 %v828, 1.442695
      %v853 = vpow.pop %v852
      %v854 = vmul.f32 %v829, 1.442695
      %v855 = vpow.pop %v854
      %v856 = vmul.f32 %v830, 1.442695
      %v857 = vpow.pop %v856
      %v858 = vmul.f32 %v831, 1.442695
      %v859 = vpow.pop %v858
      %v860 = vmul.f32 %v832, 1.442695
      %v861 = vpow.pop %v860
      %v862 = vmul.f32 %v833, 1.442695
      %v863 = vpow.pop %v862
      %v864 = vmul.f32 %v834, 1.442695
      %v865 = vpow.pop %v864
      %v866 = vmul.f32 %v835, 1.442695
      %v867 = vpow.pop %v866
      %868 = vadd.xlane.f32.xlu0 %v837
      %v869 = vpop.xlane.xlu0 %868
      %870 = vadd.xlane.f32.xlu0 %v839
      %v871 = vpop.xlane.xlu0 %870
      %872 = vadd.xlane.f32.xlu0 %v841
      %v873 = vpop.xlane.xlu0 %872
      %874 = vadd.xlane.f32.xlu0 %v843
      %v875 = vpop.xlane.xlu0 %874
      %876 = vadd.xlane.f32.xlu0 %v845
      %v877 = vpop.xlane.xlu0 %876
      %878 = vadd.xlane.f32.xlu0 %v847
      %v879 = vpop.xlane.xlu0 %878
      %880 = vadd.xlane.f32.xlu0 %v849
      %v881 = vpop.xlane.xlu0 %880
      %882 = vadd.xlane.f32.xlu0 %v851
      %v883 = vpop.xlane.xlu0 %882
      %884 = vadd.xlane.f32.xlu0 %v853
      %v885 = vpop.xlane.xlu0 %884
      %886 = vadd.xlane.f32.xlu0 %v855
      %v887 = vpop.xlane.xlu0 %886
      %888 = vadd.xlane.f32.xlu0 %v857
      %v889 = vpop.xlane.xlu0 %888
      %890 = vadd.xlane.f32.xlu0 %v859
      %v891 = vpop.xlane.xlu0 %890
      %892 = vadd.xlane.f32.xlu0 %v861
      %v893 = vpop.xlane.xlu0 %892
      %894 = vadd.xlane.f32.xlu0 %v863
      %v895 = vpop.xlane.xlu0 %894
      %896 = vadd.xlane.f32.xlu0 %v865
      %v897 = vpop.xlane.xlu0 %896
      %898 = vadd.xlane.f32.xlu0 %v867
      %v899 = vpop.xlane.xlu0 %898
      %v900 = vrcp.pop %v869
      %v901 = vmul.f32 %v837, %v900
      %v902 = vrcp.pop %v871
      %v903 = vmul.f32 %v839, %v902
      %v904 = vrcp.pop %v873
      %v905 = vmul.f32 %v841, %v904
      %v906 = vrcp.pop %v875
      %v907 = vmul.f32 %v843, %v906
      %v908 = vrcp.pop %v877
      %v909 = vmul.f32 %v845, %v908
      %v910 = vrcp.pop %v879
      %v911 = vmul.f32 %v847, %v910
      %v912 = vrcp.pop %v881
      %v913 = vmul.f32 %v849, %v912
      %v914 = vrcp.pop %v883
      %v915 = vmul.f32 %v851, %v914
      %v916 = vrcp.pop %v885
      %v917 = vmul.f32 %v853, %v916
      %v918 = vrcp.pop %v887
      %v919 = vmul.f32 %v855, %v918
      %v920 = vrcp.pop %v889
      %v921 = vmul.f32 %v857, %v920
      %v922 = vrcp.pop %v891
      %v923 = vmul.f32 %v859, %v922
      %v924 = vrcp.pop %v893
      %v925 = vmul.f32 %v861, %v924
      %v926 = vrcp.pop %v895
      %v927 = vmul.f32 %v863, %v926
      %v928 = vrcp.pop %v897
      %v929 = vmul.f32 %v865, %v928
      %v930 = vrcp.pop %v899
      %v931 = vmul.f32 %v867, %v930
      %932 = vrot.lane.b32.xlu0 %v353, 112
      %v933 = vpop.permute.xlu0 %932
      %934 = vrot.lane.b32.xlu0 %v359, 112
      %v935 = vpop.permute.xlu0 %934
      %936 = vrot.lane.b32.xlu0 %v365, 112
      %v937 = vpop.permute.xlu0 %936
      %938 = vrot.lane.b32.xlu0 %v371, 112
      %v939 = vpop.permute.xlu0 %938
      %940 = vrot.lane.b32.xlu0 %v377, 112
      %v941 = vpop.permute.xlu0 %940
      %942 = vrot.lane.b32.xlu0 %v383, 112
      %v943 = vpop.permute.xlu0 %942
      %944 = vrot.lane.b32.xlu0 %v389, 112
      %v945 = vpop.permute.xlu0 %944
      %946 = vrot.lane.b32.xlu0 %v395, 112
      %v947 = vpop.permute.xlu0 %946
      %948 = vrot.lane.b32.xlu0 %v401, 112
      %v949 = vpop.permute.xlu0 %948
      %950 = vrot.lane.b32.xlu0 %v407, 112
      %v951 = vpop.permute.xlu0 %950
      %952 = vrot.lane.b32.xlu0 %v413, 112
      %v953 = vpop.permute.xlu0 %952
      %954 = vrot.lane.b32.xlu0 %v419, 112
      %v955 = vpop.permute.xlu0 %954
      %956 = vrot.lane.b32.xlu0 %v425, 112
      %v957 = vpop.permute.xlu0 %956
      %958 = vrot.lane.b32.xlu0 %v431, 112
      %v959 = vpop.permute.xlu0 %958
      %960 = vrot.lane.b32.xlu0 %v437, 112
      %v961 = vpop.permute.xlu0 %960
      %962 = vrot.lane.b32.xlu0 %v443, 112
      %v963 = vpop.permute.xlu0 %962
      %964 = vrot.lane.b32.xlu0 %v353, 48
      %v965 = vpop.permute.xlu0 %964
      %966 = vrot.lane.b32.xlu0 %v359, 48
      %v967 = vpop.permute.xlu0 %966
      %968 = vrot.lane.b32.xlu0 %v365, 48
      %v969 = vpop.permute.xlu0 %968
      %970 = vrot.lane.b32.xlu0 %v371, 48
      %v971 = vpop.permute.xlu0 %970
      %972 = vrot.lane.b32.xlu0 %v377, 48
      %v973 = vpop.permute.xlu0 %972
      %974 = vrot.lane.b32.xlu0 %v383, 48
      %v975 = vpop.permute.xlu0 %974
      %976 = vrot.lane.b32.xlu0 %v389, 48
      %v977 = vpop.permute.xlu0 %976
      %978 = vrot.lane.b32.xlu0 %v395, 48
      %v979 = vpop.permute.xlu0 %978
      %980 = vrot.lane.b32.xlu0 %v401, 48
      %v981 = vpop.permute.xlu0 %980
      %982 = vrot.lane.b32.xlu0 %v407, 48
      %v983 = vpop.permute.xlu0 %982
      %984 = vrot.lane.b32.xlu0 %v413, 48
      %v985 = vpop.permute.xlu0 %984
      %986 = vrot.lane.b32.xlu0 %v419, 48
      %v987 = vpop.permute.xlu0 %986
      %988 = vrot.lane.b32.xlu0 %v425, 48
      %v989 = vpop.permute.xlu0 %988
      %990 = vrot.lane.b32.xlu0 %v431, 48
      %v991 = vpop.permute.xlu0 %990
      %992 = vrot.lane.b32.xlu0 %v437, 48
      %v993 = vpop.permute.xlu0 %992
      %994 = vrot.lane.b32.xlu0 %v443, 48
      %v995 = vpop.permute.xlu0 %994
      %v996 = vsel %vm578, %v933, 0
      %v998 = vsel %vm578, %v935, 0
      %v1000 = vsel %vm578, %v937, 0
      %v1002 = vsel %vm578, %v939, 0
      %v1004 = vsel %vm578, %v941, 0
      %v1006 = vsel %vm578, %v943, 0
      %v1008 = vsel %vm578, %v945, 0
      %v1010 = vsel %vm578, %v947, 0
      %v1012 = vsel %vm578, %v949, 0
      %v1014 = vsel %vm578, %v951, 0
      %v1016 = vsel %vm578, %v953, 0
      %v1018 = vsel %vm578, %v955, 0
      %v1020 = vsel %vm578, %v957, 0
      %v1022 = vsel %vm578, %v959, 0
      %v1024 = vsel %vm578, %v961, 0
      %v1026 = vsel %vm578, %v963, 0
      %v1028 = vsel %vm578, %v965, 0
      %v1030 = vsel %vm578, %v967, 0
      %v1032 = vsel %vm578, %v969, 0
      %v1034 = vsel %vm578, %v971, 0
      %v1036 = vsel %vm578, %v973, 0
      %v1038 = vsel %vm578, %v975, 0
      %v1040 = vsel %vm578, %v977, 0
      %v1042 = vsel %vm578, %v979, 0
      %v1044 = vsel %vm578, %v981, 0
      %v1046 = vsel %vm578, %v983, 0
      %v1048 = vsel %vm578, %v985, 0
      %v1050 = vsel %vm578, %v987, 0
      %v1052 = vsel %vm578, %v989, 0
      %v1054 = vsel %vm578, %v991, 0
      %v1056 = vsel %vm578, %v993, 0
      %v1058 = vsel %vm578, %v995, 0
      %1060 = vmatprep.subr.mxu0 0.0
      %1061 = vmatpush1.xpose.msra.mxu0 %v1028
      %1062 = vmatprep.subr.mxu0 0.0
      %1063 = vmatpush1.xpose.msra.mxu0 %v1030
      %1064 = vmatprep.subr.mxu0 0.0
      %1065 = vmatpush1.xpose.msra.mxu0 %v1032
      %1066 = vmatprep.subr.mxu0 0.0
      %1067 = vmatpush1.xpose.msra.mxu0 %v1034
      %1068 = vmatprep.subr.mxu0 0.0
      %1069 = vmatpush1.xpose.msra.mxu0 %v1036
      %1070 = vmatprep.subr.mxu0 0.0
      %1071 = vmatpush1.xpose.msra.mxu0 %v1038
      %1072 = vmatprep.subr.mxu0 0.0
      %1073 = vmatpush1.xpose.msra.mxu0 %v1040
      %1074 = vmatprep.subr.mxu0 0.0
      %1075 = vmatpush1.xpose.msra.mxu0 %v1042
      %1076 = vmatprep.subr.mxu0 0.0
      %1077 = vmatpush1.xpose.msra.mxu0 %v1044
      %1078 = vmatprep.subr.mxu0 0.0
      %1079 = vmatpush1.xpose.msra.mxu0 %v1046
      %1080 = vmatprep.subr.mxu0 0.0
      %1081 = vmatpush1.xpose.msra.mxu0 %v1048
      %1082 = vmatprep.subr.mxu0 0.0
      %1083 = vmatpush1.xpose.msra.mxu0 %v1050
      %1084 = vmatprep.subr.mxu0 0.0
      %1085 = vmatpush1.xpose.msra.mxu0 %v1052
      %1086 = vmatprep.subr.mxu0 0.0
      %1087 = vmatpush1.xpose.msra.mxu0 %v1054
      %1088 = vmatprep.subr.mxu0 0.0
      %1089 = vmatpush1.xpose.msra.mxu0 %v1056
      %1090 = vmatprep.subr.mxu0 0.0
      %1091 = vmatpush1.xpose.msra.mxu0 %v1058
      %1092 = vmatprep.subr.mxu0 0.0
      %1093 = vmatpush1.xpose.msra.mxu0 0.0
      %1094 = vmatprep.subr.mxu0 0.0
      %1095 = vmatpush1.xpose.msra.mxu0 0.0
      %1096 = vmatprep.subr.mxu0 0.0
      %1097 = vmatpush1.xpose.msra.mxu0 0.0
      %1098 = vmatprep.subr.mxu0 0.0
      %1099 = vmatpush1.xpose.msra.mxu0 0.0
      %1100 = vmatprep.subr.mxu0 0.0
      %1101 = vmatpush1.xpose.msra.mxu0 0.0
      %1102 = vmatprep.subr.mxu0 0.0
      %1103 = vmatpush1.xpose.msra.mxu0 0.0
      %1104 = vmatprep.subr.mxu0 0.0
      %1105 = vmatpush1.xpose.msra.mxu0 0.0
      %1106 = vmatprep.subr.mxu0 0.0
      %1107 = vmatpush1.xpose.msra.mxu0 0.0
      %1108 = vmatprep.subr.mxu0 0.0
      %1109 = vmatpush1.xpose.msra.mxu0 0.0
      %1110 = vmatprep.subr.mxu0 0.0
      %1111 = vmatpush1.xpose.msra.mxu0 0.0
      %1112 = vmatprep.subr.mxu0 0.0
      %1113 = vmatpush1.xpose.msra.mxu0 0.0
      %1114 = vmatprep.subr.mxu0 0.0
      %1115 = vmatpush1.xpose.msra.mxu0 0.0
      %1116 = vmatprep.subr.mxu0 0.0
      %1117 = vmatpush1.xpose.msra.mxu0 0.0
      %1118 = vmatprep.subr.mxu0 0.0
      %1119 = vmatpush1.xpose.msra.mxu0 0.0
      %1120 = vmatprep.subr.mxu0 0.0
      %1121 = vmatpush1.xpose.msra.mxu0 0.0
      %1122 = vmatprep.subr.mxu0 0.0
      %1123 = vmatpush1.xpose.msra.mxu0 0.0
      %1124 = vmatprep.mubr.f32.mxu0 0.0
      %1125 = vmatmul.mubr.f32.gmra.mrb[0].mxu0 %v996
      %v1126 = vpop.f32.mrb[0].mxu0
      %v1127 = vadd.f32 %v514, %v1126
      %v1128 = vpop.f32.mrb[0].mxu0
      %1129 = vmatprep.mubr.f32.mxu0 0.0
      %1130 = vmatmul.mubr.f32.gmra.mrb[0].mxu0 %v998
      %v1131 = vpop.f32.mrb[0].mxu0
      %v1132 = vadd.f32 %v515, %v1131
      %v1133 = vpop.f32.mrb[0].mxu0
      %1134 = vmatprep.mubr.f32.mxu0 0.0
      %1135 = vmatmul.mubr.f32.gmra.mrb[0].mxu0 %v1000
      %v1136 = vpop.f32.mrb[0].mxu0
      %v1137 = vadd.f32 %v516, %v1136
      %v1138 = vpop.f32.mrb[0].mxu0
      %1139 = vmatprep.mubr.f32.mxu0 0.0
      %1140 = vmatmul.mubr.f32.gmra.mrb[0].mxu0 %v1002
      %v1141 = vpop.f32.mrb[0].mxu0
      %v1142 = vadd.f32 %v517, %v1141
      %v1143 = vpop.f32.mrb[0].mxu0
      %1144 = vmatprep.mubr.f32.mxu0 0.0
      %1145 = vmatmul.mubr.f32.gmra.mrb[0].mxu0 %v1004
      %v1146 = vpop.f32.mrb[0].mxu0
      %v1147 = vadd.f32 %v518, %v1146
      %v1148 = vpop.f32.mrb[0].mxu0
      %1149 = vmatprep.mubr.f32.mxu0 0.0
      %1150 = vmatmul.mubr.f32.gmra.mrb[0].mxu0 %v1006
      %v1151 = vpop.f32.mrb[0].mxu0
      %v1152 = vadd.f32 %v519, %v1151
      %v1153 = vpop.f32.mrb[0].mxu0
      %1154 = vmatprep.mubr.f32.mxu0 0.0
      %1155 = vmatmul.mubr.f32.gmra.mrb[0].mxu0 %v1008
      %v1156 = vpop.f32.mrb[0].mxu0
      %v1157 = vadd.f32 %v520, %v1156
      %v1158 = vpop.f32.mrb[0].mxu0
      %1159 = vmatprep.mubr.f32.mxu0 0.0
      %1160 = vmatmul.mubr.f32.gmra.mrb[0].mxu0 %v1010
      %v1161 = vpop.f32.mrb[0].mxu0
      %v1162 = vadd.f32 %v521, %v1161
      %v1163 = vpop.f32.mrb[0].mxu0
      %1164 = vmatprep.mubr.f32.mxu0 0.0
      %1165 = vmatmul.mubr.f32.gmra.mrb[0].mxu0 %v1012
      %v1166 = vpop.f32.mrb[0].mxu0
      %v1167 = vadd.f32 %v522, %v1166
      %v1168 = vpop.f32.mrb[0].mxu0
      %1169 = vmatprep.mubr.f32.mxu0 0.0
      %1170 = vmatmul.mubr.f32.gmra.mrb[0].mxu0 %v1014
      %v1171 = vpop.f32.mrb[0].mxu0
      %v1172 = vadd.f32 %v523, %v1171
      %v1173 = vpop.f32.mrb[0].mxu0
      %1174 = vmatprep.mubr.f32.mxu0 0.0
      %1175 = vmatmul.mubr.f32.gmra.mrb[0].mxu0 %v1016
      %v1176 = vpop.f32.mrb[0].mxu0
      %v1177 = vadd.f32 %v524, %v1176
      %v1178 = vpop.f32.mrb[0].mxu0
      %1179 = vmatprep.mubr.f32.mxu0 0.0
      %1180 = vmatmul.mubr.f32.gmra.mrb[0].mxu0 %v1018
      %v1181 = vpop.f32.mrb[0].mxu0
      %v1182 = vadd.f32 %v525, %v1181
      %v1183 = vpop.f32.mrb[0].mxu0
      %1184 = vmatprep.mubr.f32.mxu0 0.0
      %1185 = vmatmul.mubr.f32.gmra.mrb[0].mxu0 %v1020
      %v1186 = vpop.f32.mrb[0].mxu0
      %v1187 = vadd.f32 %v526, %v1186
      %v1188 = vpop.f32.mrb[0].mxu0
      %1189 = vmatprep.mubr.f32.mxu0 0.0
      %1190 = vmatmul.mubr.f32.gmra.mrb[0].mxu0 %v1022
      %v1191 = vpop.f32.mrb[0].mxu0
      %v1192 = vadd.f32 %v527, %v1191
      %v1193 = vpop.f32.mrb[0].mxu0
      %1194 = vmatprep.mubr.f32.mxu0 0.0
      %1195 = vmatmul.mubr.f32.gmra.mrb[0].mxu0 %v1024
      %v1196 = vpop.f32.mrb[0].mxu0
      %v1197 = vadd.f32 %v528, %v1196
      %v1198 = vpop.f32.mrb[0].mxu0
      %1199 = vmatprep.mubr.f32.mxu0 0.0
      %1200 = vmatmul.mubr.f32.gmra.mrb[0].mxu0 %v1026
      %v1201 = vpop.f32.mrb[0].mxu0
      %v1202 = vadd.f32 %v529, %v1201
      %v1203 = vpop.f32.mrb[0].mxu0
      %1204 = vdwg.mxu0
      %1205 = vmax.xlane.f32.xlu0 %v1127
      %v1206 = vpop.xlane.xlu0 %1205
      %1207 = vmax.xlane.f32.xlu0 %v1132
      %v1208 = vpop.xlane.xlu0 %1207
      %1209 = vmax.xlane.f32.xlu0 %v1137
      %v1210 = vpop.xlane.xlu0 %1209
      %1211 = vmax.xlane.f32.xlu0 %v1142
      %v1212 = vpop.xlane.xlu0 %1211
      %1213 = vmax.xlane.f32.xlu0 %v1147
      %v1214 = vpop.xlane.xlu0 %1213
      %1215 = vmax.xlane.f32.xlu0 %v1152
      %v1216 = vpop.xlane.xlu0 %1215
      %1217 = vmax.xlane.f32.xlu0 %v1157
      %v1218 = vpop.xlane.xlu0 %1217
      %1219 = vmax.xlane.f32.xlu0 %v1162
      %v1220 = vpop.xlane.xlu0 %1219
      %1221 = vmax.xlane.f32.xlu0 %v1167
      %v1222 = vpop.xlane.xlu0 %1221
      %1223 = vmax.xlane.f32.xlu0 %v1172
      %v1224 = vpop.xlane.xlu0 %1223
      %1225 = vmax.xlane.f32.xlu0 %v1177
      %v1226 = vpop.xlane.xlu0 %1225
      %1227 = vmax.xlane.f32.xlu0 %v1182
      %v1228 = vpop.xlane.xlu0 %1227
      %1229 = vmax.xlane.f32.xlu0 %v1187
      %v1230 = vpop.xlane.xlu0 %1229
      %1231 = vmax.xlane.f32.xlu0 %v1192
      %v1232 = vpop.xlane.xlu0 %1231
      %1233 = vmax.xlane.f32.xlu0 %v1197
      %v1234 = vpop.xlane.xlu0 %1233
      %1235 = vmax.xlane.f32.xlu0 %v1202
      %v1236 = vpop.xlane.xlu0 %1235
      %v1237 = vsub.f32 %v1127, %v1206
      %v1238 = vsub.f32 %v1132, %v1208
      %v1239 = vsub.f32 %v1137, %v1210
      %v1240 = vsub.f32 %v1142, %v1212
      %v1241 = vsub.f32 %v1147, %v1214
      %v1242 = vsub.f32 %v1152, %v1216
      %v1243 = vsub.f32 %v1157, %v1218
      %v1244 = vsub.f32 %v1162, %v1220
      %v1245 = vsub.f32 %v1167, %v1222
      %v1246 = vsub.f32 %v1172, %v1224
      %v1247 = vsub.f32 %v1177, %v1226
      %v1248 = vsub.f32 %v1182, %v1228
      %v1249 = vsub.f32 %v1187, %v1230
      %v1250 = vsub.f32 %v1192, %v1232
      %v1251 = vsub.f32 %v1197, %v1234
      %v1252 = vsub.f32 %v1202, %v1236
      %v1253 = vmul.f32 %v1237, 1.442695
      %v1254 = vpow.pop %v1253
      %v1255 = vmul.f32 %v1238, 1.442695
      %v1256 = vpow.pop %v1255
      %v1257 = vmul.f32 %v1239, 1.442695
      %v1258 = vpow.pop %v1257
      %v1259 = vmul.f32 %v1240, 1.442695
      %v1260 = vpow.pop %v1259
      %v1261 = vmul.f32 %v1241, 1.442695
      %v1262 = vpow.pop %v1261
      %v1263 = vmul.f32 %v1242, 1.442695
      %v1264 = vpow.pop %v1263
      %v1265 = vmul.f32 %v1243, 1.442695
      %v1266 = vpow.pop %v1265
      %v1267 = vmul.f32 %v1244, 1.442695
      %v1268 = vpow.pop %v1267
      %v1269 = vmul.f32 %v1245, 1.442695
      %v1270 = vpow.pop %v1269
      %v1271 = vmul.f32 %v1246, 1.442695
      %v1272 = vpow.pop %v1271
      %v1273 = vmul.f32 %v1247, 1.442695
      %v1274 = vpow.pop %v1273
      %v1275 = vmul.f32 %v1248, 1.442695
      %v1276 = vpow.pop %v1275
      %v1277 = vmul.f32 %v1249, 1.442695
      %v1278 = vpow.pop %v1277
      %v1279 = vmul.f32 %v1250, 1.442695
      %v1280 = vpow.pop %v1279
      %v1281 = vmul.f32 %v1251, 1.442695
      %v1282 = vpow.pop %v1281
      %v1283 = vmul.f32 %v1252, 1.442695
      %v1284 = vpow.pop %v1283
      %1285 = vadd.xlane.f32.xlu0 %v1254
      %v1286 = vpop.xlane.xlu0 %1285
      %1287 = vadd.xlane.f32.xlu0 %v1256
      %v1288 = vpop.xlane.xlu0 %1287
      %1289 = vadd.xlane.f32.xlu0 %v1258
      %v1290 = vpop.xlane.xlu0 %1289
      %1291 = vadd.xlane.f32.xlu0 %v1260
      %v1292 = vpop.xlane.xlu0 %1291
      %1293 = vadd.xlane.f32.xlu0 %v1262
      %v1294 = vpop.xlane.xlu0 %1293
      %1295 = vadd.xlane.f32.xlu0 %v1264
      %v1296 = vpop.xlane.xlu0 %1295
      %1297 = vadd.xlane.f32.xlu0 %v1266
      %v1298 = vpop.xlane.xlu0 %1297
      %1299 = vadd.xlane.f32.xlu0 %v1268
      %v1300 = vpop.xlane.xlu0 %1299
      %1301 = vadd.xlane.f32.xlu0 %v1270
      %v1302 = vpop.xlane.xlu0 %1301
      %1303 = vadd.xlane.f32.xlu0 %v1272
      %v1304 = vpop.xlane.xlu0 %1303
      %1305 = vadd.xlane.f32.xlu0 %v1274
      %v1306 = vpop.xlane.xlu0 %1305
      %1307 = vadd.xlane.f32.xlu0 %v1276
      %v1308 = vpop.xlane.xlu0 %1307
      %1309 = vadd.xlane.f32.xlu0 %v1278
      %v1310 = vpop.xlane.xlu0 %1309
      %1311 = vadd.xlane.f32.xlu0 %v1280
      %v1312 = vpop.xlane.xlu0 %1311
      %1313 = vadd.xlane.f32.xlu0 %v1282
      %v1314 = vpop.xlane.xlu0 %1313
      %1315 = vadd.xlane.f32.xlu0 %v1284
      %v1316 = vpop.xlane.xlu0 %1315
      %v1317 = vrcp.pop %v1286
      %v1318 = vmul.f32 %v1254, %v1317
      %v1319 = vrcp.pop %v1288
      %v1320 = vmul.f32 %v1256, %v1319
      %v1321 = vrcp.pop %v1290
      %v1322 = vmul.f32 %v1258, %v1321
      %v1323 = vrcp.pop %v1292
      %v1324 = vmul.f32 %v1260, %v1323
      %v1325 = vrcp.pop %v1294
      %v1326 = vmul.f32 %v1262, %v1325
      %v1327 = vrcp.pop %v1296
      %v1328 = vmul.f32 %v1264, %v1327
      %v1329 = vrcp.pop %v1298
      %v1330 = vmul.f32 %v1266, %v1329
      %v1331 = vrcp.pop %v1300
      %v1332 = vmul.f32 %v1268, %v1331
      %v1333 = vrcp.pop %v1302
      %v1334 = vmul.f32 %v1270, %v1333
      %v1335 = vrcp.pop %v1304
      %v1336 = vmul.f32 %v1272, %v1335
      %v1337 = vrcp.pop %v1306
      %v1338 = vmul.f32 %v1274, %v1337
      %v1339 = vrcp.pop %v1308
      %v1340 = vmul.f32 %v1276, %v1339
      %v1341 = vrcp.pop %v1310
      %v1342 = vmul.f32 %v1278, %v1341
      %v1343 = vrcp.pop %v1312
      %v1344 = vmul.f32 %v1280, %v1343
      %v1345 = vrcp.pop %v1314
      %v1346 = vmul.f32 %v1282, %v1345
      %v1347 = vrcp.pop %v1316
      %v1348 = vmul.f32 %v1284, %v1347
      %1365 = vrot.lane.b32.xlu0 %v355, 120
      %v1366 = vpop.permute.xlu0 %1365
      %1367 = vrot.lane.b32.xlu0 %v361, 120
      %v1368 = vpop.permute.xlu0 %1367
      %1369 = vrot.lane.b32.xlu0 %v367, 120
      %v1370 = vpop.permute.xlu0 %1369
      %1371 = vrot.lane.b32.xlu0 %v373, 120
      %v1372 = vpop.permute.xlu0 %1371
      %1373 = vrot.lane.b32.xlu0 %v379, 120
      %v1374 = vpop.permute.xlu0 %1373
      %1375 = vrot.lane.b32.xlu0 %v385, 120
      %v1376 = vpop.permute.xlu0 %1375
      %1377 = vrot.lane.b32.xlu0 %v391, 120
      %v1378 = vpop.permute.xlu0 %1377
      %1379 = vrot.lane.b32.xlu0 %v397, 120
      %v1380 = vpop.permute.xlu0 %1379
      %1381 = vrot.lane.b32.xlu0 %v403, 120
      %v1382 = vpop.permute.xlu0 %1381
      %1383 = vrot.lane.b32.xlu0 %v409, 120
      %v1384 = vpop.permute.xlu0 %1383
      %1385 = vrot.lane.b32.xlu0 %v415, 120
      %v1386 = vpop.permute.xlu0 %1385
      %1387 = vrot.lane.b32.xlu0 %v421, 120
      %v1388 = vpop.permute.xlu0 %1387
      %1389 = vrot.lane.b32.xlu0 %v427, 120
      %v1390 = vpop.permute.xlu0 %1389
      %1391 = vrot.lane.b32.xlu0 %v433, 120
      %v1392 = vpop.permute.xlu0 %1391
      %1393 = vrot.lane.b32.xlu0 %v439, 120
      %v1394 = vpop.permute.xlu0 %1393
      %1395 = vrot.lane.b32.xlu0 %v445, 120
      %v1396 = vpop.permute.xlu0 %1395
      %1413 = vmatprep.subr.mxu0 0.0
      %1414 = vmatpush1.msra.mxu0 %v1366
      %1415 = vmatprep.subr.mxu0 0.0
      %1416 = vmatpush1.msra.mxu0 %v1368
      %1417 = vmatprep.subr.mxu0 0.0
      %1418 = vmatpush1.msra.mxu0 %v1370
      %1419 = vmatprep.subr.mxu0 0.0
      %1420 = vmatpush1.msra.mxu0 %v1372
      %1421 = vmatprep.subr.mxu0 0.0
      %1422 = vmatpush1.msra.mxu0 %v1374
      %1423 = vmatprep.subr.mxu0 0.0
      %1424 = vmatpush1.msra.mxu0 %v1376
      %1425 = vmatprep.subr.mxu0 0.0
      %1426 = vmatpush1.msra.mxu0 %v1378
      %1427 = vmatprep.subr.mxu0 0.0
      %1428 = vmatpush1.msra.mxu0 %v1380
      %1429 = vmatprep.subr.mxu0 0.0
      %1430 = vmatpush1.msra.mxu0 %v1382
      %1431 = vmatprep.subr.mxu0 0.0
      %1432 = vmatpush1.msra.mxu0 %v1384
      %1433 = vmatprep.subr.mxu0 0.0
      %1434 = vmatpush1.msra.mxu0 %v1386
      %1435 = vmatprep.subr.mxu0 0.0
      %1436 = vmatpush1.msra.mxu0 %v1388
      %1437 = vmatprep.subr.mxu0 0.0
      %1438 = vmatpush1.msra.mxu0 %v1390
      %1439 = vmatprep.subr.mxu0 0.0
      %1440 = vmatpush1.msra.mxu0 %v1392
      %1441 = vmatprep.subr.mxu0 0.0
      %1442 = vmatpush1.msra.mxu0 %v1394
      %1443 = vmatprep.subr.mxu0 0.0
      %1444 = vmatpush1.msra.mxu0 %v1396
      %1445 = vmatprep.subr.mxu0 0.0
      %1446 = vmatpush1.msra.mxu0 0.0
      %1447 = vmatprep.subr.mxu0 0.0
      %1448 = vmatpush1.msra.mxu0 0.0
      %1449 = vmatprep.subr.mxu0 0.0
      %1450 = vmatpush1.msra.mxu0 0.0
      %1451 = vmatprep.subr.mxu0 0.0
      %1452 = vmatpush1.msra.mxu0 0.0
      %1453 = vmatprep.subr.mxu0 0.0
      %1454 = vmatpush1.msra.mxu0 0.0
      %1455 = vmatprep.subr.mxu0 0.0
      %1456 = vmatpush1.msra.mxu0 0.0
      %1457 = vmatprep.subr.mxu0 0.0
      %1458 = vmatpush1.msra.mxu0 0.0
      %1459 = vmatprep.subr.mxu0 0.0
      %1460 = vmatpush1.msra.mxu0 0.0
      %1461 = vmatprep.subr.mxu0 0.0
      %1462 = vmatpush1.msra.mxu0 0.0
      %1463 = vmatprep.subr.mxu0 0.0
      %1464 = vmatpush1.msra.mxu0 0.0
      %1465 = vmatprep.subr.mxu0 0.0
      %1466 = vmatpush1.msra.mxu0 0.0
      %1467 = vmatprep.subr.mxu0 0.0
      %1468 = vmatpush1.msra.mxu0 0.0
      %1469 = vmatprep.subr.mxu0 0.0
      %1470 = vmatpush1.msra.mxu0 0.0
      %1471 = vmatprep.subr.mxu0 0.0
      %1472 = vmatpush1.msra.mxu0 0.0
      %1473 = vmatprep.subr.mxu0 0.0
      %1474 = vmatpush1.msra.mxu0 0.0
      %1475 = vmatprep.subr.mxu0 0.0
      %1476 = vmatpush1.msra.mxu0 0.0
      %1477 = vmatprep.mubr.f32.mxu0 0.0
      %1478 = vmatmul.mubr.f32.gmra.mrb[0].mxu0 %v1318
      %v1479 = vpop.f32.mrb[0].mxu0
      %v1480 = vadd.f32 0.0, %v1479
      %v1481 = vpop.f32.mrb[0].mxu0
      %1482 = vmatprep.mubr.f32.mxu0 0.0
      %1483 = vmatmul.mubr.f32.gmra.mrb[0].mxu0 %v1320
      %v1484 = vpop.f32.mrb[0].mxu0
      %v1485 = vadd.f32 0.0, %v1484
      %v1486 = vpop.f32.mrb[0].mxu0
      %1487 = vmatprep.mubr.f32.mxu0 0.0
      %1488 = vmatmul.mubr.f32.gmra.mrb[0].mxu0 %v1322
      %v1489 = vpop.f32.mrb[0].mxu0
      %v1490 = vadd.f32 0.0, %v1489
      %v1491 = vpop.f32.mrb[0].mxu0
      %1492 = vmatprep.mubr.f32.mxu0 0.0
      %1493 = vmatmul.mubr.f32.gmra.mrb[0].mxu0 %v1324
      %v1494 = vpop.f32.mrb[0].mxu0
      %v1495 = vadd.f32 0.0, %v1494
      %v1496 = vpop.f32.mrb[0].mxu0
      %1497 = vmatprep.mubr.f32.mxu0 0.0
      %1498 = vmatmul.mubr.f32.gmra.mrb[0].mxu0 %v1326
      %v1499 = vpop.f32.mrb[0].mxu0
      %v1500 = vadd.f32 0.0, %v1499
      %v1501 = vpop.f32.mrb[0].mxu0
      %1502 = vmatprep.mubr.f32.mxu0 0.0
      %1503 = vmatmul.mubr.f32.gmra.mrb[0].mxu0 %v1328
      %v1504 = vpop.f32.mrb[0].mxu0
      %v1505 = vadd.f32 0.0, %v1504
      %v1506 = vpop.f32.mrb[0].mxu0
      %1507 = vmatprep.mubr.f32.mxu0 0.0
      %1508 = vmatmul.mubr.f32.gmra.mrb[0].mxu0 %v1330
      %v1509 = vpop.f32.mrb[0].mxu0
      %v1510 = vadd.f32 0.0, %v1509
      %v1511 = vpop.f32.mrb[0].mxu0
      %1512 = vmatprep.mubr.f32.mxu0 0.0
      %1513 = vmatmul.mubr.f32.gmra.mrb[0].mxu0 %v1332
      %v1514 = vpop.f32.mrb[0].mxu0
      %v1515 = vadd.f32 0.0, %v1514
      %v1516 = vpop.f32.mrb[0].mxu0
      %1517 = vmatprep.mubr.f32.mxu0 0.0
      %1518 = vmatmul.mubr.f32.gmra.mrb[0].mxu0 %v1334
      %v1519 = vpop.f32.mrb[0].mxu0
      %v1520 = vadd.f32 0.0, %v1519
      %v1521 = vpop.f32.mrb[0].mxu0
      %1522 = vmatprep.mubr.f32.mxu0 0.0
      %1523 = vmatmul.mubr.f32.gmra.mrb[0].mxu0 %v1336
      %v1524 = vpop.f32.mrb[0].mxu0
      %v1525 = vadd.f32 0.0, %v1524
      %v1526 = vpop.f32.mrb[0].mxu0
      %1527 = vmatprep.mubr.f32.mxu0 0.0
      %1528 = vmatmul.mubr.f32.gmra.mrb[0].mxu0 %v1338
      %v1529 = vpop.f32.mrb[0].mxu0
      %v1530 = vadd.f32 0.0, %v1529
      %v1531 = vpop.f32.mrb[0].mxu0
      %1532 = vmatprep.mubr.f32.mxu0 0.0
      %1533 = vmatmul.mubr.f32.gmra.mrb[0].mxu0 %v1340
      %v1534 = vpop.f32.mrb[0].mxu0
      %v1535 = vadd.f32 0.0, %v1534
      %v1536 = vpop.f32.mrb[0].mxu0
      %1537 = vmatprep.mubr.f32.mxu0 0.0
      %1538 = vmatmul.mubr.f32.gmra.mrb[0].mxu0 %v1342
      %v1539 = vpop.f32.mrb[0].mxu0
      %v1540 = vadd.f32 0.0, %v1539
      %v1541 = vpop.f32.mrb[0].mxu0
      %1542 = vmatprep.mubr.f32.mxu0 0.0
      %1543 = vmatmul.mubr.f32.gmra.mrb[0].mxu0 %v1344
      %v1544 = vpop.f32.mrb[0].mxu0
      %v1545 = vadd.f32 0.0, %v1544
      %v1546 = vpop.f32.mrb[0].mxu0
      %1547 = vmatprep.mubr.f32.mxu0 0.0
      %1548 = vmatmul.mubr.f32.gmra.mrb[0].mxu0 %v1346
      %v1549 = vpop.f32.mrb[0].mxu0
      %v1550 = vadd.f32 0.0, %v1549
      %v1551 = vpop.f32.mrb[0].mxu0
      %1552 = vmatprep.mubr.f32.mxu0 0.0
      %1553 = vmatmul.mubr.f32.gmra.mrb[0].mxu0 %v1348
      %v1554 = vpop.f32.mrb[0].mxu0
      %v1555 = vadd.f32 0.0, %v1554
      %v1556 = vpop.f32.mrb[0].mxu0
      %1557 = vdwg.mxu0
      %1558 = vmatprep.subr.mxu0 0.0
      %1559 = vmatpush1.msra.mxu0 %v355
      %1560 = vmatprep.subr.mxu0 0.0
      %1561 = vmatpush1.msra.mxu0 %v361
      %1562 = vmatprep.subr.mxu0 0.0
      %1563 = vmatpush1.msra.mxu0 %v367
      %1564 = vmatprep.subr.mxu0 0.0
      %1565 = vmatpush1.msra.mxu0 %v373
      %1566 = vmatprep.subr.mxu0 0.0
      %1567 = vmatpush1.msra.mxu0 %v379
      %1568 = vmatprep.subr.mxu0 0.0
      %1569 = vmatpush1.msra.mxu0 %v385
      %1570 = vmatprep.subr.mxu0 0.0
      %1571 = vmatpush1.msra.mxu0 %v391
      %1572 = vmatprep.subr.mxu0 0.0
      %1573 = vmatpush1.msra.mxu0 %v397
      %1574 = vmatprep.subr.mxu0 0.0
      %1575 = vmatpush1.msra.mxu0 %v403
      %1576 = vmatprep.subr.mxu0 0.0
      %1577 = vmatpush1.msra.mxu0 %v409
      %1578 = vmatprep.subr.mxu0 0.0
      %1579 = vmatpush1.msra.mxu0 %v415
      %1580 = vmatprep.subr.mxu0 0.0
      %1581 = vmatpush1.msra.mxu0 %v421
      %1582 = vmatprep.subr.mxu0 0.0
      %1583 = vmatpush1.msra.mxu0 %v427
      %1584 = vmatprep.subr.mxu0 0.0
      %1585 = vmatpush1.msra.mxu0 %v433
      %1586 = vmatprep.subr.mxu0 0.0
      %1587 = vmatpush1.msra.mxu0 %v439
      %1588 = vmatprep.subr.mxu0 0.0
      %1589 = vmatpush1.msra.mxu0 %v445
      %1590 = vmatprep.subr.mxu0 0.0
      %1591 = vmatpush1.msra.mxu0 0.0
      %1592 = vmatprep.subr.mxu0 0.0
      %1593 = vmatpush1.msra.mxu0 0.0
      %1594 = vmatprep.subr.mxu0 0.0
      %1595 = vmatpush1.msra.mxu0 0.0
      %1596 = vmatprep.subr.mxu0 0.0
      %1597 = vmatpush1.msra.mxu0 0.0
      %1598 = vmatprep.subr.mxu0 0.0
      %1599 = vmatpush1.msra.mxu0 0.0
      %1600 = vmatprep.subr.mxu0 0.0
      %1601 = vmatpush1.msra.mxu0 0.0
      %1602 = vmatprep.subr.mxu0 0.0
      %1603 = vmatpush1.msra.mxu0 0.0
      %1604 = vmatprep.subr.mxu0 0.0
      %1605 = vmatpush1.msra.mxu0 0.0
      %1606 = vmatprep.subr.mxu0 0.0
      %1607 = vmatpush1.msra.mxu0 0.0
      %1608 = vmatprep.subr.mxu0 0.0
      %1609 = vmatpush1.msra.mxu0 0.0
      %1610 = vmatprep.subr.mxu0 0.0
      %1611 = vmatpush1.msra.mxu0 0.0
      %1612 = vmatprep.subr.mxu0 0.0
      %1613 = vmatpush1.msra.mxu0 0.0
      %1614 = vmatprep.subr.mxu0 0.0
      %1615 = vmatpush1.msra.mxu0 0.0
      %1616 = vmatprep.subr.mxu0 0.0
      %1617 = vmatpush1.msra.mxu0 0.0
      %1618 = vmatprep.subr.mxu0 0.0
      %1619 = vmatpush1.msra.mxu0 0.0
      %1620 = vmatprep.subr.mxu0 0.0
      %1621 = vmatpush1.msra.mxu0 0.0
      %1622 = vmatprep.mubr.f32.mxu0 0.0
      %1623 = vmatmul.mubr.f32.gmra.mrb[0].mxu0 %v901
      %v1624 = vpop.f32.mrb[0].mxu0
      %v1625 = vadd.f32 %v1480, %v1624
      %v1626 = vpop.f32.mrb[0].mxu0
      %1627 = vmatprep.mubr.f32.mxu0 0.0
      %1628 = vmatmul.mubr.f32.gmra.mrb[0].mxu0 %v903
      %v1629 = vpop.f32.mrb[0].mxu0
      %v1630 = vadd.f32 %v1485, %v1629
      %v1631 = vpop.f32.mrb[0].mxu0
      %1632 = vmatprep.mubr.f32.mxu0 0.0
      %1633 = vmatmul.mubr.f32.gmra.mrb[0].mxu0 %v905
      %v1634 = vpop.f32.mrb[0].mxu0
      %v1635 = vadd.f32 %v1490, %v1634
      %v1636 = vpop.f32.mrb[0].mxu0
      %1637 = vmatprep.mubr.f32.mxu0 0.0
      %1638 = vmatmul.mubr.f32.gmra.mrb[0].mxu0 %v907
      %v1639 = vpop.f32.mrb[0].mxu0
      %v1640 = vadd.f32 %v1495, %v1639
      %v1641 = vpop.f32.mrb[0].mxu0
      %1642 = vmatprep.mubr.f32.mxu0 0.0
      %1643 = vmatmul.mubr.f32.gmra.mrb[0].mxu0 %v909
      %v1644 = vpop.f32.mrb[0].mxu0
      %v1645 = vadd.f32 %v1500, %v1644
      %v1646 = vpop.f32.mrb[0].mxu0
      %1647 = vmatprep.mubr.f32.mxu0 0.0
      %1648 = vmatmul.mubr.f32.gmra.mrb[0].mxu0 %v911
      %v1649 = vpop.f32.mrb[0].mxu0
      %v1650 = vadd.f32 %v1505, %v1649
      %v1651 = vpop.f32.mrb[0].mxu0
      %1652 = vmatprep.mubr.f32.mxu0 0.0
      %1653 = vmatmul.mubr.f32.gmra.mrb[0].mxu0 %v913
      %v1654 = vpop.f32.mrb[0].mxu0
      %v1655 = vadd.f32 %v1510, %v1654
      %v1656 = vpop.f32.mrb[0].mxu0
      %1657 = vmatprep.mubr.f32.mxu0 0.0
      %1658 = vmatmul.mubr.f32.gmra.mrb[0].mxu0 %v915
      %v1659 = vpop.f32.mrb[0].mxu0
      %v1660 = vadd.f32 %v1515, %v1659
      %v1661 = vpop.f32.mrb[0].mxu0
      %1662 = vmatprep.mubr.f32.mxu0 0.0
      %1663 = vmatmul.mubr.f32.gmra.mrb[0].mxu0 %v917
      %v1664 = vpop.f32.mrb[0].mxu0
      %v1665 = vadd.f32 %v1520, %v1664
      %v1666 = vpop.f32.mrb[0].mxu0
      %1667 = vmatprep.mubr.f32.mxu0 0.0
      %1668 = vmatmul.mubr.f32.gmra.mrb[0].mxu0 %v919
      %v1669 = vpop.f32.mrb[0].mxu0
      %v1670 = vadd.f32 %v1525, %v1669
      %v1671 = vpop.f32.mrb[0].mxu0
      %1672 = vmatprep.mubr.f32.mxu0 0.0
      %1673 = vmatmul.mubr.f32.gmra.mrb[0].mxu0 %v921
      %v1674 = vpop.f32.mrb[0].mxu0
      %v1675 = vadd.f32 %v1530, %v1674
      %v1676 = vpop.f32.mrb[0].mxu0
      %1677 = vmatprep.mubr.f32.mxu0 0.0
      %1678 = vmatmul.mubr.f32.gmra.mrb[0].mxu0 %v923
      %v1679 = vpop.f32.mrb[0].mxu0
      %v1680 = vadd.f32 %v1535, %v1679
      %v1681 = vpop.f32.mrb[0].mxu0
      %1682 = vmatprep.mubr.f32.mxu0 0.0
      %1683 = vmatmul.mubr.f32.gmra.mrb[0].mxu0 %v925
      %v1684 = vpop.f32.mrb[0].mxu0
      %v1685 = vadd.f32 %v1540, %v1684
      %v1686 = vpop.f32.mrb[0].mxu0
      %1687 = vmatprep.mubr.f32.mxu0 0.0
      %1688 = vmatmul.mubr.f32.gmra.mrb[0].mxu0 %v927
      %v1689 = vpop.f32.mrb[0].mxu0
      %v1690 = vadd.f32 %v1545, %v1689
      %v1691 = vpop.f32.mrb[0].mxu0
      %1692 = vmatprep.mubr.f32.mxu0 0.0
      %1693 = vmatmul.mubr.f32.gmra.mrb[0].mxu0 %v929
      %v1694 = vpop.f32.mrb[0].mxu0
      %v1695 = vadd.f32 %v1550, %v1694
      %v1696 = vpop.f32.mrb[0].mxu0
      %1697 = vmatprep.mubr.f32.mxu0 0.0
      %1698 = vmatmul.mubr.f32.gmra.mrb[0].mxu0 %v931
      %v1699 = vpop.f32.mrb[0].mxu0
      %v1700 = vadd.f32 %v1555, %v1699
      %v1701 = vpop.f32.mrb[0].mxu0
      %1702 = vdwg.mxu0
      %1703 = vrot.lane.b32.xlu0 %v353, 96
      %v1704 = vpop.permute.xlu0 %1703
      %1705 = vrot.lane.b32.xlu0 %v359, 96
      %v1706 = vpop.permute.xlu0 %1705
      %1707 = vrot.lane.b32.xlu0 %v365, 96
      %v1708 = vpop.permute.xlu0 %1707
      %1709 = vrot.lane.b32.xlu0 %v371, 96
      %v1710 = vpop.permute.xlu0 %1709
      %1711 = vrot.lane.b32.xlu0 %v377, 96
      %v1712 = vpop.permute.xlu0 %1711
      %1713 = vrot.lane.b32.xlu0 %v383, 96
      %v1714 = vpop.permute.xlu0 %1713
      %1715 = vrot.lane.b32.xlu0 %v389, 96
      %v1716 = vpop.permute.xlu0 %1715
      %1717 = vrot.lane.b32.xlu0 %v395, 96
      %v1718 = vpop.permute.xlu0 %1717
      %1719 = vrot.lane.b32.xlu0 %v401, 96
      %v1720 = vpop.permute.xlu0 %1719
      %1721 = vrot.lane.b32.xlu0 %v407, 96
      %v1722 = vpop.permute.xlu0 %1721
      %1723 = vrot.lane.b32.xlu0 %v413, 96
      %v1724 = vpop.permute.xlu0 %1723
      %1725 = vrot.lane.b32.xlu0 %v419, 96
      %v1726 = vpop.permute.xlu0 %1725
      %1727 = vrot.lane.b32.xlu0 %v425, 96
      %v1728 = vpop.permute.xlu0 %1727
      %1729 = vrot.lane.b32.xlu0 %v431, 96
      %v1730 = vpop.permute.xlu0 %1729
      %1731 = vrot.lane.b32.xlu0 %v437, 96
      %v1732 = vpop.permute.xlu0 %1731
      %1733 = vrot.lane.b32.xlu0 %v443, 96
      %v1734 = vpop.permute.xlu0 %1733
      %1735 = vrot.lane.b32.xlu0 %v353, 32
      %v1736 = vpop.permute.xlu0 %1735
      %1737 = vrot.lane.b32.xlu0 %v359, 32
      %v1738 = vpop.permute.xlu0 %1737
      %1739 = vrot.lane.b32.xlu0 %v365, 32
      %v1740 = vpop.permute.xlu0 %1739
      %1741 = vrot.lane.b32.xlu0 %v371, 32
      %v1742 = vpop.permute.xlu0 %1741
      %1743 = vrot.lane.b32.xlu0 %v377, 32
      %v1744 = vpop.permute.xlu0 %1743
      %1745 = vrot.lane.b32.xlu0 %v383, 32
      %v1746 = vpop.permute.xlu0 %1745
      %1747 = vrot.lane.b32.xlu0 %v389, 32
      %v1748 = vpop.permute.xlu0 %1747
      %1749 = vrot.lane.b32.xlu0 %v395, 32
      %v1750 = vpop.permute.xlu0 %1749
      %1751 = vrot.lane.b32.xlu0 %v401, 32
      %v1752 = vpop.permute.xlu0 %1751
      %1753 = vrot.lane.b32.xlu0 %v407, 32
      %v1754 = vpop.permute.xlu0 %1753
      %1755 = vrot.lane.b32.xlu0 %v413, 32
      %v1756 = vpop.permute.xlu0 %1755
      %1757 = vrot.lane.b32.xlu0 %v419, 32
      %v1758 = vpop.permute.xlu0 %1757
      %1759 = vrot.lane.b32.xlu0 %v425, 32
      %v1760 = vpop.permute.xlu0 %1759
      %1761 = vrot.lane.b32.xlu0 %v431, 32
      %v1762 = vpop.permute.xlu0 %1761
      %1763 = vrot.lane.b32.xlu0 %v437, 32
      %v1764 = vpop.permute.xlu0 %1763
      %1765 = vrot.lane.b32.xlu0 %v443, 32
      %v1766 = vpop.permute.xlu0 %1765
      %v1767 = vsel %vm578, %v1704, 0
      %v1769 = vsel %vm578, %v1706, 0
      %v1771 = vsel %vm578, %v1708, 0
      %v1773 = vsel %vm578, %v1710, 0
      %v1775 = vsel %vm578, %v1712, 0
      %v1777 = vsel %vm578, %v1714, 0
      %v1779 = vsel %vm578, %v1716, 0
      %v1781 = vsel %vm578, %v1718, 0
      %v1783 = vsel %vm578, %v1720, 0
      %v1785 = vsel %vm578, %v1722, 0
      %v1787 = vsel %vm578, %v1724, 0
      %v1789 = vsel %vm578, %v1726, 0
      %v1791 = vsel %vm578, %v1728, 0
      %v1793 = vsel %vm578, %v1730, 0
      %v1795 = vsel %vm578, %v1732, 0
      %v1797 = vsel %vm578, %v1734, 0
      %v1799 = vsel %vm578, %v1736, 0
      %v1801 = vsel %vm578, %v1738, 0
      %v1803 = vsel %vm578, %v1740, 0
      %v1805 = vsel %vm578, %v1742, 0
      %v1807 = vsel %vm578, %v1744, 0
      %v1809 = vsel %vm578, %v1746, 0
      %v1811 = vsel %vm578, %v1748, 0
      %v1813 = vsel %vm578, %v1750, 0
      %v1815 = vsel %vm578, %v1752, 0
      %v1817 = vsel %vm578, %v1754, 0
      %v1819 = vsel %vm578, %v1756, 0
      %v1821 = vsel %vm578, %v1758, 0
      %v1823 = vsel %vm578, %v1760, 0
      %v1825 = vsel %vm578, %v1762, 0
      %v1827 = vsel %vm578, %v1764, 0
      %v1829 = vsel %vm578, %v1766, 0
      %1831 = vmatprep.subr.mxu0 0.0
      %1832 = vmatpush1.xpose.msra.mxu0 %v1799
      %1833 = vmatprep.subr.mxu0 0.0
      %1834 = vmatpush1.xpose.msra.mxu0 %v1801
      %1835 = vmatprep.subr.mxu0 0.0
      %1836 = vmatpush1.xpose.msra.mxu0 %v1803
      %1837 = vmatprep.subr.mxu0 0.0
      %1838 = vmatpush1.xpose.msra.mxu0 %v1805
      %1839 = vmatprep.subr.mxu0 0.0
      %1840 = vmatpush1.xpose.msra.mxu0 %v1807
      %1841 = vmatprep.subr.mxu0 0.0
      %1842 = vmatpush1.xpose.msra.mxu0 %v1809
      %1843 = vmatprep.subr.mxu0 0.0
      %1844 = vmatpush1.xpose.msra.mxu0 %v1811
      %1845 = vmatprep.subr.mxu0 0.0
      %1846 = vmatpush1.xpose.msra.mxu0 %v1813
      %1847 = vmatprep.subr.mxu0 0.0
      %1848 = vmatpush1.xpose.msra.mxu0 %v1815
      %1849 = vmatprep.subr.mxu0 0.0
      %1850 = vmatpush1.xpose.msra.mxu0 %v1817
      %1851 = vmatprep.subr.mxu0 0.0
      %1852 = vmatpush1.xpose.msra.mxu0 %v1819
      %1853 = vmatprep.subr.mxu0 0.0
      %1854 = vmatpush1.xpose.msra.mxu0 %v1821
      %1855 = vmatprep.subr.mxu0 0.0
      %1856 = vmatpush1.xpose.msra.mxu0 %v1823
      %1857 = vmatprep.subr.mxu0 0.0
      %1858 = vmatpush1.xpose.msra.mxu0 %v1825
      %1859 = vmatprep.subr.mxu0 0.0
      %1860 = vmatpush1.xpose.msra.mxu0 %v1827
      %1861 = vmatprep.subr.mxu0 0.0
      %1862 = vmatpush1.xpose.msra.mxu0 %v1829
      %1863 = vmatprep.subr.mxu0 0.0
      %1864 = vmatpush1.xpose.msra.mxu0 0.0
      %1865 = vmatprep.subr.mxu0 0.0
      %1866 = vmatpush1.xpose.msra.mxu0 0.0
      %1867 = vmatprep.subr.mxu0 0.0
      %1868 = vmatpush1.xpose.msra.mxu0 0.0
      %1869 = vmatprep.subr.mxu0 0.0
      %1870 = vmatpush1.xpose.msra.mxu0 0.0
      %1871 = vmatprep.subr.mxu0 0.0
      %1872 = vmatpush1.xpose.msra.mxu0 0.0
      %1873 = vmatprep.subr.mxu0 0.0
      %1874 = vmatpush1.xpose.msra.mxu0 0.0
      %1875 = vmatprep.subr.mxu0 0.0
      %1876 = vmatpush1.xpose.msra.mxu0 0.0
      %1877 = vmatprep.subr.mxu0 0.0
      %1878 = vmatpush1.xpose.msra.mxu0 0.0
      %1879 = vmatprep.subr.mxu0 0.0
      %1880 = vmatpush1.xpose.msra.mxu0 0.0
      %1881 = vmatprep.subr.mxu0 0.0
      %1882 = vmatpush1.xpose.msra.mxu0 0.0
      %1883 = vmatprep.subr.mxu0 0.0
      %1884 = vmatpush1.xpose.msra.mxu0 0.0
      %1885 = vmatprep.subr.mxu0 0.0
      %1886 = vmatpush1.xpose.msra.mxu0 0.0
      %1887 = vmatprep.subr.mxu0 0.0
      %1888 = vmatpush1.xpose.msra.mxu0 0.0
      %1889 = vmatprep.subr.mxu0 0.0
      %1890 = vmatpush1.xpose.msra.mxu0 0.0
      %1891 = vmatprep.subr.mxu0 0.0
      %1892 = vmatpush1.xpose.msra.mxu0 0.0
      %1893 = vmatprep.subr.mxu0 0.0
      %1894 = vmatpush1.xpose.msra.mxu0 0.0
      %1895 = vmatprep.mubr.f32.mxu0 0.0
      %1896 = vmatmul.mubr.f32.gmra.mrb[0].mxu0 %v1767
      %v1897 = vpop.f32.mrb[0].mxu0
      %v1898 = vadd.f32 %v514, %v1897
      %v1899 = vpop.f32.mrb[0].mxu0
      %1900 = vmatprep.mubr.f32.mxu0 0.0
      %1901 = vmatmul.mubr.f32.gmra.mrb[0].mxu0 %v1769
      %v1902 = vpop.f32.mrb[0].mxu0
      %v1903 = vadd.f32 %v515, %v1902
      %v1904 = vpop.f32.mrb[0].mxu0
      %1905 = vmatprep.mubr.f32.mxu0 0.0
      %1906 = vmatmul.mubr.f32.gmra.mrb[0].mxu0 %v1771
      %v1907 = vpop.f32.mrb[0].mxu0
      %v1908 = vadd.f32 %v516, %v1907
      %v1909 = vpop.f32.mrb[0].mxu0
      %1910 = vmatprep.mubr.f32.mxu0 0.0
      %1911 = vmatmul.mubr.f32.gmra.mrb[0].mxu0 %v1773
      %v1912 = vpop.f32.mrb[0].mxu0
      %v1913 = vadd.f32 %v517, %v1912
      %v1914 = vpop.f32.mrb[0].mxu0
      %1915 = vmatprep.mubr.f32.mxu0 0.0
      %1916 = vmatmul.mubr.f32.gmra.mrb[0].mxu0 %v1775
      %v1917 = vpop.f32.mrb[0].mxu0
      %v1918 = vadd.f32 %v518, %v1917
      %v1919 = vpop.f32.mrb[0].mxu0
      %1920 = vmatprep.mubr.f32.mxu0 0.0
      %1921 = vmatmul.mubr.f32.gmra.mrb[0].mxu0 %v1777
      %v1922 = vpop.f32.mrb[0].mxu0
      %v1923 = vadd.f32 %v519, %v1922
      %v1924 = vpop.f32.mrb[0].mxu0
      %1925 = vmatprep.mubr.f32.mxu0 0.0
      %1926 = vmatmul.mubr.f32.gmra.mrb[0].mxu0 %v1779
      %v1927 = vpop.f32.mrb[0].mxu0
      %v1928 = vadd.f32 %v520, %v1927
      %v1929 = vpop.f32.mrb[0].mxu0
      %1930 = vmatprep.mubr.f32.mxu0 0.0
      %1931 = vmatmul.mubr.f32.gmra.mrb[0].mxu0 %v1781
      %v1932 = vpop.f32.mrb[0].mxu0
      %v1933 = vadd.f32 %v521, %v1932
      %v1934 = vpop.f32.mrb[0].mxu0
      %1935 = vmatprep.mubr.f32.mxu0 0.0
      %1936 = vmatmul.mubr.f32.gmra.mrb[0].mxu0 %v1783
      %v1937 = vpop.f32.mrb[0].mxu0
      %v1938 = vadd.f32 %v522, %v1937
      %v1939 = vpop.f32.mrb[0].mxu0
      %1940 = vmatprep.mubr.f32.mxu0 0.0
      %1941 = vmatmul.mubr.f32.gmra.mrb[0].mxu0 %v1785
      %v1942 = vpop.f32.mrb[0].mxu0
      %v1943 = vadd.f32 %v523, %v1942
      %v1944 = vpop.f32.mrb[0].mxu0
      %1945 = vmatprep.mubr.f32.mxu0 0.0
      %1946 = vmatmul.mubr.f32.gmra.mrb[0].mxu0 %v1787
      %v1947 = vpop.f32.mrb[0].mxu0
      %v1948 = vadd.f32 %v524, %v1947
      %v1949 = vpop.f32.mrb[0].mxu0
      %1950 = vmatprep.mubr.f32.mxu0 0.0
      %1951 = vmatmul.mubr.f32.gmra.mrb[0].mxu0 %v1789
      %v1952 = vpop.f32.mrb[0].mxu0
      %v1953 = vadd.f32 %v525, %v1952
      %v1954 = vpop.f32.mrb[0].mxu0
      %1955 = vmatprep.mubr.f32.mxu0 0.0
      %1956 = vmatmul.mubr.f32.gmra.mrb[0].mxu0 %v1791
      %v1957 = vpop.f32.mrb[0].mxu0
      %v1958 = vadd.f32 %v526, %v1957
      %v1959 = vpop.f32.mrb[0].mxu0
      %1960 = vmatprep.mubr.f32.mxu0 0.0
      %1961 = vmatmul.mubr.f32.gmra.mrb[0].mxu0 %v1793
      %v1962 = vpop.f32.mrb[0].mxu0
      %v1963 = vadd.f32 %v527, %v1962
      %v1964 = vpop.f32.mrb[0].mxu0
      %1965 = vmatprep.mubr.f32.mxu0 0.0
      %1966 = vmatmul.mubr.f32.gmra.mrb[0].mxu0 %v1795
      %v1967 = vpop.f32.mrb[0].mxu0
      %v1968 = vadd.f32 %v528, %v1967
      %v1969 = vpop.f32.mrb[0].mxu0
      %1970 = vmatprep.mubr.f32.mxu0 0.0
      %1971 = vmatmul.mubr.f32.gmra.mrb[0].mxu0 %v1797
      %v1972 = vpop.f32.mrb[0].mxu0
      %v1973 = vadd.f32 %v529, %v1972
      %v1974 = vpop.f32.mrb[0].mxu0
      %1975 = vdwg.mxu0
      %1976 = vmax.xlane.f32.xlu0 %v1898
      %v1977 = vpop.xlane.xlu0 %1976
      %1978 = vmax.xlane.f32.xlu0 %v1903
      %v1979 = vpop.xlane.xlu0 %1978
      %1980 = vmax.xlane.f32.xlu0 %v1908
      %v1981 = vpop.xlane.xlu0 %1980
      %1982 = vmax.xlane.f32.xlu0 %v1913
      %v1983 = vpop.xlane.xlu0 %1982
      %1984 = vmax.xlane.f32.xlu0 %v1918
      %v1985 = vpop.xlane.xlu0 %1984
      %1986 = vmax.xlane.f32.xlu0 %v1923
      %v1987 = vpop.xlane.xlu0 %1986
      %1988 = vmax.xlane.f32.xlu0 %v1928
      %v1989 = vpop.xlane.xlu0 %1988
      %1990 = vmax.xlane.f32.xlu0 %v1933
      %v1991 = vpop.xlane.xlu0 %1990
      %1992 = vmax.xlane.f32.xlu0 %v1938
      %v1993 = vpop.xlane.xlu0 %1992
      %1994 = vmax.xlane.f32.xlu0 %v1943
      %v1995 = vpop.xlane.xlu0 %1994
      %1996 = vmax.xlane.f32.xlu0 %v1948
      %v1997 = vpop.xlane.xlu0 %1996
      %1998 = vmax.xlane.f32.xlu0 %v1953
      %v1999 = vpop.xlane.xlu0 %1998
      %2000 = vmax.xlane.f32.xlu0 %v1958
      %v2001 = vpop.xlane.xlu0 %2000
      %2002 = vmax.xlane.f32.xlu0 %v1963
      %v2003 = vpop.xlane.xlu0 %2002
      %2004 = vmax.xlane.f32.xlu0 %v1968
      %v2005 = vpop.xlane.xlu0 %2004
      %2006 = vmax.xlane.f32.xlu0 %v1973
      %v2007 = vpop.xlane.xlu0 %2006
      %v2008 = vsub.f32 %v1898, %v1977
      %v2009 = vsub.f32 %v1903, %v1979
      %v2010 = vsub.f32 %v1908, %v1981
      %v2011 = vsub.f32 %v1913, %v1983
      %v2012 = vsub.f32 %v1918, %v1985
      %v2013 = vsub.f32 %v1923, %v1987
      %v2014 = vsub.f32 %v1928, %v1989
      %v2015 = vsub.f32 %v1933, %v1991
      %v2016 = vsub.f32 %v1938, %v1993
      %v2017 = vsub.f32 %v1943, %v1995
      %v2018 = vsub.f32 %v1948, %v1997
      %v2019 = vsub.f32 %v1953, %v1999
      %v2020 = vsub.f32 %v1958, %v2001
      %v2021 = vsub.f32 %v1963, %v2003
      %v2022 = vsub.f32 %v1968, %v2005
      %v2023 = vsub.f32 %v1973, %v2007
      %v2024 = vmul.f32 %v2008, 1.442695
      %v2025 = vpow.pop %v2024
      %v2026 = vmul.f32 %v2009, 1.442695
      %v2027 = vpow.pop %v2026
      %v2028 = vmul.f32 %v2010, 1.442695
      %v2029 = vpow.pop %v2028
      %v2030 = vmul.f32 %v2011, 1.442695
      %v2031 = vpow.pop %v2030
      %v2032 = vmul.f32 %v2012, 1.442695
      %v2033 = vpow.pop %v2032
      %v2034 = vmul.f32 %v2013, 1.442695
      %v2035 = vpow.pop %v2034
      %v2036 = vmul.f32 %v2014, 1.442695
      %v2037 = vpow.pop %v2036
      %v2038 = vmul.f32 %v2015, 1.442695
      %v2039 = vpow.pop %v2038
      %v2040 = vmul.f32 %v2016, 1.442695
      %v2041 = vpow.pop %v2040
      %v2042 = vmul.f32 %v2017, 1.442695
      %v2043 = vpow.pop %v2042
      %v2044 = vmul.f32 %v2018, 1.442695
      %v2045 = vpow.pop %v2044
      %v2046 = vmul.f32 %v2019, 1.442695
      %v2047 = vpow.pop %v2046
      %v2048 = vmul.f32 %v2020, 1.442695
      %v2049 = vpow.pop %v2048
      %v2050 = vmul.f32 %v2021, 1.442695
      %v2051 = vpow.pop %v2050
      %v2052 = vmul.f32 %v2022, 1.442695
      %v2053 = vpow.pop %v2052
      %v2054 = vmul.f32 %v2023, 1.442695
      %v2055 = vpow.pop %v2054
      %2056 = vadd.xlane.f32.xlu0 %v2025
      %v2057 = vpop.xlane.xlu0 %2056
      %2058 = vadd.xlane.f32.xlu0 %v2027
      %v2059 = vpop.xlane.xlu0 %2058
      %2060 = vadd.xlane.f32.xlu0 %v2029
      %v2061 = vpop.xlane.xlu0 %2060
      %2062 = vadd.xlane.f32.xlu0 %v2031
      %v2063 = vpop.xlane.xlu0 %2062
      %2064 = vadd.xlane.f32.xlu0 %v2033
      %v2065 = vpop.xlane.xlu0 %2064
      %2066 = vadd.xlane.f32.xlu0 %v2035
      %v2067 = vpop.xlane.xlu0 %2066
      %2068 = vadd.xlane.f32.xlu0 %v2037
      %v2069 = vpop.xlane.xlu0 %2068
      %2070 = vadd.xlane.f32.xlu0 %v2039
      %v2071 = vpop.xlane.xlu0 %2070
      %2072 = vadd.xlane.f32.xlu0 %v2041
      %v2073 = vpop.xlane.xlu0 %2072
      %2074 = vadd.xlane.f32.xlu0 %v2043
      %v2075 = vpop.xlane.xlu0 %2074
      %2076 = vadd.xlane.f32.xlu0 %v2045
      %v2077 = vpop.xlane.xlu0 %2076
      %2078 = vadd.xlane.f32.xlu0 %v2047
      %v2079 = vpop.xlane.xlu0 %2078
      %2080 = vadd.xlane.f32.xlu0 %v2049
      %v2081 = vpop.xlane.xlu0 %2080
      %2082 = vadd.xlane.f32.xlu0 %v2051
      %v2083 = vpop.xlane.xlu0 %2082
      %2084 = vadd.xlane.f32.xlu0 %v2053
      %v2085 = vpop.xlane.xlu0 %2084
      %2086 = vadd.xlane.f32.xlu0 %v2055
      %v2087 = vpop.xlane.xlu0 %2086
      %v2088 = vrcp.pop %v2057
      %v2089 = vmul.f32 %v2025, %v2088
      %v2090 = vrcp.pop %v2059
      %v2091 = vmul.f32 %v2027, %v2090
      %v2092 = vrcp.pop %v2061
      %v2093 = vmul.f32 %v2029, %v2092
      %v2094 = vrcp.pop %v2063
      %v2095 = vmul.f32 %v2031, %v2094
      %v2096 = vrcp.pop %v2065
      %v2097 = vmul.f32 %v2033, %v2096
      %v2098 = vrcp.pop %v2067
      %v2099 = vmul.f32 %v2035, %v2098
      %v2100 = vrcp.pop %v2069
      %v2101 = vmul.f32 %v2037, %v2100
      %v2102 = vrcp.pop %v2071
      %v2103 = vmul.f32 %v2039, %v2102
      %v2104 = vrcp.pop %v2073
      %v2105 = vmul.f32 %v2041, %v2104
      %v2106 = vrcp.pop %v2075
      %v2107 = vmul.f32 %v2043, %v2106
      %v2108 = vrcp.pop %v2077
      %v2109 = vmul.f32 %v2045, %v2108
      %v2110 = vrcp.pop %v2079
      %v2111 = vmul.f32 %v2047, %v2110
      %v2112 = vrcp.pop %v2081
      %v2113 = vmul.f32 %v2049, %v2112
      %v2114 = vrcp.pop %v2083
      %v2115 = vmul.f32 %v2051, %v2114
      %v2116 = vrcp.pop %v2085
      %v2117 = vmul.f32 %v2053, %v2116
      %v2118 = vrcp.pop %v2087
      %v2119 = vmul.f32 %v2055, %v2118
      %2120 = vrot.lane.b32.xlu0 %v355, 112
      %v2121 = vpop.permute.xlu0 %2120
      %2122 = vrot.lane.b32.xlu0 %v361, 112
      %v2123 = vpop.permute.xlu0 %2122
      %2124 = vrot.lane.b32.xlu0 %v367, 112
      %v2125 = vpop.permute.xlu0 %2124
      %2126 = vrot.lane.b32.xlu0 %v373, 112
      %v2127 = vpop.permute.xlu0 %2126
      %2128 = vrot.lane.b32.xlu0 %v379, 112
      %v2129 = vpop.permute.xlu0 %2128
      %2130 = vrot.lane.b32.xlu0 %v385, 112
      %v2131 = vpop.permute.xlu0 %2130
      %2132 = vrot.lane.b32.xlu0 %v391, 112
      %v2133 = vpop.permute.xlu0 %2132
      %2134 = vrot.lane.b32.xlu0 %v397, 112
      %v2135 = vpop.permute.xlu0 %2134
      %2136 = vrot.lane.b32.xlu0 %v403, 112
      %v2137 = vpop.permute.xlu0 %2136
      %2138 = vrot.lane.b32.xlu0 %v409, 112
      %v2139 = vpop.permute.xlu0 %2138
      %2140 = vrot.lane.b32.xlu0 %v415, 112
      %v2141 = vpop.permute.xlu0 %2140
      %2142 = vrot.lane.b32.xlu0 %v421, 112
      %v2143 = vpop.permute.xlu0 %2142
      %2144 = vrot.lane.b32.xlu0 %v427, 112
      %v2145 = vpop.permute.xlu0 %2144
      %2146 = vrot.lane.b32.xlu0 %v433, 112
      %v2147 = vpop.permute.xlu0 %2146
      %2148 = vrot.lane.b32.xlu0 %v439, 112
      %v2149 = vpop.permute.xlu0 %2148
      %2150 = vrot.lane.b32.xlu0 %v445, 112
      %v2151 = vpop.permute.xlu0 %2150
      %2168 = vmatprep.subr.mxu0 0.0
      %2169 = vmatpush1.msra.mxu0 %v2121
      %2170 = vmatprep.subr.mxu0 0.0
      %2171 = vmatpush1.msra.mxu0 %v2123
      %2172 = vmatprep.subr.mxu0 0.0
      %2173 = vmatpush1.msra.mxu0 %v2125
      %2174 = vmatprep.subr.mxu0 0.0
      %2175 = vmatpush1.msra.mxu0 %v2127
      %2176 = vmatprep.subr.mxu0 0.0
      %2177 = vmatpush1.msra.mxu0 %v2129
      %2178 = vmatprep.subr.mxu0 0.0
      %2179 = vmatpush1.msra.mxu0 %v2131
      %2180 = vmatprep.subr.mxu0 0.0
      %2181 = vmatpush1.msra.mxu0 %v2133
      %2182 = vmatprep.subr.mxu0 0.0
      %2183 = vmatpush1.msra.mxu0 %v2135
      %2184 = vmatprep.subr.mxu0 0.0
      %2185 = vmatpush1.msra.mxu0 %v2137
      %2186 = vmatprep.subr.mxu0 0.0
      %2187 = vmatpush1.msra.mxu0 %v2139
      %2188 = vmatprep.subr.mxu0 0.0
      %2189 = vmatpush1.msra.mxu0 %v2141
      %2190 = vmatprep.subr.mxu0 0.0
      %2191 = vmatpush1.msra.mxu0 %v2143
      %2192 = vmatprep.subr.mxu0 0.0
      %2193 = vmatpush1.msra.mxu0 %v2145
      %2194 = vmatprep.subr.mxu0 0.0
      %2195 = vmatpush1.msra.mxu0 %v2147
      %2196 = vmatprep.subr.mxu0 0.0
      %2197 = vmatpush1.msra.mxu0 %v2149
      %2198 = vmatprep.subr.mxu0 0.0
      %2199 = vmatpush1.msra.mxu0 %v2151
      %2200 = vmatprep.subr.mxu0 0.0
      %2201 = vmatpush1.msra.mxu0 0.0
      %2202 = vmatprep.subr.mxu0 0.0
      %2203 = vmatpush1.msra.mxu0 0.0
      %2204 = vmatprep.subr.mxu0 0.0
      %2205 = vmatpush1.msra.mxu0 0.0
      %2206 = vmatprep.subr.mxu0 0.0
      %2207 = vmatpush1.msra.mxu0 0.0
      %2208 = vmatprep.subr.mxu0 0.0
      %2209 = vmatpush1.msra.mxu0 0.0
      %2210 = vmatprep.subr.mxu0 0.0
      %2211 = vmatpush1.msra.mxu0 0.0
      %2212 = vmatprep.subr.mxu0 0.0
      %2213 = vmatpush1.msra.mxu0 0.0
      %2214 = vmatprep.subr.mxu0 0.0
      %2215 = vmatpush1.msra.mxu0 0.0
      %2216 = vmatprep.subr.mxu0 0.0
      %2217 = vmatpush1.msra.mxu0 0.0
      %2218 = vmatprep.subr.mxu0 0.0
      %2219 = vmatpush1.msra.mxu0 0.0
      %2220 = vmatprep.subr.mxu0 0.0
      %2221 = vmatpush1.msra.mxu0 0.0
      %2222 = vmatprep.subr.mxu0 0.0
      %2223 = vmatpush1.msra.mxu0 0.0
      %2224 = vmatprep.subr.mxu0 0.0
      %2225 = vmatpush1.msra.mxu0 0.0
      %2226 = vmatprep.subr.mxu0 0.0
      %2227 = vmatpush1.msra.mxu0 0.0
      %2228 = vmatprep.subr.mxu0 0.0
      %2229 = vmatpush1.msra.mxu0 0.0
      %2230 = vmatprep.subr.mxu0 0.0
      %2231 = vmatpush1.msra.mxu0 0.0
      %2232 = vmatprep.mubr.f32.mxu0 0.0
      %2233 = vmatmul.mubr.f32.gmra.mrb[0].mxu0 %v2089
      %v2234 = vpop.f32.mrb[0].mxu0
      %v2235 = vadd.f32 0.0, %v2234
      %v2236 = vpop.f32.mrb[0].mxu0
      %2237 = vmatprep.mubr.f32.mxu0 0.0
      %2238 = vmatmul.mubr.f32.gmra.mrb[0].mxu0 %v2091
      %v2239 = vpop.f32.mrb[0].mxu0
      %v2240 = vadd.f32 0.0, %v2239
      %v2241 = vpop.f32.mrb[0].mxu0
      %2242 = vmatprep.mubr.f32.mxu0 0.0
      %2243 = vmatmul.mubr.f32.gmra.mrb[0].mxu0 %v2093
      %v2244 = vpop.f32.mrb[0].mxu0
      %v2245 = vadd.f32 0.0, %v2244
      %v2246 = vpop.f32.mrb[0].mxu0
      %2247 = vmatprep.mubr.f32.mxu0 0.0
      %2248 = vmatmul.mubr.f32.gmra.mrb[0].mxu0 %v2095
      %v2249 = vpop.f32.mrb[0].mxu0
      %v2250 = vadd.f32 0.0, %v2249
      %v2251 = vpop.f32.mrb[0].mxu0
      %2252 = vmatprep.mubr.f32.mxu0 0.0
      %2253 = vmatmul.mubr.f32.gmra.mrb[0].mxu0 %v2097
      %v2254 = vpop.f32.mrb[0].mxu0
      %v2255 = vadd.f32 0.0, %v2254
      %v2256 = vpop.f32.mrb[0].mxu0
      %2257 = vmatprep.mubr.f32.mxu0 0.0
      %2258 = vmatmul.mubr.f32.gmra.mrb[0].mxu0 %v2099
      %v2259 = vpop.f32.mrb[0].mxu0
      %v2260 = vadd.f32 0.0, %v2259
      %v2261 = vpop.f32.mrb[0].mxu0
      %2262 = vmatprep.mubr.f32.mxu0 0.0
      %2263 = vmatmul.mubr.f32.gmra.mrb[0].mxu0 %v2101
      %v2264 = vpop.f32.mrb[0].mxu0
      %v2265 = vadd.f32 0.0, %v2264
      %v2266 = vpop.f32.mrb[0].mxu0
      %2267 = vmatprep.mubr.f32.mxu0 0.0
      %2268 = vmatmul.mubr.f32.gmra.mrb[0].mxu0 %v2103
      %v2269 = vpop.f32.mrb[0].mxu0
      %v2270 = vadd.f32 0.0, %v2269
      %v2271 = vpop.f32.mrb[0].mxu0
      %2272 = vmatprep.mubr.f32.mxu0 0.0
      %2273 = vmatmul.mubr.f32.gmra.mrb[0].mxu0 %v2105
      %v2274 = vpop.f32.mrb[0].mxu0
      %v2275 = vadd.f32 0.0, %v2274
      %v2276 = vpop.f32.mrb[0].mxu0
      %2277 = vmatprep.mubr.f32.mxu0 0.0
      %2278 = vmatmul.mubr.f32.gmra.mrb[0].mxu0 %v2107
      %v2279 = vpop.f32.mrb[0].mxu0
      %v2280 = vadd.f32 0.0, %v2279
      %v2281 = vpop.f32.mrb[0].mxu0
      %2282 = vmatprep.mubr.f32.mxu0 0.0
      %2283 = vmatmul.mubr.f32.gmra.mrb[0].mxu0 %v2109
      %v2284 = vpop.f32.mrb[0].mxu0
      %v2285 = vadd.f32 0.0, %v2284
      %v2286 = vpop.f32.mrb[0].mxu0
      %2287 = vmatprep.mubr.f32.mxu0 0.0
      %2288 = vmatmul.mubr.f32.gmra.mrb[0].mxu0 %v2111
      %v2289 = vpop.f32.mrb[0].mxu0
      %v2290 = vadd.f32 0.0, %v2289
      %v2291 = vpop.f32.mrb[0].mxu0
      %2292 = vmatprep.mubr.f32.mxu0 0.0
      %2293 = vmatmul.mubr.f32.gmra.mrb[0].mxu0 %v2113
      %v2294 = vpop.f32.mrb[0].mxu0
      %v2295 = vadd.f32 0.0, %v2294
      %v2296 = vpop.f32.mrb[0].mxu0
      %2297 = vmatprep.mubr.f32.mxu0 0.0
      %2298 = vmatmul.mubr.f32.gmra.mrb[0].mxu0 %v2115
      %v2299 = vpop.f32.mrb[0].mxu0
      %v2300 = vadd.f32 0.0, %v2299
      %v2301 = vpop.f32.mrb[0].mxu0
      %2302 = vmatprep.mubr.f32.mxu0 0.0
      %2303 = vmatmul.mubr.f32.gmra.mrb[0].mxu0 %v2117
      %v2304 = vpop.f32.mrb[0].mxu0
      %v2305 = vadd.f32 0.0, %v2304
      %v2306 = vpop.f32.mrb[0].mxu0
      %2307 = vmatprep.mubr.f32.mxu0 0.0
      %2308 = vmatmul.mubr.f32.gmra.mrb[0].mxu0 %v2119
      %v2309 = vpop.f32.mrb[0].mxu0
      %v2310 = vadd.f32 0.0, %v2309
      %v2311 = vpop.f32.mrb[0].mxu0
      %2312 = vdwg.mxu0
      %v2313 = vadd.f32 %v1625, %v2235
      %v2314 = vadd.f32 %v1630, %v2240
      %v2315 = vadd.f32 %v1635, %v2245
      %v2316 = vadd.f32 %v1640, %v2250
      %v2317 = vadd.f32 %v1645, %v2255
      %v2318 = vadd.f32 %v1650, %v2260
      %v2319 = vadd.f32 %v1655, %v2265
      %v2320 = vadd.f32 %v1660, %v2270
      %v2321 = vadd.f32 %v1665, %v2275
      %v2322 = vadd.f32 %v1670, %v2280
      %v2323 = vadd.f32 %v1675, %v2285
      %v2324 = vadd.f32 %v1680, %v2290
      %v2325 = vadd.f32 %v1685, %v2295
      %v2326 = vadd.f32 %v1690, %v2300
      %v2327 = vadd.f32 %v1695, %v2305
      %v2328 = vadd.f32 %v1700, %v2310
      %2329 = vrot.lane.b32.xlu0 %v353, 80
      %v2330 = vpop.permute.xlu0 %2329
      %2331 = vrot.lane.b32.xlu0 %v359, 80
      %v2332 = vpop.permute.xlu0 %2331
      %2333 = vrot.lane.b32.xlu0 %v365, 80
      %v2334 = vpop.permute.xlu0 %2333
      %2335 = vrot.lane.b32.xlu0 %v371, 80
      %v2336 = vpop.permute.xlu0 %2335
      %2337 = vrot.lane.b32.xlu0 %v377, 80
      %v2338 = vpop.permute.xlu0 %2337
      %2339 = vrot.lane.b32.xlu0 %v383, 80
      %v2340 = vpop.permute.xlu0 %2339
      %2341 = vrot.lane.b32.xlu0 %v389, 80
      %v2342 = vpop.permute.xlu0 %2341
      %2343 = vrot.lane.b32.xlu0 %v395, 80
      %v2344 = vpop.permute.xlu0 %2343
      %2345 = vrot.lane.b32.xlu0 %v401, 80
      %v2346 = vpop.permute.xlu0 %2345
      %2347 = vrot.lane.b32.xlu0 %v407, 80
      %v2348 = vpop.permute.xlu0 %2347
      %2349 = vrot.lane.b32.xlu0 %v413, 80
      %v2350 = vpop.permute.xlu0 %2349
      %2351 = vrot.lane.b32.xlu0 %v419, 80
      %v2352 = vpop.permute.xlu0 %2351
      %2353 = vrot.lane.b32.xlu0 %v425, 80
      %v2354 = vpop.permute.xlu0 %2353
      %2355 = vrot.lane.b32.xlu0 %v431, 80
      %v2356 = vpop.permute.xlu0 %2355
      %2357 = vrot.lane.b32.xlu0 %v437, 80
      %v2358 = vpop.permute.xlu0 %2357
      %2359 = vrot.lane.b32.xlu0 %v443, 80
      %v2360 = vpop.permute.xlu0 %2359
      %2361 = vrot.lane.b32.xlu0 %v353, 16
      %v2362 = vpop.permute.xlu0 %2361
      %2363 = vrot.lane.b32.xlu0 %v359, 16
      %v2364 = vpop.permute.xlu0 %2363
      %2365 = vrot.lane.b32.xlu0 %v365, 16
      %v2366 = vpop.permute.xlu0 %2365
      %2367 = vrot.lane.b32.xlu0 %v371, 16
      %v2368 = vpop.permute.xlu0 %2367
      %2369 = vrot.lane.b32.xlu0 %v377, 16
      %v2370 = vpop.permute.xlu0 %2369
      %2371 = vrot.lane.b32.xlu0 %v383, 16
      %v2372 = vpop.permute.xlu0 %2371
      %2373 = vrot.lane.b32.xlu0 %v389, 16
      %v2374 = vpop.permute.xlu0 %2373
      %2375 = vrot.lane.b32.xlu0 %v395, 16
      %v2376 = vpop.permute.xlu0 %2375
      %2377 = vrot.lane.b32.xlu0 %v401, 16
      %v2378 = vpop.permute.xlu0 %2377
      %2379 = vrot.lane.b32.xlu0 %v407, 16
      %v2380 = vpop.permute.xlu0 %2379
      %2381 = vrot.lane.b32.xlu0 %v413, 16
      %v2382 = vpop.permute.xlu0 %2381
      %2383 = vrot.lane.b32.xlu0 %v419, 16
      %v2384 = vpop.permute.xlu0 %2383
      %2385 = vrot.lane.b32.xlu0 %v425, 16
      %v2386 = vpop.permute.xlu0 %2385
      %2387 = vrot.lane.b32.xlu0 %v431, 16
      %v2388 = vpop.permute.xlu0 %2387
      %2389 = vrot.lane.b32.xlu0 %v437, 16
      %v2390 = vpop.permute.xlu0 %2389
      %2391 = vrot.lane.b32.xlu0 %v443, 16
      %v2392 = vpop.permute.xlu0 %2391
      %v2393 = vsel %vm578, %v2330, 0
      %v2395 = vsel %vm578, %v2332, 0
      %v2397 = vsel %vm578, %v2334, 0
      %v2399 = vsel %vm578, %v2336, 0
      %v2401 = vsel %vm578, %v2338, 0
      %v2403 = vsel %vm578, %v2340, 0
      %v2405 = vsel %vm578, %v2342, 0
      %v2407 = vsel %vm578, %v2344, 0
      %v2409 = vsel %vm578, %v2346, 0
      %v2411 = vsel %vm578, %v2348, 0
      %v2413 = vsel %vm578, %v2350, 0
      %v2415 = vsel %vm578, %v2352, 0
      %v2417 = vsel %vm578, %v2354, 0
      %v2419 = vsel %vm578, %v2356, 0
      %v2421 = vsel %vm578, %v2358, 0
      %v2423 = vsel %vm578, %v2360, 0
      %v2425 = vsel %vm578, %v2362, 0
      %v2427 = vsel %vm578, %v2364, 0
      %v2429 = vsel %vm578, %v2366, 0
      %v2431 = vsel %vm578, %v2368, 0
      %v2433 = vsel %vm578, %v2370, 0
      %v2435 = vsel %vm578, %v2372, 0
      %v2437 = vsel %vm578, %v2374, 0
      %v2439 = vsel %vm578, %v2376, 0
      %v2441 = vsel %vm578, %v2378, 0
      %v2443 = vsel %vm578, %v2380, 0
      %v2445 = vsel %vm578, %v2382, 0
      %v2447 = vsel %vm578, %v2384, 0
      %v2449 = vsel %vm578, %v2386, 0
      %v2451 = vsel %vm578, %v2388, 0
      %v2453 = vsel %vm578, %v2390, 0
      %v2455 = vsel %vm578, %v2392, 0
      %2457 = vmatprep.subr.mxu0 0.0
      %2458 = vmatpush1.xpose.msra.mxu0 %v2425
      %2459 = vmatprep.subr.mxu0 0.0
      %2460 = vmatpush1.xpose.msra.mxu0 %v2427
      %2461 = vmatprep.subr.mxu0 0.0
      %2462 = vmatpush1.xpose.msra.mxu0 %v2429
      %2463 = vmatprep.subr.mxu0 0.0
      %2464 = vmatpush1.xpose.msra.mxu0 %v2431
      %2465 = vmatprep.subr.mxu0 0.0
      %2466 = vmatpush1.xpose.msra.mxu0 %v2433
      %2467 = vmatprep.subr.mxu0 0.0
      %2468 = vmatpush1.xpose.msra.mxu0 %v2435
      %2469 = vmatprep.subr.mxu0 0.0
      %2470 = vmatpush1.xpose.msra.mxu0 %v2437
      %2471 = vmatprep.subr.mxu0 0.0
      %2472 = vmatpush1.xpose.msra.mxu0 %v2439
      %2473 = vmatprep.subr.mxu0 0.0
      %2474 = vmatpush1.xpose.msra.mxu0 %v2441
      %2475 = vmatprep.subr.mxu0 0.0
      %2476 = vmatpush1.xpose.msra.mxu0 %v2443
      %2477 = vmatprep.subr.mxu0 0.0
      %2478 = vmatpush1.xpose.msra.mxu0 %v2445
      %2479 = vmatprep.subr.mxu0 0.0
      %2480 = vmatpush1.xpose.msra.mxu0 %v2447
      %2481 = vmatprep.subr.mxu0 0.0
      %2482 = vmatpush1.xpose.msra.mxu0 %v2449
      %2483 = vmatprep.subr.mxu0 0.0
      %2484 = vmatpush1.xpose.msra.mxu0 %v2451
      %2485 = vmatprep.subr.mxu0 0.0
      %2486 = vmatpush1.xpose.msra.mxu0 %v2453
      %2487 = vmatprep.subr.mxu0 0.0
      %2488 = vmatpush1.xpose.msra.mxu0 %v2455
      %2489 = vmatprep.subr.mxu0 0.0
      %2490 = vmatpush1.xpose.msra.mxu0 0.0
      %2491 = vmatprep.subr.mxu0 0.0
      %2492 = vmatpush1.xpose.msra.mxu0 0.0
      %2493 = vmatprep.subr.mxu0 0.0
      %2494 = vmatpush1.xpose.msra.mxu0 0.0
      %2495 = vmatprep.subr.mxu0 0.0
      %2496 = vmatpush1.xpose.msra.mxu0 0.0
      %2497 = vmatprep.subr.mxu0 0.0
      %2498 = vmatpush1.xpose.msra.mxu0 0.0
      %2499 = vmatprep.subr.mxu0 0.0
      %2500 = vmatpush1.xpose.msra.mxu0 0.0
      %2501 = vmatprep.subr.mxu0 0.0
      %2502 = vmatpush1.xpose.msra.mxu0 0.0
      %2503 = vmatprep.subr.mxu0 0.0
      %2504 = vmatpush1.xpose.msra.mxu0 0.0
      %2505 = vmatprep.subr.mxu0 0.0
      %2506 = vmatpush1.xpose.msra.mxu0 0.0
      %2507 = vmatprep.subr.mxu0 0.0
      %2508 = vmatpush1.xpose.msra.mxu0 0.0
      %2509 = vmatprep.subr.mxu0 0.0
      %2510 = vmatpush1.xpose.msra.mxu0 0.0
      %2511 = vmatprep.subr.mxu0 0.0
      %2512 = vmatpush1.xpose.msra.mxu0 0.0
      %2513 = vmatprep.subr.mxu0 0.0
      %2514 = vmatpush1.xpose.msra.mxu0 0.0
      %2515 = vmatprep.subr.mxu0 0.0
      %2516 = vmatpush1.xpose.msra.mxu0 0.0
      %2517 = vmatprep.subr.mxu0 0.0
      %2518 = vmatpush1.xpose.msra.mxu0 0.0
      %2519 = vmatprep.subr.mxu0 0.0
      %2520 = vmatpush1.xpose.msra.mxu0 0.0
      %2521 = vmatprep.mubr.f32.mxu0 0.0
      %2522 = vmatmul.mubr.f32.gmra.mrb[0].mxu0 %v2393
      %v2523 = vpop.f32.mrb[0].mxu0
      %v2524 = vadd.f32 %v514, %v2523
      %v2525 = vpop.f32.mrb[0].mxu0
      %2526 = vmatprep.mubr.f32.mxu0 0.0
      %2527 = vmatmul.mubr.f32.gmra.mrb[0].mxu0 %v2395
      %v2528 = vpop.f32.mrb[0].mxu0
      %v2529 = vadd.f32 %v515, %v2528
      %v2530 = vpop.f32.mrb[0].mxu0
      %2531 = vmatprep.mubr.f32.mxu0 0.0
      %2532 = vmatmul.mubr.f32.gmra.mrb[0].mxu0 %v2397
      %v2533 = vpop.f32.mrb[0].mxu0
      %v2534 = vadd.f32 %v516, %v2533
      %v2535 = vpop.f32.mrb[0].mxu0
      %2536 = vmatprep.mubr.f32.mxu0 0.0
      %2537 = vmatmul.mubr.f32.gmra.mrb[0].mxu0 %v2399
      %v2538 = vpop.f32.mrb[0].mxu0
      %v2539 = vadd.f32 %v517, %v2538
      %v2540 = vpop.f32.mrb[0].mxu0
      %2541 = vmatprep.mubr.f32.mxu0 0.0
      %2542 = vmatmul.mubr.f32.gmra.mrb[0].mxu0 %v2401
      %v2543 = vpop.f32.mrb[0].mxu0
      %v2544 = vadd.f32 %v518, %v2543
      %v2545 = vpop.f32.mrb[0].mxu0
      %2546 = vmatprep.mubr.f32.mxu0 0.0
      %2547 = vmatmul.mubr.f32.gmra.mrb[0].mxu0 %v2403
      %v2548 = vpop.f32.mrb[0].mxu0
      %v2549 = vadd.f32 %v519, %v2548
      %v2550 = vpop.f32.mrb[0].mxu0
      %2551 = vmatprep.mubr.f32.mxu0 0.0
      %2552 = vmatmul.mubr.f32.gmra.mrb[0].mxu0 %v2405
      %v2553 = vpop.f32.mrb[0].mxu0
      %v2554 = vadd.f32 %v520, %v2553
      %v2555 = vpop.f32.mrb[0].mxu0
      %2556 = vmatprep.mubr.f32.mxu0 0.0
      %2557 = vmatmul.mubr.f32.gmra.mrb[0].mxu0 %v2407
      %v2558 = vpop.f32.mrb[0].mxu0
      %v2559 = vadd.f32 %v521, %v2558
      %v2560 = vpop.f32.mrb[0].mxu0
      %2561 = vmatprep.mubr.f32.mxu0 0.0
      %2562 = vmatmul.mubr.f32.gmra.mrb[0].mxu0 %v2409
      %v2563 = vpop.f32.mrb[0].mxu0
      %v2564 = vadd.f32 %v522, %v2563
      %v2565 = vpop.f32.mrb[0].mxu0
      %2566 = vmatprep.mubr.f32.mxu0 0.0
      %2567 = vmatmul.mubr.f32.gmra.mrb[0].mxu0 %v2411
      %v2568 = vpop.f32.mrb[0].mxu0
      %v2569 = vadd.f32 %v523, %v2568
      %v2570 = vpop.f32.mrb[0].mxu0
      %2571 = vmatprep.mubr.f32.mxu0 0.0
      %2572 = vmatmul.mubr.f32.gmra.mrb[0].mxu0 %v2413
      %v2573 = vpop.f32.mrb[0].mxu0
      %v2574 = vadd.f32 %v524, %v2573
      %v2575 = vpop.f32.mrb[0].mxu0
      %2576 = vmatprep.mubr.f32.mxu0 0.0
      %2577 = vmatmul.mubr.f32.gmra.mrb[0].mxu0 %v2415
      %v2578 = vpop.f32.mrb[0].mxu0
      %v2579 = vadd.f32 %v525, %v2578
      %v2580 = vpop.f32.mrb[0].mxu0
      %2581 = vmatprep.mubr.f32.mxu0 0.0
      %2582 = vmatmul.mubr.f32.gmra.mrb[0].mxu0 %v2417
      %v2583 = vpop.f32.mrb[0].mxu0
      %v2584 = vadd.f32 %v526, %v2583
      %v2585 = vpop.f32.mrb[0].mxu0
      %2586 = vmatprep.mubr.f32.mxu0 0.0
      %2587 = vmatmul.mubr.f32.gmra.mrb[0].mxu0 %v2419
      %v2588 = vpop.f32.mrb[0].mxu0
      %v2589 = vadd.f32 %v527, %v2588
      %v2590 = vpop.f32.mrb[0].mxu0
      %2591 = vmatprep.mubr.f32.mxu0 0.0
      %2592 = vmatmul.mubr.f32.gmra.mrb[0].mxu0 %v2421
      %v2593 = vpop.f32.mrb[0].mxu0
      %v2594 = vadd.f32 %v528, %v2593
      %v2595 = vpop.f32.mrb[0].mxu0
      %2596 = vmatprep.mubr.f32.mxu0 0.0
      %2597 = vmatmul.mubr.f32.gmra.mrb[0].mxu0 %v2423
      %v2598 = vpop.f32.mrb[0].mxu0
      %v2599 = vadd.f32 %v529, %v2598
      %v2600 = vpop.f32.mrb[0].mxu0
      %2601 = vdwg.mxu0
      %2602 = vmax.xlane.f32.xlu0 %v2524
      %v2603 = vpop.xlane.xlu0 %2602
      %2604 = vmax.xlane.f32.xlu0 %v2529
      %v2605 = vpop.xlane.xlu0 %2604
      %2606 = vmax.xlane.f32.xlu0 %v2534
      %v2607 = vpop.xlane.xlu0 %2606
      %2608 = vmax.xlane.f32.xlu0 %v2539
      %v2609 = vpop.xlane.xlu0 %2608
      %2610 = vmax.xlane.f32.xlu0 %v2544
      %v2611 = vpop.xlane.xlu0 %2610
      %2612 = vmax.xlane.f32.xlu0 %v2549
      %v2613 = vpop.xlane.xlu0 %2612
      %2614 = vmax.xlane.f32.xlu0 %v2554
      %v2615 = vpop.xlane.xlu0 %2614
      %2616 = vmax.xlane.f32.xlu0 %v2559
      %v2617 = vpop.xlane.xlu0 %2616
      %2618 = vmax.xlane.f32.xlu0 %v2564
      %v2619 = vpop.xlane.xlu0 %2618
      %2620 = vmax.xlane.f32.xlu0 %v2569
      %v2621 = vpop.xlane.xlu0 %2620
      %2622 = vmax.xlane.f32.xlu0 %v2574
      %v2623 = vpop.xlane.xlu0 %2622
      %2624 = vmax.xlane.f32.xlu0 %v2579
      %v2625 = vpop.xlane.xlu0 %2624
      %2626 = vmax.xlane.f32.xlu0 %v2584
      %v2627 = vpop.xlane.xlu0 %2626
      %2628 = vmax.xlane.f32.xlu0 %v2589
      %v2629 = vpop.xlane.xlu0 %2628
      %2630 = vmax.xlane.f32.xlu0 %v2594
      %v2631 = vpop.xlane.xlu0 %2630
      %2632 = vmax.xlane.f32.xlu0 %v2599
      %v2633 = vpop.xlane.xlu0 %2632
      %v2634 = vsub.f32 %v2524, %v2603
      %v2635 = vsub.f32 %v2529, %v2605
      %v2636 = vsub.f32 %v2534, %v2607
      %v2637 = vsub.f32 %v2539, %v2609
      %v2638 = vsub.f32 %v2544, %v2611
      %v2639 = vsub.f32 %v2549, %v2613
      %v2640 = vsub.f32 %v2554, %v2615
      %v2641 = vsub.f32 %v2559, %v2617
      %v2642 = vsub.f32 %v2564, %v2619
      %v2643 = vsub.f32 %v2569, %v2621
      %v2644 = vsub.f32 %v2574, %v2623
      %v2645 = vsub.f32 %v2579, %v2625
      %v2646 = vsub.f32 %v2584, %v2627
      %v2647 = vsub.f32 %v2589, %v2629
      %v2648 = vsub.f32 %v2594, %v2631
      %v2649 = vsub.f32 %v2599, %v2633
      %v2650 = vmul.f32 %v2634, 1.442695
      %v2651 = vpow.pop %v2650
      %v2652 = vmul.f32 %v2635, 1.442695
      %v2653 = vpow.pop %v2652
      %v2654 = vmul.f32 %v2636, 1.442695
      %v2655 = vpow.pop %v2654
      %v2656 = vmul.f32 %v2637, 1.442695
      %v2657 = vpow.pop %v2656
      %v2658 = vmul.f32 %v2638, 1.442695
      %v2659 = vpow.pop %v2658
      %v2660 = vmul.f32 %v2639, 1.442695
      %v2661 = vpow.pop %v2660
      %v2662 = vmul.f32 %v2640, 1.442695
      %v2663 = vpow.pop %v2662
      %v2664 = vmul.f32 %v2641, 1.442695
      %v2665 = vpow.pop %v2664
      %v2666 = vmul.f32 %v2642, 1.442695
      %v2667 = vpow.pop %v2666
      %v2668 = vmul.f32 %v2643, 1.442695
      %v2669 = vpow.pop %v2668
      %v2670 = vmul.f32 %v2644, 1.442695
      %v2671 = vpow.pop %v2670
      %v2672 = vmul.f32 %v2645, 1.442695
      %v2673 = vpow.pop %v2672
      %v2674 = vmul.f32 %v2646, 1.442695
      %v2675 = vpow.pop %v2674
      %v2676 = vmul.f32 %v2647, 1.442695
      %v2677 = vpow.pop %v2676
      %v2678 = vmul.f32 %v2648, 1.442695
      %v2679 = vpow.pop %v2678
      %v2680 = vmul.f32 %v2649, 1.442695
      %v2681 = vpow.pop %v2680
      %2682 = vadd.xlane.f32.xlu0 %v2651
      %v2683 = vpop.xlane.xlu0 %2682
      %2684 = vadd.xlane.f32.xlu0 %v2653
      %v2685 = vpop.xlane.xlu0 %2684
      %2686 = vadd.xlane.f32.xlu0 %v2655
      %v2687 = vpop.xlane.xlu0 %2686
      %2688 = vadd.xlane.f32.xlu0 %v2657
      %v2689 = vpop.xlane.xlu0 %2688
      %2690 = vadd.xlane.f32.xlu0 %v2659
      %v2691 = vpop.xlane.xlu0 %2690
      %2692 = vadd.xlane.f32.xlu0 %v2661
      %v2693 = vpop.xlane.xlu0 %2692
      %2694 = vadd.xlane.f32.xlu0 %v2663
      %v2695 = vpop.xlane.xlu0 %2694
      %2696 = vadd.xlane.f32.xlu0 %v2665
      %v2697 = vpop.xlane.xlu0 %2696
      %2698 = vadd.xlane.f32.xlu0 %v2667
      %v2699 = vpop.xlane.xlu0 %2698
      %2700 = vadd.xlane.f32.xlu0 %v2669
      %v2701 = vpop.xlane.xlu0 %2700
      %2702 = vadd.xlane.f32.xlu0 %v2671
      %v2703 = vpop.xlane.xlu0 %2702
      %2704 = vadd.xlane.f32.xlu0 %v2673
      %v2705 = vpop.xlane.xlu0 %2704
      %2706 = vadd.xlane.f32.xlu0 %v2675
      %v2707 = vpop.xlane.xlu0 %2706
      %2708 = vadd.xlane.f32.xlu0 %v2677
      %v2709 = vpop.xlane.xlu0 %2708
      %2710 = vadd.xlane.f32.xlu0 %v2679
      %v2711 = vpop.xlane.xlu0 %2710
      %2712 = vadd.xlane.f32.xlu0 %v2681
      %v2713 = vpop.xlane.xlu0 %2712
      %v2714 = vrcp.pop %v2683
      %v2715 = vmul.f32 %v2651, %v2714
      %v2716 = vrcp.pop %v2685
      %v2717 = vmul.f32 %v2653, %v2716
      %v2718 = vrcp.pop %v2687
      %v2719 = vmul.f32 %v2655, %v2718
      %v2720 = vrcp.pop %v2689
      %v2721 = vmul.f32 %v2657, %v2720
      %v2722 = vrcp.pop %v2691
      %v2723 = vmul.f32 %v2659, %v2722
      %v2724 = vrcp.pop %v2693
      %v2725 = vmul.f32 %v2661, %v2724
      %v2726 = vrcp.pop %v2695
      %v2727 = vmul.f32 %v2663, %v2726
      %v2728 = vrcp.pop %v2697
      %v2729 = vmul.f32 %v2665, %v2728
      %v2730 = vrcp.pop %v2699
      %v2731 = vmul.f32 %v2667, %v2730
      %v2732 = vrcp.pop %v2701
      %v2733 = vmul.f32 %v2669, %v2732
      %v2734 = vrcp.pop %v2703
      %v2735 = vmul.f32 %v2671, %v2734
      %v2736 = vrcp.pop %v2705
      %v2737 = vmul.f32 %v2673, %v2736
      %v2738 = vrcp.pop %v2707
      %v2739 = vmul.f32 %v2675, %v2738
      %v2740 = vrcp.pop %v2709
      %v2741 = vmul.f32 %v2677, %v2740
      %v2742 = vrcp.pop %v2711
      %v2743 = vmul.f32 %v2679, %v2742
      %v2744 = vrcp.pop %v2713
      %v2745 = vmul.f32 %v2681, %v2744
      %2746 = vrot.lane.b32.xlu0 %v355, 104
      %v2747 = vpop.permute.xlu0 %2746
      %2748 = vrot.lane.b32.xlu0 %v361, 104
      %v2749 = vpop.permute.xlu0 %2748
      %2750 = vrot.lane.b32.xlu0 %v367, 104
      %v2751 = vpop.permute.xlu0 %2750
      %2752 = vrot.lane.b32.xlu0 %v373, 104
      %v2753 = vpop.permute.xlu0 %2752
      %2754 = vrot.lane.b32.xlu0 %v379, 104
      %v2755 = vpop.permute.xlu0 %2754
      %2756 = vrot.lane.b32.xlu0 %v385, 104
      %v2757 = vpop.permute.xlu0 %2756
      %2758 = vrot.lane.b32.xlu0 %v391, 104
      %v2759 = vpop.permute.xlu0 %2758
      %2760 = vrot.lane.b32.xlu0 %v397, 104
      %v2761 = vpop.permute.xlu0 %2760
      %2762 = vrot.lane.b32.xlu0 %v403, 104
      %v2763 = vpop.permute.xlu0 %2762
      %2764 = vrot.lane.b32.xlu0 %v409, 104
      %v2765 = vpop.permute.xlu0 %2764
      %2766 = vrot.lane.b32.xlu0 %v415, 104
      %v2767 = vpop.permute.xlu0 %2766
      %2768 = vrot.lane.b32.xlu0 %v421, 104
      %v2769 = vpop.permute.xlu0 %2768
      %2770 = vrot.lane.b32.xlu0 %v427, 104
      %v2771 = vpop.permute.xlu0 %2770
      %2772 = vrot.lane.b32.xlu0 %v433, 104
      %v2773 = vpop.permute.xlu0 %2772
      %2774 = vrot.lane.b32.xlu0 %v439, 104
      %v2775 = vpop.permute.xlu0 %2774
      %2776 = vrot.lane.b32.xlu0 %v445, 104
      %v2777 = vpop.permute.xlu0 %2776
      %2794 = vmatprep.subr.mxu0 0.0
      %2795 = vmatpush1.msra.mxu0 %v2747
      %2796 = vmatprep.subr.mxu0 0.0
      %2797 = vmatpush1.msra.mxu0 %v2749
      %2798 = vmatprep.subr.mxu0 0.0
      %2799 = vmatpush1.msra.mxu0 %v2751
      %2800 = vmatprep.subr.mxu0 0.0
      %2801 = vmatpush1.msra.mxu0 %v2753
      %2802 = vmatprep.subr.mxu0 0.0
      %2803 = vmatpush1.msra.mxu0 %v2755
      %2804 = vmatprep.subr.mxu0 0.0
      %2805 = vmatpush1.msra.mxu0 %v2757
      %2806 = vmatprep.subr.mxu0 0.0
      %2807 = vmatpush1.msra.mxu0 %v2759
      %2808 = vmatprep.subr.mxu0 0.0
      %2809 = vmatpush1.msra.mxu0 %v2761
      %2810 = vmatprep.subr.mxu0 0.0
      %2811 = vmatpush1.msra.mxu0 %v2763
      %2812 = vmatprep.subr.mxu0 0.0
      %2813 = vmatpush1.msra.mxu0 %v2765
      %2814 = vmatprep.subr.mxu0 0.0
      %2815 = vmatpush1.msra.mxu0 %v2767
      %2816 = vmatprep.subr.mxu0 0.0
      %2817 = vmatpush1.msra.mxu0 %v2769
      %2818 = vmatprep.subr.mxu0 0.0
      %2819 = vmatpush1.msra.mxu0 %v2771
      %2820 = vmatprep.subr.mxu0 0.0
      %2821 = vmatpush1.msra.mxu0 %v2773
      %2822 = vmatprep.subr.mxu0 0.0
      %2823 = vmatpush1.msra.mxu0 %v2775
      %2824 = vmatprep.subr.mxu0 0.0
      %2825 = vmatpush1.msra.mxu0 %v2777
      %2826 = vmatprep.subr.mxu0 0.0
      %2827 = vmatpush1.msra.mxu0 0.0
      %2828 = vmatprep.subr.mxu0 0.0
      %2829 = vmatpush1.msra.mxu0 0.0
      %2830 = vmatprep.subr.mxu0 0.0
      %2831 = vmatpush1.msra.mxu0 0.0
      %2832 = vmatprep.subr.mxu0 0.0
      %2833 = vmatpush1.msra.mxu0 0.0
      %2834 = vmatprep.subr.mxu0 0.0
      %2835 = vmatpush1.msra.mxu0 0.0
      %2836 = vmatprep.subr.mxu0 0.0
      %2837 = vmatpush1.msra.mxu0 0.0
      %2838 = vmatprep.subr.mxu0 0.0
      %2839 = vmatpush1.msra.mxu0 0.0
      %2840 = vmatprep.subr.mxu0 0.0
      %2841 = vmatpush1.msra.mxu0 0.0
      %2842 = vmatprep.subr.mxu0 0.0
      %2843 = vmatpush1.msra.mxu0 0.0
      %2844 = vmatprep.subr.mxu0 0.0
      %2845 = vmatpush1.msra.mxu0 0.0
      %2846 = vmatprep.subr.mxu0 0.0
      %2847 = vmatpush1.msra.mxu0 0.0
      %2848 = vmatprep.subr.mxu0 0.0
      %2849 = vmatpush1.msra.mxu0 0.0
      %2850 = vmatprep.subr.mxu0 0.0
      %2851 = vmatpush1.msra.mxu0 0.0
      %2852 = vmatprep.subr.mxu0 0.0
      %2853 = vmatpush1.msra.mxu0 0.0
      %2854 = vmatprep.subr.mxu0 0.0
      %2855 = vmatpush1.msra.mxu0 0.0
      %2856 = vmatprep.subr.mxu0 0.0
      %2857 = vmatpush1.msra.mxu0 0.0
      %2858 = vmatprep.mubr.f32.mxu0 0.0
      %2859 = vmatmul.mubr.f32.gmra.mrb[0].mxu0 %v2715
      %v2860 = vpop.f32.mrb[0].mxu0
      %v2861 = vadd.f32 0.0, %v2860
      %v2862 = vpop.f32.mrb[0].mxu0
      %2863 = vmatprep.mubr.f32.mxu0 0.0
      %2864 = vmatmul.mubr.f32.gmra.mrb[0].mxu0 %v2717
      %v2865 = vpop.f32.mrb[0].mxu0
      %v2866 = vadd.f32 0.0, %v2865
      %v2867 = vpop.f32.mrb[0].mxu0
      %2868 = vmatprep.mubr.f32.mxu0 0.0
      %2869 = vmatmul.mubr.f32.gmra.mrb[0].mxu0 %v2719
      %v2870 = vpop.f32.mrb[0].mxu0
      %v2871 = vadd.f32 0.0, %v2870
      %v2872 = vpop.f32.mrb[0].mxu0
      %2873 = vmatprep.mubr.f32.mxu0 0.0
      %2874 = vmatmul.mubr.f32.gmra.mrb[0].mxu0 %v2721
      %v2875 = vpop.f32.mrb[0].mxu0
      %v2876 = vadd.f32 0.0, %v2875
      %v2877 = vpop.f32.mrb[0].mxu0
      %2878 = vmatprep.mubr.f32.mxu0 0.0
      %2879 = vmatmul.mubr.f32.gmra.mrb[0].mxu0 %v2723
      %v2880 = vpop.f32.mrb[0].mxu0
      %v2881 = vadd.f32 0.0, %v2880
      %v2882 = vpop.f32.mrb[0].mxu0
      %2883 = vmatprep.mubr.f32.mxu0 0.0
      %2884 = vmatmul.mubr.f32.gmra.mrb[0].mxu0 %v2725
      %v2885 = vpop.f32.mrb[0].mxu0
      %v2886 = vadd.f32 0.0, %v2885
      %v2887 = vpop.f32.mrb[0].mxu0
      %2888 = vmatprep.mubr.f32.mxu0 0.0
      %2889 = vmatmul.mubr.f32.gmra.mrb[0].mxu0 %v2727
      %v2890 = vpop.f32.mrb[0].mxu0
      %v2891 = vadd.f32 0.0, %v2890
      %v2892 = vpop.f32.mrb[0].mxu0
      %2893 = vmatprep.mubr.f32.mxu0 0.0
      %2894 = vmatmul.mubr.f32.gmra.mrb[0].mxu0 %v2729
      %v2895 = vpop.f32.mrb[0].mxu0
      %v2896 = vadd.f32 0.0, %v2895
      %v2897 = vpop.f32.mrb[0].mxu0
      %2898 = vmatprep.mubr.f32.mxu0 0.0
      %2899 = vmatmul.mubr.f32.gmra.mrb[0].mxu0 %v2731
      %v2900 = vpop.f32.mrb[0].mxu0
      %v2901 = vadd.f32 0.0, %v2900
      %v2902 = vpop.f32.mrb[0].mxu0
      %2903 = vmatprep.mubr.f32.mxu0 0.0
      %2904 = vmatmul.mubr.f32.gmra.mrb[0].mxu0 %v2733
      %v2905 = vpop.f32.mrb[0].mxu0
      %v2906 = vadd.f32 0.0, %v2905
      %v2907 = vpop.f32.mrb[0].mxu0
      %2908 = vmatprep.mubr.f32.mxu0 0.0
      %2909 = vmatmul.mubr.f32.gmra.mrb[0].mxu0 %v2735
      %v2910 = vpop.f32.mrb[0].mxu0
      %v2911 = vadd.f32 0.0, %v2910
      %v2912 = vpop.f32.mrb[0].mxu0
      %2913 = vmatprep.mubr.f32.mxu0 0.0
      %2914 = vmatmul.mubr.f32.gmra.mrb[0].mxu0 %v2737
      %v2915 = vpop.f32.mrb[0].mxu0
      %v2916 = vadd.f32 0.0, %v2915
      %v2917 = vpop.f32.mrb[0].mxu0
      %2918 = vmatprep.mubr.f32.mxu0 0.0
      %2919 = vmatmul.mubr.f32.gmra.mrb[0].mxu0 %v2739
      %v2920 = vpop.f32.mrb[0].mxu0
      %v2921 = vadd.f32 0.0, %v2920
      %v2922 = vpop.f32.mrb[0].mxu0
      %2923 = vmatprep.mubr.f32.mxu0 0.0
      %2924 = vmatmul.mubr.f32.gmra.mrb[0].mxu0 %v2741
      %v2925 = vpop.f32.mrb[0].mxu0
      %v2926 = vadd.f32 0.0, %v2925
      %v2927 = vpop.f32.mrb[0].mxu0
      %2928 = vmatprep.mubr.f32.mxu0 0.0
      %2929 = vmatmul.mubr.f32.gmra.mrb[0].mxu0 %v2743
      %v2930 = vpop.f32.mrb[0].mxu0
      %v2931 = vadd.f32 0.0, %v2930
      %v2932 = vpop.f32.mrb[0].mxu0
      %2933 = vmatprep.mubr.f32.mxu0 0.0
      %2934 = vmatmul.mubr.f32.gmra.mrb[0].mxu0 %v2745
      %v2935 = vpop.f32.mrb[0].mxu0
      %v2936 = vadd.f32 0.0, %v2935
      %v2937 = vpop.f32.mrb[0].mxu0
      %2938 = vdwg.mxu0
      %v2939 = vadd.f32 %v2313, %v2861
      %v2940 = vadd.f32 %v2314, %v2866
      %v2941 = vadd.f32 %v2315, %v2871
      %v2942 = vadd.f32 %v2316, %v2876
      %v2943 = vadd.f32 %v2317, %v2881
      %v2944 = vadd.f32 %v2318, %v2886
      %v2945 = vadd.f32 %v2319, %v2891
      %v2946 = vadd.f32 %v2320, %v2896
      %v2947 = vadd.f32 %v2321, %v2901
      %v2948 = vadd.f32 %v2322, %v2906
      %v2949 = vadd.f32 %v2323, %v2911
      %v2950 = vadd.f32 %v2324, %v2916
      %v2951 = vadd.f32 %v2325, %v2921
      %v2952 = vadd.f32 %v2326, %v2926
      %v2953 = vadd.f32 %v2327, %v2931
      %v2954 = vadd.f32 %v2328, %v2936
      %v2955 = vadd.f32 %v2939, %v220
      %v2956 = vadd.f32 %v2940, %v220
      %v2957 = vadd.f32 %v2941, %v220
      %v2958 = vadd.f32 %v2942, %v220
      %v2959 = vadd.f32 %v2943, %v220
      %v2960 = vadd.f32 %v2944, %v220
      %v2961 = vadd.f32 %v2945, %v220
      %v2962 = vadd.f32 %v2946, %v220
      %v2963 = vadd.f32 %v2947, %v220
      %v2964 = vadd.f32 %v2948, %v220
      %v2965 = vadd.f32 %v2949, %v220
      %v2966 = vadd.f32 %v2950, %v220
      %v2967 = vadd.f32 %v2951, %v220
      %v2968 = vadd.f32 %v2952, %v220
      %v2969 = vadd.f32 %v2953, %v220
      %v2970 = vadd.f32 %v2954, %v220
      %v2971 = vadd.f32 %v2955, %v196
      %v2972 = vadd.f32 %v2956, %v197
      %v2973 = vadd.f32 %v2957, %v198
      %v2974 = vadd.f32 %v2958, %v199
      %v2975 = vadd.f32 %v2959, %v200
      %v2976 = vadd.f32 %v2960, %v201
      %v2977 = vadd.f32 %v2961, %v202
      %v2978 = vadd.f32 %v2962, %v203
      %v2979 = vadd.f32 %v2963, %v204
      %v2980 = vadd.f32 %v2964, %v205
      %v2981 = vadd.f32 %v2965, %v206
      %v2982 = vadd.f32 %v2966, %v207
      %v2983 = vadd.f32 %v2967, %v208
      %v2984 = vadd.f32 %v2968, %v209
      %v2985 = vadd.f32 %v2969, %v210
      %v2986 = vadd.f32 %v2970, %v211
      %v2987 = vsel %vm237, %v2971, 0.0
      %2988 = vadd.xlane.f32.xlu0 %v2987
      %v2989 = vpop.xlane.xlu0 %2988
      %v2990 = vsel %vm237, %v2972, 0.0
      %2991 = vadd.xlane.f32.xlu0 %v2990
      %v2992 = vpop.xlane.xlu0 %2991
      %v2993 = vsel %vm237, %v2973, 0.0
      %2994 = vadd.xlane.f32.xlu0 %v2993
      %v2995 = vpop.xlane.xlu0 %2994
      %v2996 = vsel %vm237, %v2974, 0.0
      %2997 = vadd.xlane.f32.xlu0 %v2996
      %v2998 = vpop.xlane.xlu0 %2997
      %v2999 = vsel %vm237, %v2975, 0.0
      %3000 = vadd.xlane.f32.xlu0 %v2999
      %v3001 = vpop.xlane.xlu0 %3000
      %v3002 = vsel %vm237, %v2976, 0.0
      %3003 = vadd.xlane.f32.xlu0 %v3002
      %v3004 = vpop.xlane.xlu0 %3003
      %v3005 = vsel %vm237, %v2977, 0.0
      %3006 = vadd.xlane.f32.xlu0 %v3005
      %v3007 = vpop.xlane.xlu0 %3006
      %v3008 = vsel %vm237, %v2978, 0.0
      %3009 = vadd.xlane.f32.xlu0 %v3008
      %v3010 = vpop.xlane.xlu0 %3009
      %v3011 = vsel %vm237, %v2979, 0.0
      %3012 = vadd.xlane.f32.xlu0 %v3011
      %v3013 = vpop.xlane.xlu0 %3012
      %v3014 = vsel %vm237, %v2980, 0.0
      %3015 = vadd.xlane.f32.xlu0 %v3014
      %v3016 = vpop.xlane.xlu0 %3015
      %v3017 = vsel %vm237, %v2981, 0.0
      %3018 = vadd.xlane.f32.xlu0 %v3017
      %v3019 = vpop.xlane.xlu0 %3018
      %v3020 = vsel %vm237, %v2982, 0.0
      %3021 = vadd.xlane.f32.xlu0 %v3020
      %v3022 = vpop.xlane.xlu0 %3021
      %v3023 = vsel %vm237, %v2983, 0.0
      %3024 = vadd.xlane.f32.xlu0 %v3023
      %v3025 = vpop.xlane.xlu0 %3024
      %v3026 = vsel %vm237, %v2984, 0.0
      %3027 = vadd.xlane.f32.xlu0 %v3026
      %v3028 = vpop.xlane.xlu0 %3027
      %v3029 = vsel %vm237, %v2985, 0.0
      %3030 = vadd.xlane.f32.xlu0 %v3029
      %v3031 = vpop.xlane.xlu0 %3030
      %v3032 = vsel %vm237, %v2986, 0.0
      %3033 = vadd.xlane.f32.xlu0 %v3032
      %v3034 = vpop.xlane.xlu0 %3033
      %v3035 = vrcp.pop 8.0
      %v3036 = vmul.f32 %v2989, %v3035
      %v3037 = vmul.f32 %v2992, %v3035
      %v3038 = vmul.f32 %v2995, %v3035
      %v3039 = vmul.f32 %v2998, %v3035
      %v3040 = vmul.f32 %v3001, %v3035
      %v3041 = vmul.f32 %v3004, %v3035
      %v3042 = vmul.f32 %v3007, %v3035
      %v3043 = vmul.f32 %v3010, %v3035
      %v3044 = vmul.f32 %v3013, %v3035
      %v3045 = vmul.f32 %v3016, %v3035
      %v3046 = vmul.f32 %v3019, %v3035
      %v3047 = vmul.f32 %v3022, %v3035
      %v3048 = vmul.f32 %v3025, %v3035
      %v3049 = vmul.f32 %v3028, %v3035
      %v3050 = vmul.f32 %v3031, %v3035
      %v3051 = vmul.f32 %v3034, %v3035
      %v3052 = vsub.f32 %v2971, %v3036
      %v3053 = vsub.f32 %v2972, %v3037
      %v3054 = vsub.f32 %v2973, %v3038
      %v3055 = vsub.f32 %v2974, %v3039
      %v3056 = vsub.f32 %v2975, %v3040
      %v3057 = vsub.f32 %v2976, %v3041
      %v3058 = vsub.f32 %v2977, %v3042
      %v3059 = vsub.f32 %v2978, %v3043
      %v3060 = vsub.f32 %v2979, %v3044
      %v3061 = vsub.f32 %v2980, %v3045
      %v3062 = vsub.f32 %v2981, %v3046
      %v3063 = vsub.f32 %v2982, %v3047
      %v3064 = vsub.f32 %v2983, %v3048
      %v3065 = vsub.f32 %v2984, %v3049
      %v3066 = vsub.f32 %v2985, %v3050
      %v3067 = vsub.f32 %v2986, %v3051
      %v3068 = vmul.f32 %v3052, %v3052
      %v3069 = vmul.f32 %v3053, %v3053
      %v3070 = vmul.f32 %v3054, %v3054
      %v3071 = vmul.f32 %v3055, %v3055
      %v3072 = vmul.f32 %v3056, %v3056
      %v3073 = vmul.f32 %v3057, %v3057
      %v3074 = vmul.f32 %v3058, %v3058
      %v3075 = vmul.f32 %v3059, %v3059
      %v3076 = vmul.f32 %v3060, %v3060
      %v3077 = vmul.f32 %v3061, %v3061
      %v3078 = vmul.f32 %v3062, %v3062
      %v3079 = vmul.f32 %v3063, %v3063
      %v3080 = vmul.f32 %v3064, %v3064
      %v3081 = vmul.f32 %v3065, %v3065
      %v3082 = vmul.f32 %v3066, %v3066
      %v3083 = vmul.f32 %v3067, %v3067
      %v3084 = vsel %vm237, %v3068, 0.0
      %3085 = vadd.xlane.f32.xlu0 %v3084
      %v3086 = vpop.xlane.xlu0 %3085
      %v3087 = vsel %vm237, %v3069, 0.0
      %3088 = vadd.xlane.f32.xlu0 %v3087
      %v3089 = vpop.xlane.xlu0 %3088
      %v3090 = vsel %vm237, %v3070, 0.0
      %3091 = vadd.xlane.f32.xlu0 %v3090
      %v3092 = vpop.xlane.xlu0 %3091
      %v3093 = vsel %vm237, %v3071, 0.0
      %3094 = vadd.xlane.f32.xlu0 %v3093
      %v3095 = vpop.xlane.xlu0 %3094
      %v3096 = vsel %vm237, %v3072, 0.0
      %3097 = vadd.xlane.f32.xlu0 %v3096
      %v3098 = vpop.xlane.xlu0 %3097
      %v3099 = vsel %vm237, %v3073, 0.0
      %3100 = vadd.xlane.f32.xlu0 %v3099
      %v3101 = vpop.xlane.xlu0 %3100
      %v3102 = vsel %vm237, %v3074, 0.0
      %3103 = vadd.xlane.f32.xlu0 %v3102
      %v3104 = vpop.xlane.xlu0 %3103
      %v3105 = vsel %vm237, %v3075, 0.0
      %3106 = vadd.xlane.f32.xlu0 %v3105
      %v3107 = vpop.xlane.xlu0 %3106
      %v3108 = vsel %vm237, %v3076, 0.0
      %3109 = vadd.xlane.f32.xlu0 %v3108
      %v3110 = vpop.xlane.xlu0 %3109
      %v3111 = vsel %vm237, %v3077, 0.0
      %3112 = vadd.xlane.f32.xlu0 %v3111
      %v3113 = vpop.xlane.xlu0 %3112
      %v3114 = vsel %vm237, %v3078, 0.0
      %3115 = vadd.xlane.f32.xlu0 %v3114
      %v3116 = vpop.xlane.xlu0 %3115
      %v3117 = vsel %vm237, %v3079, 0.0
      %3118 = vadd.xlane.f32.xlu0 %v3117
      %v3119 = vpop.xlane.xlu0 %3118
      %v3120 = vsel %vm237, %v3080, 0.0
      %3121 = vadd.xlane.f32.xlu0 %v3120
      %v3122 = vpop.xlane.xlu0 %3121
      %v3123 = vsel %vm237, %v3081, 0.0
      %3124 = vadd.xlane.f32.xlu0 %v3123
      %v3125 = vpop.xlane.xlu0 %3124
      %v3126 = vsel %vm237, %v3082, 0.0
      %3127 = vadd.xlane.f32.xlu0 %v3126
      %v3128 = vpop.xlane.xlu0 %3127
      %v3129 = vsel %vm237, %v3083, 0.0
      %3130 = vadd.xlane.f32.xlu0 %v3129
      %v3131 = vpop.xlane.xlu0 %3130
      %v3132 = vmul.f32 %v3086, %v3035
      %v3133 = vmul.f32 %v3089, %v3035
      %v3134 = vmul.f32 %v3092, %v3035
      %v3135 = vmul.f32 %v3095, %v3035
      %v3136 = vmul.f32 %v3098, %v3035
      %v3137 = vmul.f32 %v3101, %v3035
      %v3138 = vmul.f32 %v3104, %v3035
      %v3139 = vmul.f32 %v3107, %v3035
      %v3140 = vmul.f32 %v3110, %v3035
      %v3141 = vmul.f32 %v3113, %v3035
      %v3142 = vmul.f32 %v3116, %v3035
      %v3143 = vmul.f32 %v3119, %v3035
      %v3144 = vmul.f32 %v3122, %v3035
      %v3145 = vmul.f32 %v3125, %v3035
      %v3146 = vmul.f32 %v3128, %v3035
      %v3147 = vmul.f32 %v3131, %v3035
      %v3148 = vadd.f32 %v3132, 1e-05
      %v3149 = vadd.f32 %v3133, 1e-05
      %v3150 = vadd.f32 %v3134, 1e-05
      %v3151 = vadd.f32 %v3135, 1e-05
      %v3152 = vadd.f32 %v3136, 1e-05
      %v3153 = vadd.f32 %v3137, 1e-05
      %v3154 = vadd.f32 %v3138, 1e-05
      %v3155 = vadd.f32 %v3139, 1e-05
      %v3156 = vadd.f32 %v3140, 1e-05
      %v3157 = vadd.f32 %v3141, 1e-05
      %v3158 = vadd.f32 %v3142, 1e-05
      %v3159 = vadd.f32 %v3143, 1e-05
      %v3160 = vadd.f32 %v3144, 1e-05
      %v3161 = vadd.f32 %v3145, 1e-05
      %v3162 = vadd.f32 %v3146, 1e-05
      %v3163 = vadd.f32 %v3147, 1e-05
      %v3164 = vrsqrt.pop %v3148
      %v3165 = vrsqrt.pop %v3149
      %v3166 = vrsqrt.pop %v3150
      %v3167 = vrsqrt.pop %v3151
      %v3168 = vrsqrt.pop %v3152
      %v3169 = vrsqrt.pop %v3153
      %v3170 = vrsqrt.pop %v3154
      %v3171 = vrsqrt.pop %v3155
      %v3172 = vrsqrt.pop %v3156
      %v3173 = vrsqrt.pop %v3157
      %v3174 = vrsqrt.pop %v3158
      %v3175 = vrsqrt.pop %v3159
      %v3176 = vrsqrt.pop %v3160
      %v3177 = vrsqrt.pop %v3161
      %v3178 = vrsqrt.pop %v3162
      %v3179 = vrsqrt.pop %v3163
      %v3180 = vmul.f32 %v3052, %v3164
      %v3181 = vmul.f32 %v3053, %v3165
      %v3182 = vmul.f32 %v3054, %v3166
      %v3183 = vmul.f32 %v3055, %v3167
      %v3184 = vmul.f32 %v3056, %v3168
      %v3185 = vmul.f32 %v3057, %v3169
      %v3186 = vmul.f32 %v3058, %v3170
      %v3187 = vmul.f32 %v3059, %v3171
      %v3188 = vmul.f32 %v3060, %v3172
      %v3189 = vmul.f32 %v3061, %v3173
      %v3190 = vmul.f32 %v3062, %v3174
      %v3191 = vmul.f32 %v3063, %v3175
      %v3192 = vmul.f32 %v3064, %v3176
      %v3193 = vmul.f32 %v3065, %v3177
      %v3194 = vmul.f32 %v3066, %v3178
      %v3195 = vmul.f32 %v3067, %v3179
      %v3196 = vmul.f32 %v3180, %v221
      %v3197 = vmul.f32 %v3181, %v221
      %v3198 = vmul.f32 %v3182, %v221
      %v3199 = vmul.f32 %v3183, %v221
      %v3200 = vmul.f32 %v3184, %v221
      %v3201 = vmul.f32 %v3185, %v221
      %v3202 = vmul.f32 %v3186, %v221
      %v3203 = vmul.f32 %v3187, %v221
      %v3204 = vmul.f32 %v3188, %v221
      %v3205 = vmul.f32 %v3189, %v221
      %v3206 = vmul.f32 %v3190, %v221
      %v3207 = vmul.f32 %v3191, %v221
      %v3208 = vmul.f32 %v3192, %v221
      %v3209 = vmul.f32 %v3193, %v221
      %v3210 = vmul.f32 %v3194, %v221
      %v3211 = vmul.f32 %v3195, %v221
      %v3212 = vadd.f32 %v3196, %v222
      %v3213 = vadd.f32 %v3197, %v222
      %v3214 = vadd.f32 %v3198, %v222
      %v3215 = vadd.f32 %v3199, %v222
      %v3216 = vadd.f32 %v3200, %v222
      %v3217 = vadd.f32 %v3201, %v222
      %v3218 = vadd.f32 %v3202, %v222
      %v3219 = vadd.f32 %v3203, %v222
      %v3220 = vadd.f32 %v3204, %v222
      %v3221 = vadd.f32 %v3205, %v222
      %v3222 = vadd.f32 %v3206, %v222
      %v3223 = vadd.f32 %v3207, %v222
      %v3224 = vadd.f32 %v3208, %v222
      %v3225 = vadd.f32 %v3209, %v222
      %v3226 = vadd.f32 %v3210, %v222
      %v3227 = vadd.f32 %v3211, %v222
      %3229 = vrot.lane.b32.xlu0 %v213, 96
      %v3230 = vpop.permute.xlu0 %3229
      %v3233 = vsel %vm237, %v3212, 0
      %v3236 = vsel %vm237, %v3213, 0
      %v3239 = vsel %vm237, %v3214, 0
      %v3242 = vsel %vm237, %v3215, 0
      %v3245 = vsel %vm237, %v3216, 0
      %v3248 = vsel %vm237, %v3217, 0
      %v3251 = vsel %vm237, %v3218, 0
      %v3254 = vsel %vm237, %v3219, 0
      %v3257 = vsel %vm237, %v3220, 0
      %v3260 = vsel %vm237, %v3221, 0
      %v3263 = vsel %vm237, %v3222, 0
      %v3266 = vsel %vm237, %v3223, 0
      %v3269 = vsel %vm237, %v3224, 0
      %v3272 = vsel %vm237, %v3225, 0
      %v3275 = vsel %vm237, %v3226, 0
      %v3278 = vsel %vm237, %v3227, 0
      %3280 = vmatprep.subr.mxu0 0.0
      %3281 = vmatpush1.msra.mxu0 %v3230
      %3282 = vmatprep.subr.mxu0 0.0
      %3283 = vmatpush1.msra.mxu0 0.0
      %3284 = vmatprep.subr.mxu0 0.0
      %3285 = vmatpush1.msra.mxu0 0.0
      %3286 = vmatprep.subr.mxu0 0.0
      %3287 = vmatpush1.msra.mxu0 0.0
      %3288 = vmatprep.subr.mxu0 0.0
      %3289 = vmatpush1.msra.mxu0 0.0
      %3290 = vmatprep.subr.mxu0 0.0
      %3291 = vmatpush1.msra.mxu0 0.0
      %3292 = vmatprep.subr.mxu0 0.0
      %3293 = vmatpush1.msra.mxu0 0.0
      %3294 = vmatprep.subr.mxu0 0.0
      %3295 = vmatpush1.msra.mxu0 0.0
      %3296 = vmatprep.subr.mxu0 0.0
      %3297 = vmatpush1.msra.mxu0 0.0
      %3298 = vmatprep.subr.mxu0 0.0
      %3299 = vmatpush1.msra.mxu0 0.0
      %3300 = vmatprep.subr.mxu0 0.0
      %3301 = vmatpush1.msra.mxu0 0.0
      %3302 = vmatprep.subr.mxu0 0.0
      %3303 = vmatpush1.msra.mxu0 0.0
      %3304 = vmatprep.subr.mxu0 0.0
      %3305 = vmatpush1.msra.mxu0 0.0
      %3306 = vmatprep.subr.mxu0 0.0
      %3307 = vmatpush1.msra.mxu0 0.0
      %3308 = vmatprep.subr.mxu0 0.0
      %3309 = vmatpush1.msra.mxu0 0.0
      %3310 = vmatprep.subr.mxu0 0.0
      %3311 = vmatpush1.msra.mxu0 0.0
      %3312 = vmatprep.subr.mxu0 0.0
      %3313 = vmatpush1.msra.mxu0 0.0
      %3314 = vmatprep.subr.mxu0 0.0
      %3315 = vmatpush1.msra.mxu0 0.0
      %3316 = vmatprep.subr.mxu0 0.0
      %3317 = vmatpush1.msra.mxu0 0.0
      %3318 = vmatprep.subr.mxu0 0.0
      %3319 = vmatpush1.msra.mxu0 0.0
      %3320 = vmatprep.subr.mxu0 0.0
      %3321 = vmatpush1.msra.mxu0 0.0
      %3322 = vmatprep.subr.mxu0 0.0
      %3323 = vmatpush1.msra.mxu0 0.0
      %3324 = vmatprep.subr.mxu0 0.0
      %3325 = vmatpush1.msra.mxu0 0.0
      %3326 = vmatprep.subr.mxu0 0.0
      %3327 = vmatpush1.msra.mxu0 0.0
      %3328 = vmatprep.subr.mxu0 0.0
      %3329 = vmatpush1.msra.mxu0 0.0
      %3330 = vmatprep.subr.mxu0 0.0
      %3331 = vmatpush1.msra.mxu0 0.0
      %3332 = vmatprep.subr.mxu0 0.0
      %3333 = vmatpush1.msra.mxu0 0.0
      %3334 = vmatprep.subr.mxu0 0.0
      %3335 = vmatpush1.msra.mxu0 0.0
      %3336 = vmatprep.subr.mxu0 0.0
      %3337 = vmatpush1.msra.mxu0 0.0
      %3338 = vmatprep.subr.mxu0 0.0
      %3339 = vmatpush1.msra.mxu0 0.0
      %3340 = vmatprep.subr.mxu0 0.0
      %3341 = vmatpush1.msra.mxu0 0.0
      %3342 = vmatprep.subr.mxu0 0.0
      %3343 = vmatpush1.msra.mxu0 0.0
      %3344 = vmatprep.mubr.f32.mxu0 0.0
      %3345 = vmatmul.mubr.f32.gmra.mrb[0].mxu0 %v3233
      %v3346 = vpop.f32.mrb[0].mxu0
      %v3347 = vadd.f32 %v223, %v3346
      %v3348 = vpop.f32.mrb[0].mxu0
      %3349 = vmatprep.mubr.f32.mxu0 0.0
      %3350 = vmatmul.mubr.f32.gmra.mrb[0].mxu0 %v3236
      %v3351 = vpop.f32.mrb[0].mxu0
      %v3352 = vadd.f32 %v223, %v3351
      %v3353 = vpop.f32.mrb[0].mxu0
      %3354 = vmatprep.mubr.f32.mxu0 0.0
      %3355 = vmatmul.mubr.f32.gmra.mrb[0].mxu0 %v3239
      %v3356 = vpop.f32.mrb[0].mxu0
      %v3357 = vadd.f32 %v223, %v3356
      %v3358 = vpop.f32.mrb[0].mxu0
      %3359 = vmatprep.mubr.f32.mxu0 0.0
      %3360 = vmatmul.mubr.f32.gmra.mrb[0].mxu0 %v3242
      %v3361 = vpop.f32.mrb[0].mxu0
      %v3362 = vadd.f32 %v223, %v3361
      %v3363 = vpop.f32.mrb[0].mxu0
      %3364 = vmatprep.mubr.f32.mxu0 0.0
      %3365 = vmatmul.mubr.f32.gmra.mrb[0].mxu0 %v3245
      %v3366 = vpop.f32.mrb[0].mxu0
      %v3367 = vadd.f32 %v223, %v3366
      %v3368 = vpop.f32.mrb[0].mxu0
      %3369 = vmatprep.mubr.f32.mxu0 0.0
      %3370 = vmatmul.mubr.f32.gmra.mrb[0].mxu0 %v3248
      %v3371 = vpop.f32.mrb[0].mxu0
      %v3372 = vadd.f32 %v223, %v3371
      %v3373 = vpop.f32.mrb[0].mxu0
      %3374 = vmatprep.mubr.f32.mxu0 0.0
      %3375 = vmatmul.mubr.f32.gmra.mrb[0].mxu0 %v3251
      %v3376 = vpop.f32.mrb[0].mxu0
      %v3377 = vadd.f32 %v223, %v3376
      %v3378 = vpop.f32.mrb[0].mxu0
      %3379 = vmatprep.mubr.f32.mxu0 0.0
      %3380 = vmatmul.mubr.f32.gmra.mrb[0].mxu0 %v3254
      %v3381 = vpop.f32.mrb[0].mxu0
      %v3382 = vadd.f32 %v223, %v3381
      %v3383 = vpop.f32.mrb[0].mxu0
      %3384 = vmatprep.mubr.f32.mxu0 0.0
      %3385 = vmatmul.mubr.f32.gmra.mrb[0].mxu0 %v3257
      %v3386 = vpop.f32.mrb[0].mxu0
      %v3387 = vadd.f32 %v223, %v3386
      %v3388 = vpop.f32.mrb[0].mxu0
      %3389 = vmatprep.mubr.f32.mxu0 0.0
      %3390 = vmatmul.mubr.f32.gmra.mrb[0].mxu0 %v3260
      %v3391 = vpop.f32.mrb[0].mxu0
      %v3392 = vadd.f32 %v223, %v3391
      %v3393 = vpop.f32.mrb[0].mxu0
      %3394 = vmatprep.mubr.f32.mxu0 0.0
      %3395 = vmatmul.mubr.f32.gmra.mrb[0].mxu0 %v3263
      %v3396 = vpop.f32.mrb[0].mxu0
      %v3397 = vadd.f32 %v223, %v3396
      %v3398 = vpop.f32.mrb[0].mxu0
      %3399 = vmatprep.mubr.f32.mxu0 0.0
      %3400 = vmatmul.mubr.f32.gmra.mrb[0].mxu0 %v3266
      %v3401 = vpop.f32.mrb[0].mxu0
      %v3402 = vadd.f32 %v223, %v3401
      %v3403 = vpop.f32.mrb[0].mxu0
      %3404 = vmatprep.mubr.f32.mxu0 0.0
      %3405 = vmatmul.mubr.f32.gmra.mrb[0].mxu0 %v3269
      %v3406 = vpop.f32.mrb[0].mxu0
      %v3407 = vadd.f32 %v223, %v3406
      %v3408 = vpop.f32.mrb[0].mxu0
      %3409 = vmatprep.mubr.f32.mxu0 0.0
      %3410 = vmatmul.mubr.f32.gmra.mrb[0].mxu0 %v3272
      %v3411 = vpop.f32.mrb[0].mxu0
      %v3412 = vadd.f32 %v223, %v3411
      %v3413 = vpop.f32.mrb[0].mxu0
      %3414 = vmatprep.mubr.f32.mxu0 0.0
      %3415 = vmatmul.mubr.f32.gmra.mrb[0].mxu0 %v3275
      %v3416 = vpop.f32.mrb[0].mxu0
      %v3417 = vadd.f32 %v223, %v3416
      %v3418 = vpop.f32.mrb[0].mxu0
      %3419 = vmatprep.mubr.f32.mxu0 0.0
      %3420 = vmatmul.mubr.f32.gmra.mrb[0].mxu0 %v3278
      %v3421 = vpop.f32.mrb[0].mxu0
      %v3422 = vadd.f32 %v223, %v3421
      %v3423 = vpop.f32.mrb[0].mxu0
      %3424 = vdwg.mxu0
      %vm3425 = vcmask 261120
      %v3427 = vsel %vm3425, 0.0, 0
      %3429 = vmatprep.subr.mxu0 0.0
      %3430 = vmatpush1.msra.mxu0 %v215
      %3431 = vmatprep.subr.mxu0 0.0
      %3432 = vmatpush1.msra.mxu0 %v216
      %3433 = vmatprep.subr.mxu0 0.0
      %3434 = vmatpush1.msra.mxu0 %v217
      %3435 = vmatprep.subr.mxu0 0.0
      %3436 = vmatpush1.msra.mxu0 %v218
      %3437 = vmatprep.subr.mxu0 0.0
      %3438 = vmatpush1.msra.mxu0 0.0
      %3439 = vmatprep.subr.mxu0 0.0
      %3440 = vmatpush1.msra.mxu0 0.0
      %3441 = vmatprep.subr.mxu0 0.0
      %3442 = vmatpush1.msra.mxu0 0.0
      %3443 = vmatprep.subr.mxu0 0.0
      %3444 = vmatpush1.msra.mxu0 0.0
      %3445 = vmatprep.subr.mxu0 0.0
      %3446 = vmatpush1.msra.mxu0 0.0
      %3447 = vmatprep.subr.mxu0 0.0
      %3448 = vmatpush1.msra.mxu0 0.0
      %3449 = vmatprep.subr.mxu0 0.0
      %3450 = vmatpush1.msra.mxu0 0.0
      %3451 = vmatprep.subr.mxu0 0.0
      %3452 = vmatpush1.msra.mxu0 0.0
      %3453 = vmatprep.subr.mxu0 0.0
      %3454 = vmatpush1.msra.mxu0 0.0
      %3455 = vmatprep.subr.mxu0 0.0
      %3456 = vmatpush1.msra.mxu0 0.0
      %3457 = vmatprep.subr.mxu0 0.0
      %3458 = vmatpush1.msra.mxu0 0.0
      %3459 = vmatprep.subr.mxu0 0.0
      %3460 = vmatpush1.msra.mxu0 0.0
      %3461 = vmatprep.subr.mxu0 0.0
      %3462 = vmatpush1.msra.mxu0 0.0
      %3463 = vmatprep.subr.mxu0 0.0
      %3464 = vmatpush1.msra.mxu0 0.0
      %3465 = vmatprep.subr.mxu0 0.0
      %3466 = vmatpush1.msra.mxu0 0.0
      %3467 = vmatprep.subr.mxu0 0.0
      %3468 = vmatpush1.msra.mxu0 0.0
      %3469 = vmatprep.subr.mxu0 0.0
      %3470 = vmatpush1.msra.mxu0 0.0
      %3471 = vmatprep.subr.mxu0 0.0
      %3472 = vmatpush1.msra.mxu0 0.0
      %3473 = vmatprep.subr.mxu0 0.0
      %3474 = vmatpush1.msra.mxu0 0.0
      %3475 = vmatprep.subr.mxu0 0.0
      %3476 = vmatpush1.msra.mxu0 0.0
      %3477 = vmatprep.subr.mxu0 0.0
      %3478 = vmatpush1.msra.mxu0 0.0
      %3479 = vmatprep.subr.mxu0 0.0
      %3480 = vmatpush1.msra.mxu0 0.0
      %3481 = vmatprep.subr.mxu0 0.0
      %3482 = vmatpush1.msra.mxu0 0.0
      %3483 = vmatprep.subr.mxu0 0.0
      %3484 = vmatpush1.msra.mxu0 0.0
      %3485 = vmatprep.subr.mxu0 0.0
      %3486 = vmatpush1.msra.mxu0 0.0
      %3487 = vmatprep.subr.mxu0 0.0
      %3488 = vmatpush1.msra.mxu0 0.0
      %3489 = vmatprep.subr.mxu0 0.0
      %3490 = vmatpush1.msra.mxu0 0.0
      %3491 = vmatprep.subr.mxu0 0.0
      %3492 = vmatpush1.msra.mxu0 0.0
      %3493 = vmatprep.mubr.f32.mxu0 0.0
      %3494 = vmatmul.mubr.f32.gmra.mrb[0].mxu0 %v3427
      %v3495 = vpop.f32.mrb[0].mxu0
      %v3496 = vadd.f32 0.0, %v3495
      %v3497 = vpop.f32.mrb[0].mxu0
      %3498 = vdwg.mxu0
      %v3499 = vadd.f32 %v3347, %v3496
      %v3500 = vxor.u32 %v3499, 2147483648
      %v3501 = vmul.f32 %v3500, 1.442695
      %v3502 = vpow.pop %v3501
      %v3503 = vadd.f32 %v3502, 1.0
      %v3504 = vrcp.pop %v3503
      %v3505 = vmul.f32 1.0, %v3504
      %3507 = vrot.lane.b32.xlu0 %v224, 64
      %v3508 = vpop.permute.xlu0 %3507
      %v3510 = vadd.f32 %v3496, %v3508
      %3512 = vrot.lane.b32.xlu0 %v3510, 64
      %v3513 = vpop.permute.xlu0 %3512
      %v3515 = vmul.f32 %v3505, %v3513
      %3517 = vrot.lane.b32.xlu0 %v3515, 64
      %v3518 = vpop.permute.xlu0 %3517
      %v3520 = vadd.f32 %v3347, %v3518
      %v3521 = vtanh.pop %v3520
      %v3522 = vsub.f32 0.0, %v3521
      %3524 = vrot.lane.b32.xlu0 %v3522, 96
      %v3525 = vpop.permute.xlu0 %3524
      %v3527 = vmul.f32 %v3505, %v3525
      %3529 = vrot.lane.b32.xlu0 %v3527, 32
      %v3530 = vpop.permute.xlu0 %3529
      %v3532 = vadd.f32 %v3521, %v3530
      %3534 = vrot.lane.b32.xlu0 %v3532, 64
      %v3535 = vpop.permute.xlu0 %3534
      %v3536 = vsel %vm3425, %v3535, 0
      %3538 = vmatprep.subr.mxu0 0.0
      %3539 = vmatpush1.msra.mxu0 %v215
      %3540 = vmatprep.subr.mxu0 0.0
      %3541 = vmatpush1.msra.mxu0 %v216
      %3542 = vmatprep.subr.mxu0 0.0
      %3543 = vmatpush1.msra.mxu0 %v217
      %3544 = vmatprep.subr.mxu0 0.0
      %3545 = vmatpush1.msra.mxu0 %v218
      %3546 = vmatprep.subr.mxu0 0.0
      %3547 = vmatpush1.msra.mxu0 0.0
      %3548 = vmatprep.subr.mxu0 0.0
      %3549 = vmatpush1.msra.mxu0 0.0
      %3550 = vmatprep.subr.mxu0 0.0
      %3551 = vmatpush1.msra.mxu0 0.0
      %3552 = vmatprep.subr.mxu0 0.0
      %3553 = vmatpush1.msra.mxu0 0.0
      %3554 = vmatprep.subr.mxu0 0.0
      %3555 = vmatpush1.msra.mxu0 0.0
      %3556 = vmatprep.subr.mxu0 0.0
      %3557 = vmatpush1.msra.mxu0 0.0
      %3558 = vmatprep.subr.mxu0 0.0
      %3559 = vmatpush1.msra.mxu0 0.0
      %3560 = vmatprep.subr.mxu0 0.0
      %3561 = vmatpush1.msra.mxu0 0.0
      %3562 = vmatprep.subr.mxu0 0.0
      %3563 = vmatpush1.msra.mxu0 0.0
      %3564 = vmatprep.subr.mxu0 0.0
      %3565 = vmatpush1.msra.mxu0 0.0
      %3566 = vmatprep.subr.mxu0 0.0
      %3567 = vmatpush1.msra.mxu0 0.0
      %3568 = vmatprep.subr.mxu0 0.0
      %3569 = vmatpush1.msra.mxu0 0.0
      %3570 = vmatprep.subr.mxu0 0.0
      %3571 = vmatpush1.msra.mxu0 0.0
      %3572 = vmatprep.subr.mxu0 0.0
      %3573 = vmatpush1.msra.mxu0 0.0
      %3574 = vmatprep.subr.mxu0 0.0
      %3575 = vmatpush1.msra.mxu0 0.0
      %3576 = vmatprep.subr.mxu0 0.0
      %3577 = vmatpush1.msra.mxu0 0.0
      %3578 = vmatprep.subr.mxu0 0.0
      %3579 = vmatpush1.msra.mxu0 0.0
      %3580 = vmatprep.subr.mxu0 0.0
      %3581 = vmatpush1.msra.mxu0 0.0
      %3582 = vmatprep.subr.mxu0 0.0
      %3583 = vmatpush1.msra.mxu0 0.0
      %3584 = vmatprep.subr.mxu0 0.0
      %3585 = vmatpush1.msra.mxu0 0.0
      %3586 = vmatprep.subr.mxu0 0.0
      %3587 = vmatpush1.msra.mxu0 0.0
      %3588 = vmatprep.subr.mxu0 0.0
      %3589 = vmatpush1.msra.mxu0 0.0
      %3590 = vmatprep.subr.mxu0 0.0
      %3591 = vmatpush1.msra.mxu0 0.0
      %3592 = vmatprep.subr.mxu0 0.0
      %3593 = vmatpush1.msra.mxu0 0.0
      %3594 = vmatprep.subr.mxu0 0.0
      %3595 = vmatpush1.msra.mxu0 0.0
      %3596 = vmatprep.subr.mxu0 0.0
      %3597 = vmatpush1.msra.mxu0 0.0
      %3598 = vmatprep.subr.mxu0 0.0
      %3599 = vmatpush1.msra.mxu0 0.0
      %3600 = vmatprep.subr.mxu0 0.0
      %3601 = vmatpush1.msra.mxu0 0.0
      %3602 = vmatprep.mubr.f32.mxu0 0.0
      %3603 = vmatmul.mubr.f32.gmra.mrb[0].mxu0 %v3536
      %v3604 = vpop.f32.mrb[0].mxu0
      %v3605 = vadd.f32 0.0, %v3604
      %v3606 = vpop.f32.mrb[0].mxu0
      %3607 = vdwg.mxu0
      %v3608 = vadd.f32 %v3352, %v3605
      %v3609 = vxor.u32 %v3608, 2147483648
      %v3610 = vmul.f32 %v3609, 1.442695
      %v3611 = vpow.pop %v3610
      %v3612 = vadd.f32 %v3611, 1.0
      %v3613 = vrcp.pop %v3612
      %v3614 = vmul.f32 1.0, %v3613
      %v3615 = vadd.f32 %v3605, %v3508
      %3617 = vrot.lane.b32.xlu0 %v3615, 64
      %v3618 = vpop.permute.xlu0 %3617
      %v3620 = vmul.f32 %v3614, %v3618
      %3622 = vrot.lane.b32.xlu0 %v3620, 64
      %v3623 = vpop.permute.xlu0 %3622
      %v3625 = vadd.f32 %v3352, %v3623
      %v3626 = vtanh.pop %v3625
      %v3627 = vsub.f32 %v3532, %v3626
      %3629 = vrot.lane.b32.xlu0 %v3627, 96
      %v3630 = vpop.permute.xlu0 %3629
      %v3632 = vmul.f32 %v3614, %v3630
      %3634 = vrot.lane.b32.xlu0 %v3632, 32
      %v3635 = vpop.permute.xlu0 %3634
      %v3637 = vadd.f32 %v3626, %v3635
      %3639 = vrot.lane.b32.xlu0 %v3637, 64
      %v3640 = vpop.permute.xlu0 %3639
      %v3641 = vsel %vm3425, %v3640, 0
      %3643 = vmatprep.subr.mxu0 0.0
      %3644 = vmatpush1.msra.mxu0 %v215
      %3645 = vmatprep.subr.mxu0 0.0
      %3646 = vmatpush1.msra.mxu0 %v216
      %3647 = vmatprep.subr.mxu0 0.0
      %3648 = vmatpush1.msra.mxu0 %v217
      %3649 = vmatprep.subr.mxu0 0.0
      %3650 = vmatpush1.msra.mxu0 %v218
      %3651 = vmatprep.subr.mxu0 0.0
      %3652 = vmatpush1.msra.mxu0 0.0
      %3653 = vmatprep.subr.mxu0 0.0
      %3654 = vmatpush1.msra.mxu0 0.0
      %3655 = vmatprep.subr.mxu0 0.0
      %3656 = vmatpush1.msra.mxu0 0.0
      %3657 = vmatprep.subr.mxu0 0.0
      %3658 = vmatpush1.msra.mxu0 0.0
      %3659 = vmatprep.subr.mxu0 0.0
      %3660 = vmatpush1.msra.mxu0 0.0
      %3661 = vmatprep.subr.mxu0 0.0
      %3662 = vmatpush1.msra.mxu0 0.0
      %3663 = vmatprep.subr.mxu0 0.0
      %3664 = vmatpush1.msra.mxu0 0.0
      %3665 = vmatprep.subr.mxu0 0.0
      %3666 = vmatpush1.msra.mxu0 0.0
      %3667 = vmatprep.subr.mxu0 0.0
      %3668 = vmatpush1.msra.mxu0 0.0
      %3669 = vmatprep.subr.mxu0 0.0
      %3670 = vmatpush1.msra.mxu0 0.0
      %3671 = vmatprep.subr.mxu0 0.0
      %3672 = vmatpush1.msra.mxu0 0.0
      %3673 = vmatprep.subr.mxu0 0.0
      %3674 = vmatpush1.msra.mxu0 0.0
      %3675 = vmatprep.subr.mxu0 0.0
      %3676 = vmatpush1.msra.mxu0 0.0
      %3677 = vmatprep.subr.mxu0 0.0
      %3678 = vmatpush1.msra.mxu0 0.0
      %3679 = vmatprep.subr.mxu0 0.0
      %3680 = vmatpush1.msra.mxu0 0.0
      %3681 = vmatprep.subr.mxu0 0.0
      %3682 = vmatpush1.msra.mxu0 0.0
      %3683 = vmatprep.subr.mxu0 0.0
      %3684 = vmatpush1.msra.mxu0 0.0
      %3685 = vmatprep.subr.mxu0 0.0
      %3686 = vmatpush1.msra.mxu0 0.0
      %3687 = vmatprep.subr.mxu0 0.0
      %3688 = vmatpush1.msra.mxu0 0.0
      %3689 = vmatprep.subr.mxu0 0.0
      %3690 = vmatpush1.msra.mxu0 0.0
      %3691 = vmatprep.subr.mxu0 0.0
      %3692 = vmatpush1.msra.mxu0 0.0
      %3693 = vmatprep.subr.mxu0 0.0
      %3694 = vmatpush1.msra.mxu0 0.0
      %3695 = vmatprep.subr.mxu0 0.0
      %3696 = vmatpush1.msra.mxu0 0.0
      %3697 = vmatprep.subr.mxu0 0.0
      %3698 = vmatpush1.msra.mxu0 0.0
      %3699 = vmatprep.subr.mxu0 0.0
      %3700 = vmatpush1.msra.mxu0 0.0
      %3701 = vmatprep.subr.mxu0 0.0
      %3702 = vmatpush1.msra.mxu0 0.0
      %3703 = vmatprep.subr.mxu0 0.0
      %3704 = vmatpush1.msra.mxu0 0.0
      %3705 = vmatprep.subr.mxu0 0.0
      %3706 = vmatpush1.msra.mxu0 0.0
      %3707 = vmatprep.mubr.f32.mxu0 0.0
      %3708 = vmatmul.mubr.f32.gmra.mrb[0].mxu0 %v3641
      %v3709 = vpop.f32.mrb[0].mxu0
      %v3710 = vadd.f32 0.0, %v3709
      %v3711 = vpop.f32.mrb[0].mxu0
      %3712 = vdwg.mxu0
      %v3713 = vadd.f32 %v3357, %v3710
      %v3714 = vxor.u32 %v3713, 2147483648
      %v3715 = vmul.f32 %v3714, 1.442695
      %v3716 = vpow.pop %v3715
      %v3717 = vadd.f32 %v3716, 1.0
      %v3718 = vrcp.pop %v3717
      %v3719 = vmul.f32 1.0, %v3718
      %v3720 = vadd.f32 %v3710, %v3508
      %3722 = vrot.lane.b32.xlu0 %v3720, 64
      %v3723 = vpop.permute.xlu0 %3722
      %v3725 = vmul.f32 %v3719, %v3723
      %3727 = vrot.lane.b32.xlu0 %v3725, 64
      %v3728 = vpop.permute.xlu0 %3727
      %v3730 = vadd.f32 %v3357, %v3728
      %v3731 = vtanh.pop %v3730
      %v3732 = vsub.f32 %v3637, %v3731
      %3734 = vrot.lane.b32.xlu0 %v3732, 96
      %v3735 = vpop.permute.xlu0 %3734
      %v3737 = vmul.f32 %v3719, %v3735
      %3739 = vrot.lane.b32.xlu0 %v3737, 32
      %v3740 = vpop.permute.xlu0 %3739
      %v3742 = vadd.f32 %v3731, %v3740
      %3744 = vrot.lane.b32.xlu0 %v3742, 64
      %v3745 = vpop.permute.xlu0 %3744
      %v3746 = vsel %vm3425, %v3745, 0
      %3748 = vmatprep.subr.mxu0 0.0
      %3749 = vmatpush1.msra.mxu0 %v215
      %3750 = vmatprep.subr.mxu0 0.0
      %3751 = vmatpush1.msra.mxu0 %v216
      %3752 = vmatprep.subr.mxu0 0.0
      %3753 = vmatpush1.msra.mxu0 %v217
      %3754 = vmatprep.subr.mxu0 0.0
      %3755 = vmatpush1.msra.mxu0 %v218
      %3756 = vmatprep.subr.mxu0 0.0
      %3757 = vmatpush1.msra.mxu0 0.0
      %3758 = vmatprep.subr.mxu0 0.0
      %3759 = vmatpush1.msra.mxu0 0.0
      %3760 = vmatprep.subr.mxu0 0.0
      %3761 = vmatpush1.msra.mxu0 0.0
      %3762 = vmatprep.subr.mxu0 0.0
      %3763 = vmatpush1.msra.mxu0 0.0
      %3764 = vmatprep.subr.mxu0 0.0
      %3765 = vmatpush1.msra.mxu0 0.0
      %3766 = vmatprep.subr.mxu0 0.0
      %3767 = vmatpush1.msra.mxu0 0.0
      %3768 = vmatprep.subr.mxu0 0.0
      %3769 = vmatpush1.msra.mxu0 0.0
      %3770 = vmatprep.subr.mxu0 0.0
      %3771 = vmatpush1.msra.mxu0 0.0
      %3772 = vmatprep.subr.mxu0 0.0
      %3773 = vmatpush1.msra.mxu0 0.0
      %3774 = vmatprep.subr.mxu0 0.0
      %3775 = vmatpush1.msra.mxu0 0.0
      %3776 = vmatprep.subr.mxu0 0.0
      %3777 = vmatpush1.msra.mxu0 0.0
      %3778 = vmatprep.subr.mxu0 0.0
      %3779 = vmatpush1.msra.mxu0 0.0
      %3780 = vmatprep.subr.mxu0 0.0
      %3781 = vmatpush1.msra.mxu0 0.0
      %3782 = vmatprep.subr.mxu0 0.0
      %3783 = vmatpush1.msra.mxu0 0.0
      %3784 = vmatprep.subr.mxu0 0.0
      %3785 = vmatpush1.msra.mxu0 0.0
      %3786 = vmatprep.subr.mxu0 0.0
      %3787 = vmatpush1.msra.mxu0 0.0
      %3788 = vmatprep.subr.mxu0 0.0
      %3789 = vmatpush1.msra.mxu0 0.0
      %3790 = vmatprep.subr.mxu0 0.0
      %3791 = vmatpush1.msra.mxu0 0.0
      %3792 = vmatprep.subr.mxu0 0.0
      %3793 = vmatpush1.msra.mxu0 0.0
      %3794 = vmatprep.subr.mxu0 0.0
      %3795 = vmatpush1.msra.mxu0 0.0
      %3796 = vmatprep.subr.mxu0 0.0
      %3797 = vmatpush1.msra.mxu0 0.0
      %3798 = vmatprep.subr.mxu0 0.0
      %3799 = vmatpush1.msra.mxu0 0.0
      %3800 = vmatprep.subr.mxu0 0.0
      %3801 = vmatpush1.msra.mxu0 0.0
      %3802 = vmatprep.subr.mxu0 0.0
      %3803 = vmatpush1.msra.mxu0 0.0
      %3804 = vmatprep.subr.mxu0 0.0
      %3805 = vmatpush1.msra.mxu0 0.0
      %3806 = vmatprep.subr.mxu0 0.0
      %3807 = vmatpush1.msra.mxu0 0.0
      %3808 = vmatprep.subr.mxu0 0.0
      %3809 = vmatpush1.msra.mxu0 0.0
      %3810 = vmatprep.subr.mxu0 0.0
      %3811 = vmatpush1.msra.mxu0 0.0
      %3812 = vmatprep.mubr.f32.mxu0 0.0
      %3813 = vmatmul.mubr.f32.gmra.mrb[0].mxu0 %v3746
      %v3814 = vpop.f32.mrb[0].mxu0
      %v3815 = vadd.f32 0.0, %v3814
      %v3816 = vpop.f32.mrb[0].mxu0
      %3817 = vdwg.mxu0
      %v3818 = vadd.f32 %v3362, %v3815
      %v3819 = vxor.u32 %v3818, 2147483648
      %v3820 = vmul.f32 %v3819, 1.442695
      %v3821 = vpow.pop %v3820
      %v3822 = vadd.f32 %v3821, 1.0
      %v3823 = vrcp.pop %v3822
      %v3824 = vmul.f32 1.0, %v3823
      %v3825 = vadd.f32 %v3815, %v3508
      %3827 = vrot.lane.b32.xlu0 %v3825, 64
      %v3828 = vpop.permute.xlu0 %3827
      %v3830 = vmul.f32 %v3824, %v3828
      %3832 = vrot.lane.b32.xlu0 %v3830, 64
      %v3833 = vpop.permute.xlu0 %3832
      %v3835 = vadd.f32 %v3362, %v3833
      %v3836 = vtanh.pop %v3835
      %v3837 = vsub.f32 %v3742, %v3836
      %3839 = vrot.lane.b32.xlu0 %v3837, 96
      %v3840 = vpop.permute.xlu0 %3839
      %v3842 = vmul.f32 %v3824, %v3840
      %3844 = vrot.lane.b32.xlu0 %v3842, 32
      %v3845 = vpop.permute.xlu0 %3844
      %v3847 = vadd.f32 %v3836, %v3845
      %3849 = vrot.lane.b32.xlu0 %v3847, 64
      %v3850 = vpop.permute.xlu0 %3849
      %v3851 = vsel %vm3425, %v3850, 0
      %3853 = vmatprep.subr.mxu0 0.0
      %3854 = vmatpush1.msra.mxu0 %v215
      %3855 = vmatprep.subr.mxu0 0.0
      %3856 = vmatpush1.msra.mxu0 %v216
      %3857 = vmatprep.subr.mxu0 0.0
      %3858 = vmatpush1.msra.mxu0 %v217
      %3859 = vmatprep.subr.mxu0 0.0
      %3860 = vmatpush1.msra.mxu0 %v218
      %3861 = vmatprep.subr.mxu0 0.0
      %3862 = vmatpush1.msra.mxu0 0.0
      %3863 = vmatprep.subr.mxu0 0.0
      %3864 = vmatpush1.msra.mxu0 0.0
      %3865 = vmatprep.subr.mxu0 0.0
      %3866 = vmatpush1.msra.mxu0 0.0
      %3867 = vmatprep.subr.mxu0 0.0
      %3868 = vmatpush1.msra.mxu0 0.0
      %3869 = vmatprep.subr.mxu0 0.0
      %3870 = vmatpush1.msra.mxu0 0.0
      %3871 = vmatprep.subr.mxu0 0.0
      %3872 = vmatpush1.msra.mxu0 0.0
      %3873 = vmatprep.subr.mxu0 0.0
      %3874 = vmatpush1.msra.mxu0 0.0
      %3875 = vmatprep.subr.mxu0 0.0
      %3876 = vmatpush1.msra.mxu0 0.0
      %3877 = vmatprep.subr.mxu0 0.0
      %3878 = vmatpush1.msra.mxu0 0.0
      %3879 = vmatprep.subr.mxu0 0.0
      %3880 = vmatpush1.msra.mxu0 0.0
      %3881 = vmatprep.subr.mxu0 0.0
      %3882 = vmatpush1.msra.mxu0 0.0
      %3883 = vmatprep.subr.mxu0 0.0
      %3884 = vmatpush1.msra.mxu0 0.0
      %3885 = vmatprep.subr.mxu0 0.0
      %3886 = vmatpush1.msra.mxu0 0.0
      %3887 = vmatprep.subr.mxu0 0.0
      %3888 = vmatpush1.msra.mxu0 0.0
      %3889 = vmatprep.subr.mxu0 0.0
      %3890 = vmatpush1.msra.mxu0 0.0
      %3891 = vmatprep.subr.mxu0 0.0
      %3892 = vmatpush1.msra.mxu0 0.0
      %3893 = vmatprep.subr.mxu0 0.0
      %3894 = vmatpush1.msra.mxu0 0.0
      %3895 = vmatprep.subr.mxu0 0.0
      %3896 = vmatpush1.msra.mxu0 0.0
      %3897 = vmatprep.subr.mxu0 0.0
      %3898 = vmatpush1.msra.mxu0 0.0
      %3899 = vmatprep.subr.mxu0 0.0
      %3900 = vmatpush1.msra.mxu0 0.0
      %3901 = vmatprep.subr.mxu0 0.0
      %3902 = vmatpush1.msra.mxu0 0.0
      %3903 = vmatprep.subr.mxu0 0.0
      %3904 = vmatpush1.msra.mxu0 0.0
      %3905 = vmatprep.subr.mxu0 0.0
      %3906 = vmatpush1.msra.mxu0 0.0
      %3907 = vmatprep.subr.mxu0 0.0
      %3908 = vmatpush1.msra.mxu0 0.0
      %3909 = vmatprep.subr.mxu0 0.0
      %3910 = vmatpush1.msra.mxu0 0.0
      %3911 = vmatprep.subr.mxu0 0.0
      %3912 = vmatpush1.msra.mxu0 0.0
      %3913 = vmatprep.subr.mxu0 0.0
      %3914 = vmatpush1.msra.mxu0 0.0
      %3915 = vmatprep.subr.mxu0 0.0
      %3916 = vmatpush1.msra.mxu0 0.0
      %3917 = vmatprep.mubr.f32.mxu0 0.0
      %3918 = vmatmul.mubr.f32.gmra.mrb[0].mxu0 %v3851
      %v3919 = vpop.f32.mrb[0].mxu0
      %v3920 = vadd.f32 0.0, %v3919
      %v3921 = vpop.f32.mrb[0].mxu0
      %3922 = vdwg.mxu0
      %v3923 = vadd.f32 %v3367, %v3920
      %v3924 = vxor.u32 %v3923, 2147483648
      %v3925 = vmul.f32 %v3924, 1.442695
      %v3926 = vpow.pop %v3925
      %v3927 = vadd.f32 %v3926, 1.0
      %v3928 = vrcp.pop %v3927
      %v3929 = vmul.f32 1.0, %v3928
      %v3930 = vadd.f32 %v3920, %v3508
      %3932 = vrot.lane.b32.xlu0 %v3930, 64
      %v3933 = vpop.permute.xlu0 %3932
      %v3935 = vmul.f32 %v3929, %v3933
      %3937 = vrot.lane.b32.xlu0 %v3935, 64
      %v3938 = vpop.permute.xlu0 %3937
      %v3940 = vadd.f32 %v3367, %v3938
      %v3941 = vtanh.pop %v3940
      %v3942 = vsub.f32 %v3847, %v3941
      %3944 = vrot.lane.b32.xlu0 %v3942, 96
      %v3945 = vpop.permute.xlu0 %3944
      %v3947 = vmul.f32 %v3929, %v3945
      %3949 = vrot.lane.b32.xlu0 %v3947, 32
      %v3950 = vpop.permute.xlu0 %3949
      %v3952 = vadd.f32 %v3941, %v3950
      %3954 = vrot.lane.b32.xlu0 %v3952, 64
      %v3955 = vpop.permute.xlu0 %3954
      %v3956 = vsel %vm3425, %v3955, 0
      %3958 = vmatprep.subr.mxu0 0.0
      %3959 = vmatpush1.msra.mxu0 %v215
      %3960 = vmatprep.subr.mxu0 0.0
      %3961 = vmatpush1.msra.mxu0 %v216
      %3962 = vmatprep.subr.mxu0 0.0
      %3963 = vmatpush1.msra.mxu0 %v217
      %3964 = vmatprep.subr.mxu0 0.0
      %3965 = vmatpush1.msra.mxu0 %v218
      %3966 = vmatprep.subr.mxu0 0.0
      %3967 = vmatpush1.msra.mxu0 0.0
      %3968 = vmatprep.subr.mxu0 0.0
      %3969 = vmatpush1.msra.mxu0 0.0
      %3970 = vmatprep.subr.mxu0 0.0
      %3971 = vmatpush1.msra.mxu0 0.0
      %3972 = vmatprep.subr.mxu0 0.0
      %3973 = vmatpush1.msra.mxu0 0.0
      %3974 = vmatprep.subr.mxu0 0.0
      %3975 = vmatpush1.msra.mxu0 0.0
      %3976 = vmatprep.subr.mxu0 0.0
      %3977 = vmatpush1.msra.mxu0 0.0
      %3978 = vmatprep.subr.mxu0 0.0
      %3979 = vmatpush1.msra.mxu0 0.0
      %3980 = vmatprep.subr.mxu0 0.0
      %3981 = vmatpush1.msra.mxu0 0.0
      %3982 = vmatprep.subr.mxu0 0.0
      %3983 = vmatpush1.msra.mxu0 0.0
      %3984 = vmatprep.subr.mxu0 0.0
      %3985 = vmatpush1.msra.mxu0 0.0
      %3986 = vmatprep.subr.mxu0 0.0
      %3987 = vmatpush1.msra.mxu0 0.0
      %3988 = vmatprep.subr.mxu0 0.0
      %3989 = vmatpush1.msra.mxu0 0.0
      %3990 = vmatprep.subr.mxu0 0.0
      %3991 = vmatpush1.msra.mxu0 0.0
      %3992 = vmatprep.subr.mxu0 0.0
      %3993 = vmatpush1.msra.mxu0 0.0
      %3994 = vmatprep.subr.mxu0 0.0
      %3995 = vmatpush1.msra.mxu0 0.0
      %3996 = vmatprep.subr.mxu0 0.0
      %3997 = vmatpush1.msra.mxu0 0.0
      %3998 = vmatprep.subr.mxu0 0.0
      %3999 = vmatpush1.msra.mxu0 0.0
      %4000 = vmatprep.subr.mxu0 0.0
      %4001 = vmatpush1.msra.mxu0 0.0
      %4002 = vmatprep.subr.mxu0 0.0
      %4003 = vmatpush1.msra.mxu0 0.0
      %4004 = vmatprep.subr.mxu0 0.0
      %4005 = vmatpush1.msra.mxu0 0.0
      %4006 = vmatprep.subr.mxu0 0.0
      %4007 = vmatpush1.msra.mxu0 0.0
      %4008 = vmatprep.subr.mxu0 0.0
      %4009 = vmatpush1.msra.mxu0 0.0
      %4010 = vmatprep.subr.mxu0 0.0
      %4011 = vmatpush1.msra.mxu0 0.0
      %4012 = vmatprep.subr.mxu0 0.0
      %4013 = vmatpush1.msra.mxu0 0.0
      %4014 = vmatprep.subr.mxu0 0.0
      %4015 = vmatpush1.msra.mxu0 0.0
      %4016 = vmatprep.subr.mxu0 0.0
      %4017 = vmatpush1.msra.mxu0 0.0
      %4018 = vmatprep.subr.mxu0 0.0
      %4019 = vmatpush1.msra.mxu0 0.0
      %4020 = vmatprep.subr.mxu0 0.0
      %4021 = vmatpush1.msra.mxu0 0.0
      %4022 = vmatprep.mubr.f32.mxu0 0.0
      %4023 = vmatmul.mubr.f32.gmra.mrb[0].mxu0 %v3956
      %v4024 = vpop.f32.mrb[0].mxu0
      %v4025 = vadd.f32 0.0, %v4024
      %v4026 = vpop.f32.mrb[0].mxu0
      %4027 = vdwg.mxu0
      %v4028 = vadd.f32 %v3372, %v4025
      %v4029 = vxor.u32 %v4028, 2147483648
      %v4030 = vmul.f32 %v4029, 1.442695
      %v4031 = vpow.pop %v4030
      %v4032 = vadd.f32 %v4031, 1.0
      %v4033 = vrcp.pop %v4032
      %v4034 = vmul.f32 1.0, %v4033
      %v4035 = vadd.f32 %v4025, %v3508
      %4037 = vrot.lane.b32.xlu0 %v4035, 64
      %v4038 = vpop.permute.xlu0 %4037
      %v4040 = vmul.f32 %v4034, %v4038
      %4042 = vrot.lane.b32.xlu0 %v4040, 64
      %v4043 = vpop.permute.xlu0 %4042
      %v4045 = vadd.f32 %v3372, %v4043
      %v4046 = vtanh.pop %v4045
      %v4047 = vsub.f32 %v3952, %v4046
      %4049 = vrot.lane.b32.xlu0 %v4047, 96
      %v4050 = vpop.permute.xlu0 %4049
      %v4052 = vmul.f32 %v4034, %v4050
      %4054 = vrot.lane.b32.xlu0 %v4052, 32
      %v4055 = vpop.permute.xlu0 %4054
      %v4057 = vadd.f32 %v4046, %v4055
      %4059 = vrot.lane.b32.xlu0 %v4057, 64
      %v4060 = vpop.permute.xlu0 %4059
      %v4061 = vsel %vm3425, %v4060, 0
      %4063 = vmatprep.subr.mxu0 0.0
      %4064 = vmatpush1.msra.mxu0 %v215
      %4065 = vmatprep.subr.mxu0 0.0
      %4066 = vmatpush1.msra.mxu0 %v216
      %4067 = vmatprep.subr.mxu0 0.0
      %4068 = vmatpush1.msra.mxu0 %v217
      %4069 = vmatprep.subr.mxu0 0.0
      %4070 = vmatpush1.msra.mxu0 %v218
      %4071 = vmatprep.subr.mxu0 0.0
      %4072 = vmatpush1.msra.mxu0 0.0
      %4073 = vmatprep.subr.mxu0 0.0
      %4074 = vmatpush1.msra.mxu0 0.0
      %4075 = vmatprep.subr.mxu0 0.0
      %4076 = vmatpush1.msra.mxu0 0.0
      %4077 = vmatprep.subr.mxu0 0.0
      %4078 = vmatpush1.msra.mxu0 0.0
      %4079 = vmatprep.subr.mxu0 0.0
      %4080 = vmatpush1.msra.mxu0 0.0
      %4081 = vmatprep.subr.mxu0 0.0
      %4082 = vmatpush1.msra.mxu0 0.0
      %4083 = vmatprep.subr.mxu0 0.0
      %4084 = vmatpush1.msra.mxu0 0.0
      %4085 = vmatprep.subr.mxu0 0.0
      %4086 = vmatpush1.msra.mxu0 0.0
      %4087 = vmatprep.subr.mxu0 0.0
      %4088 = vmatpush1.msra.mxu0 0.0
      %4089 = vmatprep.subr.mxu0 0.0
      %4090 = vmatpush1.msra.mxu0 0.0
      %4091 = vmatprep.subr.mxu0 0.0
      %4092 = vmatpush1.msra.mxu0 0.0
      %4093 = vmatprep.subr.mxu0 0.0
      %4094 = vmatpush1.msra.mxu0 0.0
      %4095 = vmatprep.subr.mxu0 0.0
      %4096 = vmatpush1.msra.mxu0 0.0
      %4097 = vmatprep.subr.mxu0 0.0
      %4098 = vmatpush1.msra.mxu0 0.0
      %4099 = vmatprep.subr.mxu0 0.0
      %4100 = vmatpush1.msra.mxu0 0.0
      %4101 = vmatprep.subr.mxu0 0.0
      %4102 = vmatpush1.msra.mxu0 0.0
      %4103 = vmatprep.subr.mxu0 0.0
      %4104 = vmatpush1.msra.mxu0 0.0
      %4105 = vmatprep.subr.mxu0 0.0
      %4106 = vmatpush1.msra.mxu0 0.0
      %4107 = vmatprep.subr.mxu0 0.0
      %4108 = vmatpush1.msra.mxu0 0.0
      %4109 = vmatprep.subr.mxu0 0.0
      %4110 = vmatpush1.msra.mxu0 0.0
      %4111 = vmatprep.subr.mxu0 0.0
      %4112 = vmatpush1.msra.mxu0 0.0
      %4113 = vmatprep.subr.mxu0 0.0
      %4114 = vmatpush1.msra.mxu0 0.0
      %4115 = vmatprep.subr.mxu0 0.0
      %4116 = vmatpush1.msra.mxu0 0.0
      %4117 = vmatprep.subr.mxu0 0.0
      %4118 = vmatpush1.msra.mxu0 0.0
      %4119 = vmatprep.subr.mxu0 0.0
      %4120 = vmatpush1.msra.mxu0 0.0
      %4121 = vmatprep.subr.mxu0 0.0
      %4122 = vmatpush1.msra.mxu0 0.0
      %4123 = vmatprep.subr.mxu0 0.0
      %4124 = vmatpush1.msra.mxu0 0.0
      %4125 = vmatprep.subr.mxu0 0.0
      %4126 = vmatpush1.msra.mxu0 0.0
      %4127 = vmatprep.mubr.f32.mxu0 0.0
      %4128 = vmatmul.mubr.f32.gmra.mrb[0].mxu0 %v4061
      %v4129 = vpop.f32.mrb[0].mxu0
      %v4130 = vadd.f32 0.0, %v4129
      %v4131 = vpop.f32.mrb[0].mxu0
      %4132 = vdwg.mxu0
      %v4133 = vadd.f32 %v3377, %v4130
      %v4134 = vxor.u32 %v4133, 2147483648
      %v4135 = vmul.f32 %v4134, 1.442695
      %v4136 = vpow.pop %v4135
      %v4137 = vadd.f32 %v4136, 1.0
      %v4138 = vrcp.pop %v4137
      %v4139 = vmul.f32 1.0, %v4138
      %v4140 = vadd.f32 %v4130, %v3508
      %4142 = vrot.lane.b32.xlu0 %v4140, 64
      %v4143 = vpop.permute.xlu0 %4142
      %v4145 = vmul.f32 %v4139, %v4143
      %4147 = vrot.lane.b32.xlu0 %v4145, 64
      %v4148 = vpop.permute.xlu0 %4147
      %v4150 = vadd.f32 %v3377, %v4148
      %v4151 = vtanh.pop %v4150
      %v4152 = vsub.f32 %v4057, %v4151
      %4154 = vrot.lane.b32.xlu0 %v4152, 96
      %v4155 = vpop.permute.xlu0 %4154
      %v4157 = vmul.f32 %v4139, %v4155
      %4159 = vrot.lane.b32.xlu0 %v4157, 32
      %v4160 = vpop.permute.xlu0 %4159
      %v4162 = vadd.f32 %v4151, %v4160
      %4164 = vrot.lane.b32.xlu0 %v4162, 64
      %v4165 = vpop.permute.xlu0 %4164
      %v4166 = vsel %vm3425, %v4165, 0
      %4168 = vmatprep.subr.mxu0 0.0
      %4169 = vmatpush1.msra.mxu0 %v215
      %4170 = vmatprep.subr.mxu0 0.0
      %4171 = vmatpush1.msra.mxu0 %v216
      %4172 = vmatprep.subr.mxu0 0.0
      %4173 = vmatpush1.msra.mxu0 %v217
      %4174 = vmatprep.subr.mxu0 0.0
      %4175 = vmatpush1.msra.mxu0 %v218
      %4176 = vmatprep.subr.mxu0 0.0
      %4177 = vmatpush1.msra.mxu0 0.0
      %4178 = vmatprep.subr.mxu0 0.0
      %4179 = vmatpush1.msra.mxu0 0.0
      %4180 = vmatprep.subr.mxu0 0.0
      %4181 = vmatpush1.msra.mxu0 0.0
      %4182 = vmatprep.subr.mxu0 0.0
      %4183 = vmatpush1.msra.mxu0 0.0
      %4184 = vmatprep.subr.mxu0 0.0
      %4185 = vmatpush1.msra.mxu0 0.0
      %4186 = vmatprep.subr.mxu0 0.0
      %4187 = vmatpush1.msra.mxu0 0.0
      %4188 = vmatprep.subr.mxu0 0.0
      %4189 = vmatpush1.msra.mxu0 0.0
      %4190 = vmatprep.subr.mxu0 0.0
      %4191 = vmatpush1.msra.mxu0 0.0
      %4192 = vmatprep.subr.mxu0 0.0
      %4193 = vmatpush1.msra.mxu0 0.0
      %4194 = vmatprep.subr.mxu0 0.0
      %4195 = vmatpush1.msra.mxu0 0.0
      %4196 = vmatprep.subr.mxu0 0.0
      %4197 = vmatpush1.msra.mxu0 0.0
      %4198 = vmatprep.subr.mxu0 0.0
      %4199 = vmatpush1.msra.mxu0 0.0
      %4200 = vmatprep.subr.mxu0 0.0
      %4201 = vmatpush1.msra.mxu0 0.0
      %4202 = vmatprep.subr.mxu0 0.0
      %4203 = vmatpush1.msra.mxu0 0.0
      %4204 = vmatprep.subr.mxu0 0.0
      %4205 = vmatpush1.msra.mxu0 0.0
      %4206 = vmatprep.subr.mxu0 0.0
      %4207 = vmatpush1.msra.mxu0 0.0
      %4208 = vmatprep.subr.mxu0 0.0
      %4209 = vmatpush1.msra.mxu0 0.0
      %4210 = vmatprep.subr.mxu0 0.0
      %4211 = vmatpush1.msra.mxu0 0.0
      %4212 = vmatprep.subr.mxu0 0.0
      %4213 = vmatpush1.msra.mxu0 0.0
      %4214 = vmatprep.subr.mxu0 0.0
      %4215 = vmatpush1.msra.mxu0 0.0
      %4216 = vmatprep.subr.mxu0 0.0
      %4217 = vmatpush1.msra.mxu0 0.0
      %4218 = vmatprep.subr.mxu0 0.0
      %4219 = vmatpush1.msra.mxu0 0.0
      %4220 = vmatprep.subr.mxu0 0.0
      %4221 = vmatpush1.msra.mxu0 0.0
      %4222 = vmatprep.subr.mxu0 0.0
      %4223 = vmatpush1.msra.mxu0 0.0
      %4224 = vmatprep.subr.mxu0 0.0
      %4225 = vmatpush1.msra.mxu0 0.0
      %4226 = vmatprep.subr.mxu0 0.0
      %4227 = vmatpush1.msra.mxu0 0.0
      %4228 = vmatprep.subr.mxu0 0.0
      %4229 = vmatpush1.msra.mxu0 0.0
      %4230 = vmatprep.subr.mxu0 0.0
      %4231 = vmatpush1.msra.mxu0 0.0
      %4232 = vmatprep.mubr.f32.mxu0 0.0
      %4233 = vmatmul.mubr.f32.gmra.mrb[0].mxu0 %v4166
      %v4234 = vpop.f32.mrb[0].mxu0
      %v4235 = vadd.f32 0.0, %v4234
      %v4236 = vpop.f32.mrb[0].mxu0
      %4237 = vdwg.mxu0
      %v4238 = vadd.f32 %v3382, %v4235
      %v4239 = vxor.u32 %v4238, 2147483648
      %v4240 = vmul.f32 %v4239, 1.442695
      %v4241 = vpow.pop %v4240
      %v4242 = vadd.f32 %v4241, 1.0
      %v4243 = vrcp.pop %v4242
      %v4244 = vmul.f32 1.0, %v4243
      %v4245 = vadd.f32 %v4235, %v3508
      %4247 = vrot.lane.b32.xlu0 %v4245, 64
      %v4248 = vpop.permute.xlu0 %4247
      %v4250 = vmul.f32 %v4244, %v4248
      %4252 = vrot.lane.b32.xlu0 %v4250, 64
      %v4253 = vpop.permute.xlu0 %4252
      %v4255 = vadd.f32 %v3382, %v4253
      %v4256 = vtanh.pop %v4255
      %v4257 = vsub.f32 %v4162, %v4256
      %4259 = vrot.lane.b32.xlu0 %v4257, 96
      %v4260 = vpop.permute.xlu0 %4259
      %v4262 = vmul.f32 %v4244, %v4260
      %4264 = vrot.lane.b32.xlu0 %v4262, 32
      %v4265 = vpop.permute.xlu0 %4264
      %v4267 = vadd.f32 %v4256, %v4265
      %4269 = vrot.lane.b32.xlu0 %v4267, 64
      %v4270 = vpop.permute.xlu0 %4269
      %v4271 = vsel %vm3425, %v4270, 0
      %4273 = vmatprep.subr.mxu0 0.0
      %4274 = vmatpush1.msra.mxu0 %v215
      %4275 = vmatprep.subr.mxu0 0.0
      %4276 = vmatpush1.msra.mxu0 %v216
      %4277 = vmatprep.subr.mxu0 0.0
      %4278 = vmatpush1.msra.mxu0 %v217
      %4279 = vmatprep.subr.mxu0 0.0
      %4280 = vmatpush1.msra.mxu0 %v218
      %4281 = vmatprep.subr.mxu0 0.0
      %4282 = vmatpush1.msra.mxu0 0.0
      %4283 = vmatprep.subr.mxu0 0.0
      %4284 = vmatpush1.msra.mxu0 0.0
      %4285 = vmatprep.subr.mxu0 0.0
      %4286 = vmatpush1.msra.mxu0 0.0
      %4287 = vmatprep.subr.mxu0 0.0
      %4288 = vmatpush1.msra.mxu0 0.0
      %4289 = vmatprep.subr.mxu0 0.0
      %4290 = vmatpush1.msra.mxu0 0.0
      %4291 = vmatprep.subr.mxu0 0.0
      %4292 = vmatpush1.msra.mxu0 0.0
      %4293 = vmatprep.subr.mxu0 0.0
      %4294 = vmatpush1.msra.mxu0 0.0
      %4295 = vmatprep.subr.mxu0 0.0
      %4296 = vmatpush1.msra.mxu0 0.0
      %4297 = vmatprep.subr.mxu0 0.0
      %4298 = vmatpush1.msra.mxu0 0.0
      %4299 = vmatprep.subr.mxu0 0.0
      %4300 = vmatpush1.msra.mxu0 0.0
      %4301 = vmatprep.subr.mxu0 0.0
      %4302 = vmatpush1.msra.mxu0 0.0
      %4303 = vmatprep.subr.mxu0 0.0
      %4304 = vmatpush1.msra.mxu0 0.0
      %4305 = vmatprep.subr.mxu0 0.0
      %4306 = vmatpush1.msra.mxu0 0.0
      %4307 = vmatprep.subr.mxu0 0.0
      %4308 = vmatpush1.msra.mxu0 0.0
      %4309 = vmatprep.subr.mxu0 0.0
      %4310 = vmatpush1.msra.mxu0 0.0
      %4311 = vmatprep.subr.mxu0 0.0
      %4312 = vmatpush1.msra.mxu0 0.0
      %4313 = vmatprep.subr.mxu0 0.0
      %4314 = vmatpush1.msra.mxu0 0.0
      %4315 = vmatprep.subr.mxu0 0.0
      %4316 = vmatpush1.msra.mxu0 0.0
      %4317 = vmatprep.subr.mxu0 0.0
      %4318 = vmatpush1.msra.mxu0 0.0
      %4319 = vmatprep.subr.mxu0 0.0
      %4320 = vmatpush1.msra.mxu0 0.0
      %4321 = vmatprep.subr.mxu0 0.0
      %4322 = vmatpush1.msra.mxu0 0.0
      %4323 = vmatprep.subr.mxu0 0.0
      %4324 = vmatpush1.msra.mxu0 0.0
      %4325 = vmatprep.subr.mxu0 0.0
      %4326 = vmatpush1.msra.mxu0 0.0
      %4327 = vmatprep.subr.mxu0 0.0
      %4328 = vmatpush1.msra.mxu0 0.0
      %4329 = vmatprep.subr.mxu0 0.0
      %4330 = vmatpush1.msra.mxu0 0.0
      %4331 = vmatprep.subr.mxu0 0.0
      %4332 = vmatpush1.msra.mxu0 0.0
      %4333 = vmatprep.subr.mxu0 0.0
      %4334 = vmatpush1.msra.mxu0 0.0
      %4335 = vmatprep.subr.mxu0 0.0
      %4336 = vmatpush1.msra.mxu0 0.0
      %4337 = vmatprep.mubr.f32.mxu0 0.0
      %4338 = vmatmul.mubr.f32.gmra.mrb[0].mxu0 %v4271
      %v4339 = vpop.f32.mrb[0].mxu0
      %v4340 = vadd.f32 0.0, %v4339
      %v4341 = vpop.f32.mrb[0].mxu0
      %4342 = vdwg.mxu0
      %v4343 = vadd.f32 %v3387, %v4340
      %v4344 = vxor.u32 %v4343, 2147483648
      %v4345 = vmul.f32 %v4344, 1.442695
      %v4346 = vpow.pop %v4345
      %v4347 = vadd.f32 %v4346, 1.0
      %v4348 = vrcp.pop %v4347
      %v4349 = vmul.f32 1.0, %v4348
      %v4350 = vadd.f32 %v4340, %v3508
      %4352 = vrot.lane.b32.xlu0 %v4350, 64
      %v4353 = vpop.permute.xlu0 %4352
      %v4355 = vmul.f32 %v4349, %v4353
      %4357 = vrot.lane.b32.xlu0 %v4355, 64
      %v4358 = vpop.permute.xlu0 %4357
      %v4360 = vadd.f32 %v3387, %v4358
      %v4361 = vtanh.pop %v4360
      %v4362 = vsub.f32 %v4267, %v4361
      %4364 = vrot.lane.b32.xlu0 %v4362, 96
      %v4365 = vpop.permute.xlu0 %4364
      %v4367 = vmul.f32 %v4349, %v4365
      %4369 = vrot.lane.b32.xlu0 %v4367, 32
      %v4370 = vpop.permute.xlu0 %4369
      %v4372 = vadd.f32 %v4361, %v4370
      %4374 = vrot.lane.b32.xlu0 %v4372, 64
      %v4375 = vpop.permute.xlu0 %4374
      %v4376 = vsel %vm3425, %v4375, 0
      %4378 = vmatprep.subr.mxu0 0.0
      %4379 = vmatpush1.msra.mxu0 %v215
      %4380 = vmatprep.subr.mxu0 0.0
      %4381 = vmatpush1.msra.mxu0 %v216
      %4382 = vmatprep.subr.mxu0 0.0
      %4383 = vmatpush1.msra.mxu0 %v217
      %4384 = vmatprep.subr.mxu0 0.0
      %4385 = vmatpush1.msra.mxu0 %v218
      %4386 = vmatprep.subr.mxu0 0.0
      %4387 = vmatpush1.msra.mxu0 0.0
      %4388 = vmatprep.subr.mxu0 0.0
      %4389 = vmatpush1.msra.mxu0 0.0
      %4390 = vmatprep.subr.mxu0 0.0
      %4391 = vmatpush1.msra.mxu0 0.0
      %4392 = vmatprep.subr.mxu0 0.0
      %4393 = vmatpush1.msra.mxu0 0.0
      %4394 = vmatprep.subr.mxu0 0.0
      %4395 = vmatpush1.msra.mxu0 0.0
      %4396 = vmatprep.subr.mxu0 0.0
      %4397 = vmatpush1.msra.mxu0 0.0
      %4398 = vmatprep.subr.mxu0 0.0
      %4399 = vmatpush1.msra.mxu0 0.0
      %4400 = vmatprep.subr.mxu0 0.0
      %4401 = vmatpush1.msra.mxu0 0.0
      %4402 = vmatprep.subr.mxu0 0.0
      %4403 = vmatpush1.msra.mxu0 0.0
      %4404 = vmatprep.subr.mxu0 0.0
      %4405 = vmatpush1.msra.mxu0 0.0
      %4406 = vmatprep.subr.mxu0 0.0
      %4407 = vmatpush1.msra.mxu0 0.0
      %4408 = vmatprep.subr.mxu0 0.0
      %4409 = vmatpush1.msra.mxu0 0.0
      %4410 = vmatprep.subr.mxu0 0.0
      %4411 = vmatpush1.msra.mxu0 0.0
      %4412 = vmatprep.subr.mxu0 0.0
      %4413 = vmatpush1.msra.mxu0 0.0
      %4414 = vmatprep.subr.mxu0 0.0
      %4415 = vmatpush1.msra.mxu0 0.0
      %4416 = vmatprep.subr.mxu0 0.0
      %4417 = vmatpush1.msra.mxu0 0.0
      %4418 = vmatprep.subr.mxu0 0.0
      %4419 = vmatpush1.msra.mxu0 0.0
      %4420 = vmatprep.subr.mxu0 0.0
      %4421 = vmatpush1.msra.mxu0 0.0
      %4422 = vmatprep.subr.mxu0 0.0
      %4423 = vmatpush1.msra.mxu0 0.0
      %4424 = vmatprep.subr.mxu0 0.0
      %4425 = vmatpush1.msra.mxu0 0.0
      %4426 = vmatprep.subr.mxu0 0.0
      %4427 = vmatpush1.msra.mxu0 0.0
      %4428 = vmatprep.subr.mxu0 0.0
      %4429 = vmatpush1.msra.mxu0 0.0
      %4430 = vmatprep.subr.mxu0 0.0
      %4431 = vmatpush1.msra.mxu0 0.0
      %4432 = vmatprep.subr.mxu0 0.0
      %4433 = vmatpush1.msra.mxu0 0.0
      %4434 = vmatprep.subr.mxu0 0.0
      %4435 = vmatpush1.msra.mxu0 0.0
      %4436 = vmatprep.subr.mxu0 0.0
      %4437 = vmatpush1.msra.mxu0 0.0
      %4438 = vmatprep.subr.mxu0 0.0
      %4439 = vmatpush1.msra.mxu0 0.0
      %4440 = vmatprep.subr.mxu0 0.0
      %4441 = vmatpush1.msra.mxu0 0.0
      %4442 = vmatprep.mubr.f32.mxu0 0.0
      %4443 = vmatmul.mubr.f32.gmra.mrb[0].mxu0 %v4376
      %v4444 = vpop.f32.mrb[0].mxu0
      %v4445 = vadd.f32 0.0, %v4444
      %v4446 = vpop.f32.mrb[0].mxu0
      %4447 = vdwg.mxu0
      %v4448 = vadd.f32 %v3392, %v4445
      %v4449 = vxor.u32 %v4448, 2147483648
      %v4450 = vmul.f32 %v4449, 1.442695
      %v4451 = vpow.pop %v4450
      %v4452 = vadd.f32 %v4451, 1.0
      %v4453 = vrcp.pop %v4452
      %v4454 = vmul.f32 1.0, %v4453
      %v4455 = vadd.f32 %v4445, %v3508
      %4457 = vrot.lane.b32.xlu0 %v4455, 64
      %v4458 = vpop.permute.xlu0 %4457
      %v4460 = vmul.f32 %v4454, %v4458
      %4462 = vrot.lane.b32.xlu0 %v4460, 64
      %v4463 = vpop.permute.xlu0 %4462
      %v4465 = vadd.f32 %v3392, %v4463
      %v4466 = vtanh.pop %v4465
      %v4467 = vsub.f32 %v4372, %v4466
      %4469 = vrot.lane.b32.xlu0 %v4467, 96
      %v4470 = vpop.permute.xlu0 %4469
      %v4472 = vmul.f32 %v4454, %v4470
      %4474 = vrot.lane.b32.xlu0 %v4472, 32
      %v4475 = vpop.permute.xlu0 %4474
      %v4477 = vadd.f32 %v4466, %v4475
      %4479 = vrot.lane.b32.xlu0 %v4477, 64
      %v4480 = vpop.permute.xlu0 %4479
      %v4481 = vsel %vm3425, %v4480, 0
      %4483 = vmatprep.subr.mxu0 0.0
      %4484 = vmatpush1.msra.mxu0 %v215
      %4485 = vmatprep.subr.mxu0 0.0
      %4486 = vmatpush1.msra.mxu0 %v216
      %4487 = vmatprep.subr.mxu0 0.0
      %4488 = vmatpush1.msra.mxu0 %v217
      %4489 = vmatprep.subr.mxu0 0.0
      %4490 = vmatpush1.msra.mxu0 %v218
      %4491 = vmatprep.subr.mxu0 0.0
      %4492 = vmatpush1.msra.mxu0 0.0
      %4493 = vmatprep.subr.mxu0 0.0
      %4494 = vmatpush1.msra.mxu0 0.0
      %4495 = vmatprep.subr.mxu0 0.0
      %4496 = vmatpush1.msra.mxu0 0.0
      %4497 = vmatprep.subr.mxu0 0.0
      %4498 = vmatpush1.msra.mxu0 0.0
      %4499 = vmatprep.subr.mxu0 0.0
      %4500 = vmatpush1.msra.mxu0 0.0
      %4501 = vmatprep.subr.mxu0 0.0
      %4502 = vmatpush1.msra.mxu0 0.0
      %4503 = vmatprep.subr.mxu0 0.0
      %4504 = vmatpush1.msra.mxu0 0.0
      %4505 = vmatprep.subr.mxu0 0.0
      %4506 = vmatpush1.msra.mxu0 0.0
      %4507 = vmatprep.subr.mxu0 0.0
      %4508 = vmatpush1.msra.mxu0 0.0
      %4509 = vmatprep.subr.mxu0 0.0
      %4510 = vmatpush1.msra.mxu0 0.0
      %4511 = vmatprep.subr.mxu0 0.0
      %4512 = vmatpush1.msra.mxu0 0.0
      %4513 = vmatprep.subr.mxu0 0.0
      %4514 = vmatpush1.msra.mxu0 0.0
      %4515 = vmatprep.subr.mxu0 0.0
      %4516 = vmatpush1.msra.mxu0 0.0
      %4517 = vmatprep.subr.mxu0 0.0
      %4518 = vmatpush1.msra.mxu0 0.0
      %4519 = vmatprep.subr.mxu0 0.0
      %4520 = vmatpush1.msra.mxu0 0.0
      %4521 = vmatprep.subr.mxu0 0.0
      %4522 = vmatpush1.msra.mxu0 0.0
      %4523 = vmatprep.subr.mxu0 0.0
      %4524 = vmatpush1.msra.mxu0 0.0
      %4525 = vmatprep.subr.mxu0 0.0
      %4526 = vmatpush1.msra.mxu0 0.0
      %4527 = vmatprep.subr.mxu0 0.0
      %4528 = vmatpush1.msra.mxu0 0.0
      %4529 = vmatprep.subr.mxu0 0.0
      %4530 = vmatpush1.msra.mxu0 0.0
      %4531 = vmatprep.subr.mxu0 0.0
      %4532 = vmatpush1.msra.mxu0 0.0
      %4533 = vmatprep.subr.mxu0 0.0
      %4534 = vmatpush1.msra.mxu0 0.0
      %4535 = vmatprep.subr.mxu0 0.0
      %4536 = vmatpush1.msra.mxu0 0.0
      %4537 = vmatprep.subr.mxu0 0.0
      %4538 = vmatpush1.msra.mxu0 0.0
      %4539 = vmatprep.subr.mxu0 0.0
      %4540 = vmatpush1.msra.mxu0 0.0
      %4541 = vmatprep.subr.mxu0 0.0
      %4542 = vmatpush1.msra.mxu0 0.0
      %4543 = vmatprep.subr.mxu0 0.0
      %4544 = vmatpush1.msra.mxu0 0.0
      %4545 = vmatprep.subr.mxu0 0.0
      %4546 = vmatpush1.msra.mxu0 0.0
      %4547 = vmatprep.mubr.f32.mxu0 0.0
      %4548 = vmatmul.mubr.f32.gmra.mrb[0].mxu0 %v4481
      %v4549 = vpop.f32.mrb[0].mxu0
      %v4550 = vadd.f32 0.0, %v4549
      %v4551 = vpop.f32.mrb[0].mxu0
      %4552 = vdwg.mxu0
      %v4553 = vadd.f32 %v3397, %v4550
      %v4554 = vxor.u32 %v4553, 2147483648
      %v4555 = vmul.f32 %v4554, 1.442695
      %v4556 = vpow.pop %v4555
      %v4557 = vadd.f32 %v4556, 1.0
      %v4558 = vrcp.pop %v4557
      %v4559 = vmul.f32 1.0, %v4558
      %v4560 = vadd.f32 %v4550, %v3508
      %4562 = vrot.lane.b32.xlu0 %v4560, 64
      %v4563 = vpop.permute.xlu0 %4562
      %v4565 = vmul.f32 %v4559, %v4563
      %4567 = vrot.lane.b32.xlu0 %v4565, 64
      %v4568 = vpop.permute.xlu0 %4567
      %v4570 = vadd.f32 %v3397, %v4568
      %v4571 = vtanh.pop %v4570
      %v4572 = vsub.f32 %v4477, %v4571
      %4574 = vrot.lane.b32.xlu0 %v4572, 96
      %v4575 = vpop.permute.xlu0 %4574
      %v4577 = vmul.f32 %v4559, %v4575
      %4579 = vrot.lane.b32.xlu0 %v4577, 32
      %v4580 = vpop.permute.xlu0 %4579
      %v4582 = vadd.f32 %v4571, %v4580
      %4584 = vrot.lane.b32.xlu0 %v4582, 64
      %v4585 = vpop.permute.xlu0 %4584
      %v4586 = vsel %vm3425, %v4585, 0
      %4588 = vmatprep.subr.mxu0 0.0
      %4589 = vmatpush1.msra.mxu0 %v215
      %4590 = vmatprep.subr.mxu0 0.0
      %4591 = vmatpush1.msra.mxu0 %v216
      %4592 = vmatprep.subr.mxu0 0.0
      %4593 = vmatpush1.msra.mxu0 %v217
      %4594 = vmatprep.subr.mxu0 0.0
      %4595 = vmatpush1.msra.mxu0 %v218
      %4596 = vmatprep.subr.mxu0 0.0
      %4597 = vmatpush1.msra.mxu0 0.0
      %4598 = vmatprep.subr.mxu0 0.0
      %4599 = vmatpush1.msra.mxu0 0.0
      %4600 = vmatprep.subr.mxu0 0.0
      %4601 = vmatpush1.msra.mxu0 0.0
      %4602 = vmatprep.subr.mxu0 0.0
      %4603 = vmatpush1.msra.mxu0 0.0
      %4604 = vmatprep.subr.mxu0 0.0
      %4605 = vmatpush1.msra.mxu0 0.0
      %4606 = vmatprep.subr.mxu0 0.0
      %4607 = vmatpush1.msra.mxu0 0.0
      %4608 = vmatprep.subr.mxu0 0.0
      %4609 = vmatpush1.msra.mxu0 0.0
      %4610 = vmatprep.subr.mxu0 0.0
      %4611 = vmatpush1.msra.mxu0 0.0
      %4612 = vmatprep.subr.mxu0 0.0
      %4613 = vmatpush1.msra.mxu0 0.0
      %4614 = vmatprep.subr.mxu0 0.0
      %4615 = vmatpush1.msra.mxu0 0.0
      %4616 = vmatprep.subr.mxu0 0.0
      %4617 = vmatpush1.msra.mxu0 0.0
      %4618 = vmatprep.subr.mxu0 0.0
      %4619 = vmatpush1.msra.mxu0 0.0
      %4620 = vmatprep.subr.mxu0 0.0
      %4621 = vmatpush1.msra.mxu0 0.0
      %4622 = vmatprep.subr.mxu0 0.0
      %4623 = vmatpush1.msra.mxu0 0.0
      %4624 = vmatprep.subr.mxu0 0.0
      %4625 = vmatpush1.msra.mxu0 0.0
      %4626 = vmatprep.subr.mxu0 0.0
      %4627 = vmatpush1.msra.mxu0 0.0
      %4628 = vmatprep.subr.mxu0 0.0
      %4629 = vmatpush1.msra.mxu0 0.0
      %4630 = vmatprep.subr.mxu0 0.0
      %4631 = vmatpush1.msra.mxu0 0.0
      %4632 = vmatprep.subr.mxu0 0.0
      %4633 = vmatpush1.msra.mxu0 0.0
      %4634 = vmatprep.subr.mxu0 0.0
      %4635 = vmatpush1.msra.mxu0 0.0
      %4636 = vmatprep.subr.mxu0 0.0
      %4637 = vmatpush1.msra.mxu0 0.0
      %4638 = vmatprep.subr.mxu0 0.0
      %4639 = vmatpush1.msra.mxu0 0.0
      %4640 = vmatprep.subr.mxu0 0.0
      %4641 = vmatpush1.msra.mxu0 0.0
      %4642 = vmatprep.subr.mxu0 0.0
      %4643 = vmatpush1.msra.mxu0 0.0
      %4644 = vmatprep.subr.mxu0 0.0
      %4645 = vmatpush1.msra.mxu0 0.0
      %4646 = vmatprep.subr.mxu0 0.0
      %4647 = vmatpush1.msra.mxu0 0.0
      %4648 = vmatprep.subr.mxu0 0.0
      %4649 = vmatpush1.msra.mxu0 0.0
      %4650 = vmatprep.subr.mxu0 0.0
      %4651 = vmatpush1.msra.mxu0 0.0
      %4652 = vmatprep.mubr.f32.mxu0 0.0
      %4653 = vmatmul.mubr.f32.gmra.mrb[0].mxu0 %v4586
      %v4654 = vpop.f32.mrb[0].mxu0
      %v4655 = vadd.f32 0.0, %v4654
      %v4656 = vpop.f32.mrb[0].mxu0
      %4657 = vdwg.mxu0
      %v4658 = vadd.f32 %v3402, %v4655
      %v4659 = vxor.u32 %v4658, 2147483648
      %v4660 = vmul.f32 %v4659, 1.442695
      %v4661 = vpow.pop %v4660
      %v4662 = vadd.f32 %v4661, 1.0
      %v4663 = vrcp.pop %v4662
      %v4664 = vmul.f32 1.0, %v4663
      %v4665 = vadd.f32 %v4655, %v3508
      %4667 = vrot.lane.b32.xlu0 %v4665, 64
      %v4668 = vpop.permute.xlu0 %4667
      %v4670 = vmul.f32 %v4664, %v4668
      %4672 = vrot.lane.b32.xlu0 %v4670, 64
      %v4673 = vpop.permute.xlu0 %4672
      %v4675 = vadd.f32 %v3402, %v4673
      %v4676 = vtanh.pop %v4675
      %v4677 = vsub.f32 %v4582, %v4676
      %4679 = vrot.lane.b32.xlu0 %v4677, 96
      %v4680 = vpop.permute.xlu0 %4679
      %v4682 = vmul.f32 %v4664, %v4680
      %4684 = vrot.lane.b32.xlu0 %v4682, 32
      %v4685 = vpop.permute.xlu0 %4684
      %v4687 = vadd.f32 %v4676, %v4685
      %4689 = vrot.lane.b32.xlu0 %v4687, 64
      %v4690 = vpop.permute.xlu0 %4689
      %v4691 = vsel %vm3425, %v4690, 0
      %4693 = vmatprep.subr.mxu0 0.0
      %4694 = vmatpush1.msra.mxu0 %v215
      %4695 = vmatprep.subr.mxu0 0.0
      %4696 = vmatpush1.msra.mxu0 %v216
      %4697 = vmatprep.subr.mxu0 0.0
      %4698 = vmatpush1.msra.mxu0 %v217
      %4699 = vmatprep.subr.mxu0 0.0
      %4700 = vmatpush1.msra.mxu0 %v218
      %4701 = vmatprep.subr.mxu0 0.0
      %4702 = vmatpush1.msra.mxu0 0.0
      %4703 = vmatprep.subr.mxu0 0.0
      %4704 = vmatpush1.msra.mxu0 0.0
      %4705 = vmatprep.subr.mxu0 0.0
      %4706 = vmatpush1.msra.mxu0 0.0
      %4707 = vmatprep.subr.mxu0 0.0
      %4708 = vmatpush1.msra.mxu0 0.0
      %4709 = vmatprep.subr.mxu0 0.0
      %4710 = vmatpush1.msra.mxu0 0.0
      %4711 = vmatprep.subr.mxu0 0.0
      %4712 = vmatpush1.msra.mxu0 0.0
      %4713 = vmatprep.subr.mxu0 0.0
      %4714 = vmatpush1.msra.mxu0 0.0
      %4715 = vmatprep.subr.mxu0 0.0
      %4716 = vmatpush1.msra.mxu0 0.0
      %4717 = vmatprep.subr.mxu0 0.0
      %4718 = vmatpush1.msra.mxu0 0.0
      %4719 = vmatprep.subr.mxu0 0.0
      %4720 = vmatpush1.msra.mxu0 0.0
      %4721 = vmatprep.subr.mxu0 0.0
      %4722 = vmatpush1.msra.mxu0 0.0
      %4723 = vmatprep.subr.mxu0 0.0
      %4724 = vmatpush1.msra.mxu0 0.0
      %4725 = vmatprep.subr.mxu0 0.0
      %4726 = vmatpush1.msra.mxu0 0.0
      %4727 = vmatprep.subr.mxu0 0.0
      %4728 = vmatpush1.msra.mxu0 0.0
      %4729 = vmatprep.subr.mxu0 0.0
      %4730 = vmatpush1.msra.mxu0 0.0
      %4731 = vmatprep.subr.mxu0 0.0
      %4732 = vmatpush1.msra.mxu0 0.0
      %4733 = vmatprep.subr.mxu0 0.0
      %4734 = vmatpush1.msra.mxu0 0.0
      %4735 = vmatprep.subr.mxu0 0.0
      %4736 = vmatpush1.msra.mxu0 0.0
      %4737 = vmatprep.subr.mxu0 0.0
      %4738 = vmatpush1.msra.mxu0 0.0
      %4739 = vmatprep.subr.mxu0 0.0
      %4740 = vmatpush1.msra.mxu0 0.0
      %4741 = vmatprep.subr.mxu0 0.0
      %4742 = vmatpush1.msra.mxu0 0.0
      %4743 = vmatprep.subr.mxu0 0.0
      %4744 = vmatpush1.msra.mxu0 0.0
      %4745 = vmatprep.subr.mxu0 0.0
      %4746 = vmatpush1.msra.mxu0 0.0
      %4747 = vmatprep.subr.mxu0 0.0
      %4748 = vmatpush1.msra.mxu0 0.0
      %4749 = vmatprep.subr.mxu0 0.0
      %4750 = vmatpush1.msra.mxu0 0.0
      %4751 = vmatprep.subr.mxu0 0.0
      %4752 = vmatpush1.msra.mxu0 0.0
      %4753 = vmatprep.subr.mxu0 0.0
      %4754 = vmatpush1.msra.mxu0 0.0
      %4755 = vmatprep.subr.mxu0 0.0
      %4756 = vmatpush1.msra.mxu0 0.0
      %4757 = vmatprep.mubr.f32.mxu0 0.0
      %4758 = vmatmul.mubr.f32.gmra.mrb[0].mxu0 %v4691
      %v4759 = vpop.f32.mrb[0].mxu0
      %v4760 = vadd.f32 0.0, %v4759
      %v4761 = vpop.f32.mrb[0].mxu0
      %4762 = vdwg.mxu0
      %v4763 = vadd.f32 %v3407, %v4760
      %v4764 = vxor.u32 %v4763, 2147483648
      %v4765 = vmul.f32 %v4764, 1.442695
      %v4766 = vpow.pop %v4765
      %v4767 = vadd.f32 %v4766, 1.0
      %v4768 = vrcp.pop %v4767
      %v4769 = vmul.f32 1.0, %v4768
      %v4770 = vadd.f32 %v4760, %v3508
      %4772 = vrot.lane.b32.xlu0 %v4770, 64
      %v4773 = vpop.permute.xlu0 %4772
      %v4775 = vmul.f32 %v4769, %v4773
      %4777 = vrot.lane.b32.xlu0 %v4775, 64
      %v4778 = vpop.permute.xlu0 %4777
      %v4780 = vadd.f32 %v3407, %v4778
      %v4781 = vtanh.pop %v4780
      %v4782 = vsub.f32 %v4687, %v4781
      %4784 = vrot.lane.b32.xlu0 %v4782, 96
      %v4785 = vpop.permute.xlu0 %4784
      %v4787 = vmul.f32 %v4769, %v4785
      %4789 = vrot.lane.b32.xlu0 %v4787, 32
      %v4790 = vpop.permute.xlu0 %4789
      %v4792 = vadd.f32 %v4781, %v4790
      %4794 = vrot.lane.b32.xlu0 %v4792, 64
      %v4795 = vpop.permute.xlu0 %4794
      %v4796 = vsel %vm3425, %v4795, 0
      %4798 = vmatprep.subr.mxu0 0.0
      %4799 = vmatpush1.msra.mxu0 %v215
      %4800 = vmatprep.subr.mxu0 0.0
      %4801 = vmatpush1.msra.mxu0 %v216
      %4802 = vmatprep.subr.mxu0 0.0
      %4803 = vmatpush1.msra.mxu0 %v217
      %4804 = vmatprep.subr.mxu0 0.0
      %4805 = vmatpush1.msra.mxu0 %v218
      %4806 = vmatprep.subr.mxu0 0.0
      %4807 = vmatpush1.msra.mxu0 0.0
      %4808 = vmatprep.subr.mxu0 0.0
      %4809 = vmatpush1.msra.mxu0 0.0
      %4810 = vmatprep.subr.mxu0 0.0
      %4811 = vmatpush1.msra.mxu0 0.0
      %4812 = vmatprep.subr.mxu0 0.0
      %4813 = vmatpush1.msra.mxu0 0.0
      %4814 = vmatprep.subr.mxu0 0.0
      %4815 = vmatpush1.msra.mxu0 0.0
      %4816 = vmatprep.subr.mxu0 0.0
      %4817 = vmatpush1.msra.mxu0 0.0
      %4818 = vmatprep.subr.mxu0 0.0
      %4819 = vmatpush1.msra.mxu0 0.0
      %4820 = vmatprep.subr.mxu0 0.0
      %4821 = vmatpush1.msra.mxu0 0.0
      %4822 = vmatprep.subr.mxu0 0.0
      %4823 = vmatpush1.msra.mxu0 0.0
      %4824 = vmatprep.subr.mxu0 0.0
      %4825 = vmatpush1.msra.mxu0 0.0
      %4826 = vmatprep.subr.mxu0 0.0
      %4827 = vmatpush1.msra.mxu0 0.0
      %4828 = vmatprep.subr.mxu0 0.0
      %4829 = vmatpush1.msra.mxu0 0.0
      %4830 = vmatprep.subr.mxu0 0.0
      %4831 = vmatpush1.msra.mxu0 0.0
      %4832 = vmatprep.subr.mxu0 0.0
      %4833 = vmatpush1.msra.mxu0 0.0
      %4834 = vmatprep.subr.mxu0 0.0
      %4835 = vmatpush1.msra.mxu0 0.0
      %4836 = vmatprep.subr.mxu0 0.0
      %4837 = vmatpush1.msra.mxu0 0.0
      %4838 = vmatprep.subr.mxu0 0.0
      %4839 = vmatpush1.msra.mxu0 0.0
      %4840 = vmatprep.subr.mxu0 0.0
      %4841 = vmatpush1.msra.mxu0 0.0
      %4842 = vmatprep.subr.mxu0 0.0
      %4843 = vmatpush1.msra.mxu0 0.0
      %4844 = vmatprep.subr.mxu0 0.0
      %4845 = vmatpush1.msra.mxu0 0.0
      %4846 = vmatprep.subr.mxu0 0.0
      %4847 = vmatpush1.msra.mxu0 0.0
      %4848 = vmatprep.subr.mxu0 0.0
      %4849 = vmatpush1.msra.mxu0 0.0
      %4850 = vmatprep.subr.mxu0 0.0
      %4851 = vmatpush1.msra.mxu0 0.0
      %4852 = vmatprep.subr.mxu0 0.0
      %4853 = vmatpush1.msra.mxu0 0.0
      %4854 = vmatprep.subr.mxu0 0.0
      %4855 = vmatpush1.msra.mxu0 0.0
      %4856 = vmatprep.subr.mxu0 0.0
      %4857 = vmatpush1.msra.mxu0 0.0
      %4858 = vmatprep.subr.mxu0 0.0
      %4859 = vmatpush1.msra.mxu0 0.0
      %4860 = vmatprep.subr.mxu0 0.0
      %4861 = vmatpush1.msra.mxu0 0.0
      %4862 = vmatprep.mubr.f32.mxu0 0.0
      %4863 = vmatmul.mubr.f32.gmra.mrb[0].mxu0 %v4796
      %v4864 = vpop.f32.mrb[0].mxu0
      %v4865 = vadd.f32 0.0, %v4864
      %v4866 = vpop.f32.mrb[0].mxu0
      %4867 = vdwg.mxu0
      %v4868 = vadd.f32 %v3412, %v4865
      %v4869 = vxor.u32 %v4868, 2147483648
      %v4870 = vmul.f32 %v4869, 1.442695
      %v4871 = vpow.pop %v4870
      %v4872 = vadd.f32 %v4871, 1.0
      %v4873 = vrcp.pop %v4872
      %v4874 = vmul.f32 1.0, %v4873
      %v4875 = vadd.f32 %v4865, %v3508
      %4877 = vrot.lane.b32.xlu0 %v4875, 64
      %v4878 = vpop.permute.xlu0 %4877
      %v4880 = vmul.f32 %v4874, %v4878
      %4882 = vrot.lane.b32.xlu0 %v4880, 64
      %v4883 = vpop.permute.xlu0 %4882
      %v4885 = vadd.f32 %v3412, %v4883
      %v4886 = vtanh.pop %v4885
      %v4887 = vsub.f32 %v4792, %v4886
      %4889 = vrot.lane.b32.xlu0 %v4887, 96
      %v4890 = vpop.permute.xlu0 %4889
      %v4892 = vmul.f32 %v4874, %v4890
      %4894 = vrot.lane.b32.xlu0 %v4892, 32
      %v4895 = vpop.permute.xlu0 %4894
      %v4897 = vadd.f32 %v4886, %v4895
      %4899 = vrot.lane.b32.xlu0 %v4897, 64
      %v4900 = vpop.permute.xlu0 %4899
      %v4901 = vsel %vm3425, %v4900, 0
      %4903 = vmatprep.subr.mxu0 0.0
      %4904 = vmatpush1.msra.mxu0 %v215
      %4905 = vmatprep.subr.mxu0 0.0
      %4906 = vmatpush1.msra.mxu0 %v216
      %4907 = vmatprep.subr.mxu0 0.0
      %4908 = vmatpush1.msra.mxu0 %v217
      %4909 = vmatprep.subr.mxu0 0.0
      %4910 = vmatpush1.msra.mxu0 %v218
      %4911 = vmatprep.subr.mxu0 0.0
      %4912 = vmatpush1.msra.mxu0 0.0
      %4913 = vmatprep.subr.mxu0 0.0
      %4914 = vmatpush1.msra.mxu0 0.0
      %4915 = vmatprep.subr.mxu0 0.0
      %4916 = vmatpush1.msra.mxu0 0.0
      %4917 = vmatprep.subr.mxu0 0.0
      %4918 = vmatpush1.msra.mxu0 0.0
      %4919 = vmatprep.subr.mxu0 0.0
      %4920 = vmatpush1.msra.mxu0 0.0
      %4921 = vmatprep.subr.mxu0 0.0
      %4922 = vmatpush1.msra.mxu0 0.0
      %4923 = vmatprep.subr.mxu0 0.0
      %4924 = vmatpush1.msra.mxu0 0.0
      %4925 = vmatprep.subr.mxu0 0.0
      %4926 = vmatpush1.msra.mxu0 0.0
      %4927 = vmatprep.subr.mxu0 0.0
      %4928 = vmatpush1.msra.mxu0 0.0
      %4929 = vmatprep.subr.mxu0 0.0
      %4930 = vmatpush1.msra.mxu0 0.0
      %4931 = vmatprep.subr.mxu0 0.0
      %4932 = vmatpush1.msra.mxu0 0.0
      %4933 = vmatprep.subr.mxu0 0.0
      %4934 = vmatpush1.msra.mxu0 0.0
      %4935 = vmatprep.subr.mxu0 0.0
      %4936 = vmatpush1.msra.mxu0 0.0
      %4937 = vmatprep.subr.mxu0 0.0
      %4938 = vmatpush1.msra.mxu0 0.0
      %4939 = vmatprep.subr.mxu0 0.0
      %4940 = vmatpush1.msra.mxu0 0.0
      %4941 = vmatprep.subr.mxu0 0.0
      %4942 = vmatpush1.msra.mxu0 0.0
      %4943 = vmatprep.subr.mxu0 0.0
      %4944 = vmatpush1.msra.mxu0 0.0
      %4945 = vmatprep.subr.mxu0 0.0
      %4946 = vmatpush1.msra.mxu0 0.0
      %4947 = vmatprep.subr.mxu0 0.0
      %4948 = vmatpush1.msra.mxu0 0.0
      %4949 = vmatprep.subr.mxu0 0.0
      %4950 = vmatpush1.msra.mxu0 0.0
      %4951 = vmatprep.subr.mxu0 0.0
      %4952 = vmatpush1.msra.mxu0 0.0
      %4953 = vmatprep.subr.mxu0 0.0
      %4954 = vmatpush1.msra.mxu0 0.0
      %4955 = vmatprep.subr.mxu0 0.0
      %4956 = vmatpush1.msra.mxu0 0.0
      %4957 = vmatprep.subr.mxu0 0.0
      %4958 = vmatpush1.msra.mxu0 0.0
      %4959 = vmatprep.subr.mxu0 0.0
      %4960 = vmatpush1.msra.mxu0 0.0
      %4961 = vmatprep.subr.mxu0 0.0
      %4962 = vmatpush1.msra.mxu0 0.0
      %4963 = vmatprep.subr.mxu0 0.0
      %4964 = vmatpush1.msra.mxu0 0.0
      %4965 = vmatprep.subr.mxu0 0.0
      %4966 = vmatpush1.msra.mxu0 0.0
      %4967 = vmatprep.mubr.f32.mxu0 0.0
      %4968 = vmatmul.mubr.f32.gmra.mrb[0].mxu0 %v4901
      %v4969 = vpop.f32.mrb[0].mxu0
      %v4970 = vadd.f32 0.0, %v4969
      %v4971 = vpop.f32.mrb[0].mxu0
      %4972 = vdwg.mxu0
      %v4973 = vadd.f32 %v3417, %v4970
      %v4974 = vxor.u32 %v4973, 2147483648
      %v4975 = vmul.f32 %v4974, 1.442695
      %v4976 = vpow.pop %v4975
      %v4977 = vadd.f32 %v4976, 1.0
      %v4978 = vrcp.pop %v4977
      %v4979 = vmul.f32 1.0, %v4978
      %v4980 = vadd.f32 %v4970, %v3508
      %4982 = vrot.lane.b32.xlu0 %v4980, 64
      %v4983 = vpop.permute.xlu0 %4982
      %v4985 = vmul.f32 %v4979, %v4983
      %4987 = vrot.lane.b32.xlu0 %v4985, 64
      %v4988 = vpop.permute.xlu0 %4987
      %v4990 = vadd.f32 %v3417, %v4988
      %v4991 = vtanh.pop %v4990
      %v4992 = vsub.f32 %v4897, %v4991
      %4994 = vrot.lane.b32.xlu0 %v4992, 96
      %v4995 = vpop.permute.xlu0 %4994
      %v4997 = vmul.f32 %v4979, %v4995
      %4999 = vrot.lane.b32.xlu0 %v4997, 32
      %v5000 = vpop.permute.xlu0 %4999
      %v5002 = vadd.f32 %v4991, %v5000
      %5004 = vrot.lane.b32.xlu0 %v5002, 64
      %v5005 = vpop.permute.xlu0 %5004
      %v5006 = vsel %vm3425, %v5005, 0
      %5008 = vmatprep.subr.mxu0 0.0
      %5009 = vmatpush1.msra.mxu0 %v215
      %5010 = vmatprep.subr.mxu0 0.0
      %5011 = vmatpush1.msra.mxu0 %v216
      %5012 = vmatprep.subr.mxu0 0.0
      %5013 = vmatpush1.msra.mxu0 %v217
      %5014 = vmatprep.subr.mxu0 0.0
      %5015 = vmatpush1.msra.mxu0 %v218
      %5016 = vmatprep.subr.mxu0 0.0
      %5017 = vmatpush1.msra.mxu0 0.0
      %5018 = vmatprep.subr.mxu0 0.0
      %5019 = vmatpush1.msra.mxu0 0.0
      %5020 = vmatprep.subr.mxu0 0.0
      %5021 = vmatpush1.msra.mxu0 0.0
      %5022 = vmatprep.subr.mxu0 0.0
      %5023 = vmatpush1.msra.mxu0 0.0
      %5024 = vmatprep.subr.mxu0 0.0
      %5025 = vmatpush1.msra.mxu0 0.0
      %5026 = vmatprep.subr.mxu0 0.0
      %5027 = vmatpush1.msra.mxu0 0.0
      %5028 = vmatprep.subr.mxu0 0.0
      %5029 = vmatpush1.msra.mxu0 0.0
      %5030 = vmatprep.subr.mxu0 0.0
      %5031 = vmatpush1.msra.mxu0 0.0
      %5032 = vmatprep.subr.mxu0 0.0
      %5033 = vmatpush1.msra.mxu0 0.0
      %5034 = vmatprep.subr.mxu0 0.0
      %5035 = vmatpush1.msra.mxu0 0.0
      %5036 = vmatprep.subr.mxu0 0.0
      %5037 = vmatpush1.msra.mxu0 0.0
      %5038 = vmatprep.subr.mxu0 0.0
      %5039 = vmatpush1.msra.mxu0 0.0
      %5040 = vmatprep.subr.mxu0 0.0
      %5041 = vmatpush1.msra.mxu0 0.0
      %5042 = vmatprep.subr.mxu0 0.0
      %5043 = vmatpush1.msra.mxu0 0.0
      %5044 = vmatprep.subr.mxu0 0.0
      %5045 = vmatpush1.msra.mxu0 0.0
      %5046 = vmatprep.subr.mxu0 0.0
      %5047 = vmatpush1.msra.mxu0 0.0
      %5048 = vmatprep.subr.mxu0 0.0
      %5049 = vmatpush1.msra.mxu0 0.0
      %5050 = vmatprep.subr.mxu0 0.0
      %5051 = vmatpush1.msra.mxu0 0.0
      %5052 = vmatprep.subr.mxu0 0.0
      %5053 = vmatpush1.msra.mxu0 0.0
      %5054 = vmatprep.subr.mxu0 0.0
      %5055 = vmatpush1.msra.mxu0 0.0
      %5056 = vmatprep.subr.mxu0 0.0
      %5057 = vmatpush1.msra.mxu0 0.0
      %5058 = vmatprep.subr.mxu0 0.0
      %5059 = vmatpush1.msra.mxu0 0.0
      %5060 = vmatprep.subr.mxu0 0.0
      %5061 = vmatpush1.msra.mxu0 0.0
      %5062 = vmatprep.subr.mxu0 0.0
      %5063 = vmatpush1.msra.mxu0 0.0
      %5064 = vmatprep.subr.mxu0 0.0
      %5065 = vmatpush1.msra.mxu0 0.0
      %5066 = vmatprep.subr.mxu0 0.0
      %5067 = vmatpush1.msra.mxu0 0.0
      %5068 = vmatprep.subr.mxu0 0.0
      %5069 = vmatpush1.msra.mxu0 0.0
      %5070 = vmatprep.subr.mxu0 0.0
      %5071 = vmatpush1.msra.mxu0 0.0
      %5072 = vmatprep.mubr.f32.mxu0 0.0
      %5073 = vmatmul.mubr.f32.gmra.mrb[0].mxu0 %v5006
      %v5074 = vpop.f32.mrb[0].mxu0
      %v5075 = vadd.f32 0.0, %v5074
      %v5076 = vpop.f32.mrb[0].mxu0
      %5077 = vdwg.mxu0
      %v5078 = vadd.f32 %v3422, %v5075
      %v5079 = vxor.u32 %v5078, 2147483648
      %v5080 = vmul.f32 %v5079, 1.442695
      %v5081 = vpow.pop %v5080
      %v5082 = vadd.f32 %v5081, 1.0
      %v5083 = vrcp.pop %v5082
      %v5084 = vmul.f32 1.0, %v5083
      %v5085 = vadd.f32 %v5075, %v3508
      %5087 = vrot.lane.b32.xlu0 %v5085, 64
      %v5088 = vpop.permute.xlu0 %5087
      %v5090 = vmul.f32 %v5084, %v5088
      %5092 = vrot.lane.b32.xlu0 %v5090, 64
      %v5093 = vpop.permute.xlu0 %5092
      %v5095 = vadd.f32 %v3422, %v5093
      %v5096 = vtanh.pop %v5095
      %v5097 = vsub.f32 %v5002, %v5096
      %5099 = vrot.lane.b32.xlu0 %v5097, 96
      %v5100 = vpop.permute.xlu0 %5099
      %v5102 = vmul.f32 %v5084, %v5100
      %5104 = vrot.lane.b32.xlu0 %v5102, 32
      %v5105 = vpop.permute.xlu0 %5104
      %v5107 = vadd.f32 %v5096, %v5105
      %5109 = vrot.lane.b32.xlu0 %v5107, 64
      %v5110 = vpop.permute.xlu0 %5109
      %v5111 = vsel %vm3425, %v5110, 0
      %5113 = vmatprep.subr.mxu0 0.0
      %5114 = vmatpush1.msra.mxu0 %v215
      %5115 = vmatprep.subr.mxu0 0.0
      %5116 = vmatpush1.msra.mxu0 %v216
      %5117 = vmatprep.subr.mxu0 0.0
      %5118 = vmatpush1.msra.mxu0 %v217
      %5119 = vmatprep.subr.mxu0 0.0
      %5120 = vmatpush1.msra.mxu0 %v218
      %5121 = vmatprep.subr.mxu0 0.0
      %5122 = vmatpush1.msra.mxu0 0.0
      %5123 = vmatprep.subr.mxu0 0.0
      %5124 = vmatpush1.msra.mxu0 0.0
      %5125 = vmatprep.subr.mxu0 0.0
      %5126 = vmatpush1.msra.mxu0 0.0
      %5127 = vmatprep.subr.mxu0 0.0
      %5128 = vmatpush1.msra.mxu0 0.0
      %5129 = vmatprep.subr.mxu0 0.0
      %5130 = vmatpush1.msra.mxu0 0.0
      %5131 = vmatprep.subr.mxu0 0.0
      %5132 = vmatpush1.msra.mxu0 0.0
      %5133 = vmatprep.subr.mxu0 0.0
      %5134 = vmatpush1.msra.mxu0 0.0
      %5135 = vmatprep.subr.mxu0 0.0
      %5136 = vmatpush1.msra.mxu0 0.0
      %5137 = vmatprep.subr.mxu0 0.0
      %5138 = vmatpush1.msra.mxu0 0.0
      %5139 = vmatprep.subr.mxu0 0.0
      %5140 = vmatpush1.msra.mxu0 0.0
      %5141 = vmatprep.subr.mxu0 0.0
      %5142 = vmatpush1.msra.mxu0 0.0
      %5143 = vmatprep.subr.mxu0 0.0
      %5144 = vmatpush1.msra.mxu0 0.0
      %5145 = vmatprep.subr.mxu0 0.0
      %5146 = vmatpush1.msra.mxu0 0.0
      %5147 = vmatprep.subr.mxu0 0.0
      %5148 = vmatpush1.msra.mxu0 0.0
      %5149 = vmatprep.subr.mxu0 0.0
      %5150 = vmatpush1.msra.mxu0 0.0
      %5151 = vmatprep.subr.mxu0 0.0
      %5152 = vmatpush1.msra.mxu0 0.0
      %5153 = vmatprep.subr.mxu0 0.0
      %5154 = vmatpush1.msra.mxu0 0.0
      %5155 = vmatprep.subr.mxu0 0.0
      %5156 = vmatpush1.msra.mxu0 0.0
      %5157 = vmatprep.subr.mxu0 0.0
      %5158 = vmatpush1.msra.mxu0 0.0
      %5159 = vmatprep.subr.mxu0 0.0
      %5160 = vmatpush1.msra.mxu0 0.0
      %5161 = vmatprep.subr.mxu0 0.0
      %5162 = vmatpush1.msra.mxu0 0.0
      %5163 = vmatprep.subr.mxu0 0.0
      %5164 = vmatpush1.msra.mxu0 0.0
      %5165 = vmatprep.subr.mxu0 0.0
      %5166 = vmatpush1.msra.mxu0 0.0
      %5167 = vmatprep.subr.mxu0 0.0
      %5168 = vmatpush1.msra.mxu0 0.0
      %5169 = vmatprep.subr.mxu0 0.0
      %5170 = vmatpush1.msra.mxu0 0.0
      %5171 = vmatprep.subr.mxu0 0.0
      %5172 = vmatpush1.msra.mxu0 0.0
      %5173 = vmatprep.subr.mxu0 0.0
      %5174 = vmatpush1.msra.mxu0 0.0
      %5175 = vmatprep.subr.mxu0 0.0
      %5176 = vmatpush1.msra.mxu0 0.0
      %5177 = vmatprep.mubr.f32.mxu0 0.0
      %5178 = vmatmul.mubr.f32.gmra.mrb[0].mxu0 %v5111
      %v5179 = vpop.f32.mrb[0].mxu0
      %v5180 = vadd.f32 0.0, %v5179
      %v5181 = vpop.f32.mrb[0].mxu0
      %5182 = vdwg.mxu0
      %vm5183 = vcmask 523264
      %v5185 = vsel %vm5183, %v214, 0
      %5187 = vmatprep.subr.mxu0 0.0
      %5188 = vmatpush1.msra.mxu0 %v204
      %5189 = vmatprep.subr.mxu0 0.0
      %5190 = vmatpush1.msra.mxu0 %v205
      %5191 = vmatprep.subr.mxu0 0.0
      %5192 = vmatpush1.msra.mxu0 %v206
      %5193 = vmatprep.subr.mxu0 0.0
      %5194 = vmatpush1.msra.mxu0 %v207
      %5195 = vmatprep.subr.mxu0 0.0
      %5196 = vmatpush1.msra.mxu0 %v208
      %5197 = vmatprep.subr.mxu0 0.0
      %5198 = vmatpush1.msra.mxu0 %v209
      %5199 = vmatprep.subr.mxu0 0.0
      %5200 = vmatpush1.msra.mxu0 %v210
      %5201 = vmatprep.subr.mxu0 0.0
      %5202 = vmatpush1.msra.mxu0 %v211
      %5203 = vmatprep.subr.mxu0 0.0
      %5204 = vmatpush1.msra.mxu0 0.0
      %5205 = vmatprep.subr.mxu0 0.0
      %5206 = vmatpush1.msra.mxu0 0.0
      %5207 = vmatprep.subr.mxu0 0.0
      %5208 = vmatpush1.msra.mxu0 0.0
      %5209 = vmatprep.subr.mxu0 0.0
      %5210 = vmatpush1.msra.mxu0 0.0
      %5211 = vmatprep.subr.mxu0 0.0
      %5212 = vmatpush1.msra.mxu0 0.0
      %5213 = vmatprep.subr.mxu0 0.0
      %5214 = vmatpush1.msra.mxu0 0.0
      %5215 = vmatprep.subr.mxu0 0.0
      %5216 = vmatpush1.msra.mxu0 0.0
      %5217 = vmatprep.subr.mxu0 0.0
      %5218 = vmatpush1.msra.mxu0 0.0
      %5219 = vmatprep.subr.mxu0 0.0
      %5220 = vmatpush1.msra.mxu0 0.0
      %5221 = vmatprep.subr.mxu0 0.0
      %5222 = vmatpush1.msra.mxu0 0.0
      %5223 = vmatprep.subr.mxu0 0.0
      %5224 = vmatpush1.msra.mxu0 0.0
      %5225 = vmatprep.subr.mxu0 0.0
      %5226 = vmatpush1.msra.mxu0 0.0
      %5227 = vmatprep.subr.mxu0 0.0
      %5228 = vmatpush1.msra.mxu0 0.0
      %5229 = vmatprep.subr.mxu0 0.0
      %5230 = vmatpush1.msra.mxu0 0.0
      %5231 = vmatprep.subr.mxu0 0.0
      %5232 = vmatpush1.msra.mxu0 0.0
      %5233 = vmatprep.subr.mxu0 0.0
      %5234 = vmatpush1.msra.mxu0 0.0
      %5235 = vmatprep.subr.mxu0 0.0
      %5236 = vmatpush1.msra.mxu0 0.0
      %5237 = vmatprep.subr.mxu0 0.0
      %5238 = vmatpush1.msra.mxu0 0.0
      %5239 = vmatprep.subr.mxu0 0.0
      %5240 = vmatpush1.msra.mxu0 0.0
      %5241 = vmatprep.subr.mxu0 0.0
      %5242 = vmatpush1.msra.mxu0 0.0
      %5243 = vmatprep.subr.mxu0 0.0
      %5244 = vmatpush1.msra.mxu0 0.0
      %5245 = vmatprep.subr.mxu0 0.0
      %5246 = vmatpush1.msra.mxu0 0.0
      %5247 = vmatprep.subr.mxu0 0.0
      %5248 = vmatpush1.msra.mxu0 0.0
      %5249 = vmatprep.subr.mxu0 0.0
      %5250 = vmatpush1.msra.mxu0 0.0
      %5251 = vmatprep.mubr.f32.mxu0 0.0
      %5252 = vmatmul.mubr.f32.gmra.mrb[0].mxu0 %v5185
      %v5253 = vpop.f32.mrb[0].mxu0
      %v5254 = vadd.f32 0.0, %v5253
      %v5255 = vpop.f32.mrb[0].mxu0
      %5256 = vdwg.mxu0
      %5257 = vrot.lane.b32.xlu0 %v214, 64
      %v5258 = vpop.permute.xlu0 %5257
      %v5261 = vsel %vm237, %v5254, 0
      %5263 = vmatprep.subr.mxu0 0.0
      %5264 = vmatpush1.msra.mxu0 %v5258
      %5265 = vmatprep.subr.mxu0 0.0
      %5266 = vmatpush1.msra.mxu0 0.0
      %5267 = vmatprep.subr.mxu0 0.0
      %5268 = vmatpush1.msra.mxu0 0.0
      %5269 = vmatprep.subr.mxu0 0.0
      %5270 = vmatpush1.msra.mxu0 0.0
      %5271 = vmatprep.subr.mxu0 0.0
      %5272 = vmatpush1.msra.mxu0 0.0
      %5273 = vmatprep.subr.mxu0 0.0
      %5274 = vmatpush1.msra.mxu0 0.0
      %5275 = vmatprep.subr.mxu0 0.0
      %5276 = vmatpush1.msra.mxu0 0.0
      %5277 = vmatprep.subr.mxu0 0.0
      %5278 = vmatpush1.msra.mxu0 0.0
      %5279 = vmatprep.subr.mxu0 0.0
      %5280 = vmatpush1.msra.mxu0 0.0
      %5281 = vmatprep.subr.mxu0 0.0
      %5282 = vmatpush1.msra.mxu0 0.0
      %5283 = vmatprep.subr.mxu0 0.0
      %5284 = vmatpush1.msra.mxu0 0.0
      %5285 = vmatprep.subr.mxu0 0.0
      %5286 = vmatpush1.msra.mxu0 0.0
      %5287 = vmatprep.subr.mxu0 0.0
      %5288 = vmatpush1.msra.mxu0 0.0
      %5289 = vmatprep.subr.mxu0 0.0
      %5290 = vmatpush1.msra.mxu0 0.0
      %5291 = vmatprep.subr.mxu0 0.0
      %5292 = vmatpush1.msra.mxu0 0.0
      %5293 = vmatprep.subr.mxu0 0.0
      %5294 = vmatpush1.msra.mxu0 0.0
      %5295 = vmatprep.subr.mxu0 0.0
      %5296 = vmatpush1.msra.mxu0 0.0
      %5297 = vmatprep.subr.mxu0 0.0
      %5298 = vmatpush1.msra.mxu0 0.0
      %5299 = vmatprep.subr.mxu0 0.0
      %5300 = vmatpush1.msra.mxu0 0.0
      %5301 = vmatprep.subr.mxu0 0.0
      %5302 = vmatpush1.msra.mxu0 0.0
      %5303 = vmatprep.subr.mxu0 0.0
      %5304 = vmatpush1.msra.mxu0 0.0
      %5305 = vmatprep.subr.mxu0 0.0
      %5306 = vmatpush1.msra.mxu0 0.0
      %5307 = vmatprep.subr.mxu0 0.0
      %5308 = vmatpush1.msra.mxu0 0.0
      %5309 = vmatprep.subr.mxu0 0.0
      %5310 = vmatpush1.msra.mxu0 0.0
      %5311 = vmatprep.subr.mxu0 0.0
      %5312 = vmatpush1.msra.mxu0 0.0
      %5313 = vmatprep.subr.mxu0 0.0
      %5314 = vmatpush1.msra.mxu0 0.0
      %5315 = vmatprep.subr.mxu0 0.0
      %5316 = vmatpush1.msra.mxu0 0.0
      %5317 = vmatprep.subr.mxu0 0.0
      %5318 = vmatpush1.msra.mxu0 0.0
      %5319 = vmatprep.subr.mxu0 0.0
      %5320 = vmatpush1.msra.mxu0 0.0
      %5321 = vmatprep.subr.mxu0 0.0
      %5322 = vmatpush1.msra.mxu0 0.0
      %5323 = vmatprep.subr.mxu0 0.0
      %5324 = vmatpush1.msra.mxu0 0.0
      %5325 = vmatprep.subr.mxu0 0.0
      %5326 = vmatpush1.msra.mxu0 0.0
      %5327 = vmatprep.mubr.f32.mxu0 0.0
      %5328 = vmatmul.mubr.f32.gmra.mrb[0].mxu0 %v5261
      %v5329 = vpop.f32.mrb[0].mxu0
      %v5330 = vadd.f32 0.0, %v5329
      %v5331 = vpop.f32.mrb[0].mxu0
      %5332 = vdwg.mxu0
      %5334 = vrot.lane.b32.xlu0 %v5330, 96
      %v5335 = vpop.permute.xlu0 %5334
      %v5337 = vadd.f32 %v5180, %v5335
      %5339 = vrot.lane.b32.xlu0 %v225, 96
      %v5340 = vpop.permute.xlu0 %5339
      %v5342 = vadd.f32 %v5337, %v5340
      %v5343 = vxor.u32 %v5342, 2147483648
      %v5344 = vmul.f32 %v5343, 1.442695
      %v5345 = vpow.pop %v5344
      %v5346 = vadd.f32 %v5345, 1.0
      %v5347 = vrcp.pop %v5346
      %v5348 = vmul.f32 1.0, %v5347
      %5350 = vrot.lane.b32.xlu0 %v5348, 32
      %v5351 = vpop.permute.xlu0 %5350
      %vm5353 = vcmask 31744
      %5354 = vst.msk [vmem:[%s195] sm:$0xff] %vm5353, %v5351
      %p5355 = scmp.lt.s32.totalorder %s15, 1
      %s5356 = scalar_select %p5355, %s15, 1
      %s5357 = smul.addr %s5356, 8
      %s5358 = scalar_lea.vmem %s4, %s5357
      // Predicated region
      $region37: #{mhanet_forward.1} parent=35 // pred_check
        %p5359 = pneg %p122
      $region38: #{mhanet_forward.1} parent=35 // pred_check_branch
        %5361 = sbr.rel (%p5359) target = $region40
      $region39: #{mhanet_forward.1} parent=35 // pred_region
        _
      $region40: #{mhanet_forward.1} parent=35 // pred_fallthru
        _
    $region36: #{mhanet_forward.1} parent=5 // pred_fallthru
      _
    %p5362 = scmp.le.s32.totalorder 2, %s10
    // Predicated region
    $region41: #{mhanet_forward.1} parent=5 // pred_check
      %p5363 = pneg %p5362
    $region42: #{mhanet_forward.1} parent=5 // pred_check_branch
      %5365 = sbr.rel (%p5363) target = $region44
    $region43: #{mhanet_forward.1} parent=5 // pred_region
      %s5366 = ssub.s32 %s10, 2
      // Predicated region
      $region45: #{mhanet_forward.1} parent=43 // pred_check
        %p5367 = pneg %p128
      $region46: #{mhanet_forward.1} parent=43 // pred_check_branch
        %5369 = sbr.rel (%p5367) target = $region48
      $region47: #{mhanet_forward.1} parent=43 // pred_region
        %p5370 = scmp.lt.s32.totalorder %s16, 1
        %s5371 = scalar_select %p5370, %s16, 1
        %s5372 = smul.addr %s5371, 8
        %s5373 = scalar_lea.vmem %s4, %s5372
      $region48: #{mhanet_forward.1} parent=43 // pred_fallthru
        _
    $region44: #{mhanet_forward.1} parent=5 // pred_fallthru
      _
  $region6: #{mhanet_forward.1} parent=0 // loop_footer
    %s14 = sadd.s32 1, %s10
  $region7: #{mhanet_forward.1} parent=0 // loop_footer_branch
    %9 = sbr.rel target = $region3
  $region8: #{mhanet_forward.1} parent=0 // loop_exit
    _

</llo_original>
